<compile_context>
chip_gen: v6e
topology: v6e:2x2x1
jax: 0.10.0
libtpu: 0.0.40
codegen_flags: <defaults>
</compile_context>

<pallas_src>
import functools

import jax
import jax.numpy as jnp
from jax import lax
from jax.experimental import pallas as pl
from jax.experimental.pallas import tpu as pltpu


# --------------------------------------------------------------------------
# XLA glue: im2col in NHWC, patch columns ordered (c, kh, kw) with c slowest
# (matches w.reshape(OC, C*KH*KW) of a PyTorch OIHW conv weight).
# --------------------------------------------------------------------------
def _im2col_nhwc(x, kh, kw, stride):
    N, H, W, C = x.shape
    OH = (H - kh) // stride + 1
    OW = (W - kw) // stride + 1
    taps = [
        x[:, i:i + stride * (OH - 1) + 1:stride,
          j:j + stride * (OW - 1) + 1:stride, :]
        for i in range(kh) for j in range(kw)
    ]
    patches = jnp.stack(taps, axis=-1)              # (N, OH, OW, C, kh*kw)
    return patches.reshape(N * OH * OW, C * kh * kw), OH, OW


# --------------------------------------------------------------------------
# Pallas kernels
# --------------------------------------------------------------------------
def _matmul_bias_relu_kernel(a_ref, w_ref, b_ref, o_ref, *, relu):
    acc = jnp.dot(a_ref[...], w_ref[...], preferred_element_type=jnp.float32)
    acc = acc + b_ref[...]
    if relu:
        acc = jnp.maximum(acc, 0.0)
    o_ref[...] = acc


def matmul_bias_relu(a, w, b2d, *, relu, tm):
    """out = relu?(a @ w + b);  a: (M, K), w: (K, OC), b2d: (1, OC).
    M is divisible by tm and tm by 8 (tm = conv output positions per image)."""
    M, K = a.shape
    OC = w.shape[1]
    assert M % tm == 0 and tm % 8 == 0, (M, tm)
    return pl.pallas_call(
        functools.partial(_matmul_bias_relu_kernel, relu=relu),
        out_shape=jax.ShapeDtypeStruct((M, OC), jnp.float32),
        grid=(M // tm,),
        in_specs=[
            pl.BlockSpec((tm, K), lambda i: (i, 0)),
            pl.BlockSpec((K, OC), lambda i: (0, 0)),
            pl.BlockSpec((1, OC), lambda i: (0, 0)),
        ],
        out_specs=pl.BlockSpec((tm, OC), lambda i: (i, 0)),
        compiler_params=pltpu.CompilerParams(dimension_semantics=("parallel",)),
    )(a, w, b2d)


def _max4_kernel(x_ref, o_ref):
    o_ref[...] = jnp.maximum(jnp.maximum(x_ref[0], x_ref[1]),
                             jnp.maximum(x_ref[2], x_ref[3]))


def maxpool2x2_nhwc(x):
    """MaxPool2d(2) on NHWC input (even H, W).  ReLU is applied upstream in the
    conv epilogue (ReLU commutes with max).  Lane-dense: the 4 pooling taps are
    flattened per image into (rows, 128)."""
    N, H, W, C = x.shape
    OH, OW = H // 2, W // 2
    taps = jnp.stack([x[:, dh::2, dw::2, :] for dh in (0, 1) for dw in (0, 1)],
                     axis=0)                                     # (4, N, OH, OW, C)
    per_n = OH * OW * C
    assert per_n % 128 == 0, per_n
    rows = per_n // 128
    taps = taps.reshape(4, N, rows, 128)
    out = pl.pallas_call(
        _max4_kernel,
        out_shape=jax.ShapeDtypeStruct((N, rows, 128), jnp.float32),
        grid=(N,),
        in_specs=[pl.BlockSpec((4, 1, rows, 128), lambda n: (0, n, 0, 0))],
        out_specs=pl.BlockSpec((1, rows, 128), lambda n: (n, 0, 0)),
        compiler_params=pltpu.CompilerParams(dimension_semantics=("parallel",)),
    )(taps)
    return out.reshape(N, OH, OW, C)


def _tail_kernel(p_ref, w3_ref, b3_ref, w1_ref, b1_ref, w2_ref, b2_ref,
                 wl3_ref, bl3_ref, o_ref):
    """Fused: maxpool2(2) -> conv3(3x3)+ReLU -> Flatten -> Linear(384,128)+ReLU
    -> Linear(128,128)+ReLU -> Linear(128,1).  One batch element per grid step."""
    # pool2: elementwise max over the four 2x2 taps (already im2col'ed outside).
    patches = jnp.maximum(jnp.maximum(p_ref[0, 0], p_ref[1, 0]),
                          jnp.maximum(p_ref[2, 0], p_ref[3, 0]))      # (6, 576)
    # conv3 + ReLU for all 6 output positions at once.
    h3 = jnp.dot(patches, w3_ref[...], preferred_element_type=jnp.float32)
    h3 = jnp.maximum(h3 + b3_ref[...], 0.0)                           # (6, 64)
    # Linear(384, 128): per-position partial products; the channel-major PyTorch
    # flatten order is baked into w1_ref (6, 64, 128) at prep time.
    acc = b1_ref[...]                                                 # (1, 128)
    for p in range(6):
        acc = acc + jnp.dot(h3[p:p + 1, :], w1_ref[p],
                            preferred_element_type=jnp.float32)
    h1 = jnp.maximum(acc, 0.0)
    # Linear(128, 128) + ReLU.
    h2 = jnp.dot(h1, w2_ref[...], preferred_element_type=jnp.float32) + b2_ref[...]
    h2 = jnp.maximum(h2, 0.0)
    # Linear(128, 1).
    out = jnp.dot(h2, wl3_ref[...], preferred_element_type=jnp.float32) + bl3_ref[...]
    o_ref[0] = out                                                    # (1, 1)


def tail_forward(y2, prep):
    """y2: conv2 output (N, 8, 10, 64) NHWC, ReLU already applied."""
    N = y2.shape[0]
    # conv3 im2col of each of the 4 pool taps (the gather commutes with max,
    # so the 2x2 max runs inside the fused kernel).
    taps = []
    for dh in (0, 1):
        for dw in (0, 1):
            t = y2[:, dh::2, dw::2, :]                    # (N, 4, 5, 64)
            p, _, _ = _im2col_nhwc(t, 3, 3, 1)            # (N*6, 576)
            taps.append(p.reshape(N, 6, 576))
    taps = jnp.stack(taps, axis=0)                        # (4, N, 6, 576)
    out = pl.pallas_call(
        _tail_kernel,
        out_shape=jax.ShapeDtypeStruct((N, 1, 1), jnp.float32),
        grid=(N,),
        in_specs=[
            pl.BlockSpec((4, 1, 6, 576), lambda n: (0, n, 0, 0)),
            pl.BlockSpec((576, 64), lambda n: (0, 0)),
            pl.BlockSpec((1, 64), lambda n: (0, 0)),
            pl.BlockSpec((6, 64, 128), lambda n: (0, 0, 0)),
            pl.BlockSpec((1, 128), lambda n: (0, 0)),
            pl.BlockSpec((128, 128), lambda n: (0, 0)),
            pl.BlockSpec((1, 128), lambda n: (0, 0)),
            pl.BlockSpec((128, 1), lambda n: (0, 0)),
            pl.BlockSpec((1, 1), lambda n: (0, 0)),
        ],
        out_specs=pl.BlockSpec((1, 1, 1), lambda n: (n, 0, 0)),
        compiler_params=pltpu.CompilerParams(dimension_semantics=("parallel",)),
    )(taps, prep["c3_w"], prep["c3_b"], prep["l1_w"], prep["l1_b"],
      prep["l2_w"], prep["l2_b"], prep["l3_w"], prep["l3_b"])
    return out.reshape(N)


# --------------------------------------------------------------------------
# Parameters
# --------------------------------------------------------------------------
def init_params(key):
    """Parameters in the PyTorch layouts (Conv2d: OIHW, Linear: (out, in))."""
    ks = jax.random.split(key, 12)

    def conv_p(k1, k2, oc, ic, kh, kw):
        fan_in = ic * kh * kw
        w = jax.random.normal(k1, (oc, ic, kh, kw), jnp.float32) / jnp.sqrt(fan_in)
        b = 0.01 * jax.random.normal(k2, (oc,), jnp.float32)
        return w, b

    def lin_p(k1, k2, o, i):
        w = jax.random.normal(k1, (o, i), jnp.float32) / jnp.sqrt(i)
        b = 0.01 * jax.random.normal(k2, (o,), jnp.float32)
        return w, b

    return {
        "c1": conv_p(ks[0], ks[1], 32, 3, 8, 8),
        "c2": conv_p(ks[2], ks[3], 64, 32, 4, 4),
        "c3": conv_p(ks[4], ks[5], 64, 64, 3, 3),
        "l1": lin_p(ks[6], ks[7], 128, 384),
        "l2": lin_p(ks[8], ks[9], 128, 128),
        "l3": lin_p(ks[10], ks[11], 1, 128),
    }


def prepare_params(params):
    """One-time conversion of PyTorch-layout params into matmul-ready tensors
    (all constant padding / reshaping / transposition hoisted out of forward)."""
    w1, b1 = params["c1"]
    w2, b2 = params["c2"]
    w3, b3 = params["c3"]
    wl1, bl1 = params["l1"]
    wl2, bl2 = params["l2"]
    wl3, bl3 = params["l3"]
    return {
        # conv1: fold the /255 image preprocessing into the weights (conv is linear).
        "c1_w": (w1.reshape(32, 3 * 8 * 8).T / 255.0).astype(jnp.float32),  # (192, 32)
        "c1_b": b1.reshape(1, 32),
        "c2_w": w2.reshape(64, 32 * 4 * 4).T,                               # (512, 64)
        "c2_b": b2.reshape(1, 64),
        "c3_w": w3.reshape(64, 64 * 3 * 3).T,                               # (576, 64)
        "c3_b": b3.reshape(1, 64),
        # Linear(384,128): permute columns from the PyTorch NCHW flatten order
        # (col = c*6 + p) into per-position (p, c) blocks -> (6, 64, 128).
        "l1_w": wl1.reshape(128, 64, 6).transpose(2, 1, 0),
        "l1_b": bl1.reshape(1, 128),
        "l2_w": wl2.T,                                                       # (128, 128)
        "l2_b": bl2.reshape(1, 128),
        "l3_w": wl3.T,                                                       # (128, 1)
        "l3_b": bl3.reshape(1, 1),
    }


# --------------------------------------------------------------------------
# Forward pass
# --------------------------------------------------------------------------
def cnn_critic_forward(obs, prep):
    """CNNCritic.forward: obs (N, H, W, 3) -> value (N,)."""
    N = obs.shape[0]
    # img_preprocess: torch transpose(-1, 1) => NCHW with H=obs.shape[2],
    # W=obs.shape[1]; we keep NHWC so only the two spatial axes swap.
    # The /255 scaling is folded into the conv1 weights (prepare_params).
    # TODO(synk): the .to('cuda') calls are device placement only; no-op here.
    x = jnp.transpose(obs, (0, 2, 1, 3)).astype(jnp.float32)   # (N, 148, 180, 3)

    # Conv2d(3, 32, 8, 4) + ReLU (ReLU hoisted from after MaxPool; it commutes).
    p1, oh1, ow1 = _im2col_nhwc(x, 8, 8, 4)                    # (N*1584, 192)
    y1 = matmul_bias_relu(p1, prep["c1_w"], prep["c1_b"], relu=True, tm=oh1 * ow1)
    y1 = y1.reshape(N, oh1, ow1, 32)

    # MaxPool2d(2): lane-dense Pallas 4-tap max kernel.
    y1 = maxpool2x2_nhwc(y1)                                   # (N, 18, 22, 32)

    # Conv2d(32, 64, 4, 2) + ReLU.
    p2, oh2, ow2 = _im2col_nhwc(y1, 4, 4, 2)                   # (N*80, 512)
    y2 = matmul_bias_relu(p2, prep["c2_w"], prep["c2_b"], relu=True, tm=oh2 * ow2)
    y2 = y2.reshape(N, oh2, ow2, 64)

    # Fused tail: MaxPool2d(2) + Conv2d(64,64,3,1)+ReLU + Flatten +
    # Linear(384,128)+ReLU + Linear(128,128)+ReLU + Linear(128,1), then squeeze.
    return tail_forward(y2, prep)


def _reference_forward(obs, params):
    """Pure-JAX reference mirroring the PyTorch module exactly (NCHW)."""
    x = jnp.swapaxes(obs, -1, 1).astype(jnp.float32) / 255.0

    def conv(x, w, b, s):
        y = lax.conv_general_dilated(x, w, (s, s), "VALID",
                                     dimension_numbers=("NCHW", "OIHW", "NCHW"))
        return y + b[None, :, None, None]

    def pool(x):
        return lax.reduce_window(x, -jnp.inf, lax.max,
                                 (1, 1, 2, 2), (1, 1, 2, 2), "VALID")

    x = jax.nn.relu(pool(conv(x, *params["c1"], 4)))
    x = jax.nn.relu(pool(conv(x, *params["c2"], 2)))
    x = jax.nn.relu(conv(x, *params["c3"], 1))
    x = x.reshape(x.shape[0], -1)
    x = jax.nn.relu(x @ params["l1"][0].T + params["l1"][1])
    x = jax.nn.relu(x @ params["l2"][0].T + params["l2"][1])
    x = x @ params["l3"][0].T + params["l3"][1]
    return jnp.squeeze(x, -1)


if __name__ == "__main__":
    key = jax.random.PRNGKey(0)
    k_obs, k_par = jax.random.split(key)
    # nn.Linear(384, 128) pins the flattened conv features to 384 = 64 * 2 * 3,
    # which requires conv-plane spatial size 148 x 180; at the NHWC interface
    # (before the transpose(-1, 1)) that is obs of shape (N, 180, 148, 3).
    obs = jax.random.uniform(k_obs, (2, 180, 148, 3), jnp.float32, 0.0, 255.0)
    params = init_params(k_par)
    prep = prepare_params(params)

    fwd = jax.jit(cnn_critic_forward)
    out = jax.block_until_ready(fwd(obs, prep))
    ref = jax.block_until_ready(_reference_forward(obs, params))
    assert out.shape == (2,), out.shape
    assert jnp.allclose(out, ref, rtol=1e-4, atol=1e-4), (out, ref)
    print("KERNEL_OK")
</pallas_src>

<mosaic_0001>
module attributes {stable_mosaic.version = 11 : i64} {
  func.func @_matmul_bias_relu_kernel(%arg0: i32, %arg1: memref<1584x192xf32, #tpu.memory_space<vmem>>, %arg2: memref<192x32xf32, #tpu.memory_space<vmem>>, %arg3: memref<1x32xf32, #tpu.memory_space<vmem>>, %arg4: memref<1584x32xf32, #tpu.memory_space<vmem>>) attributes {dimension_semantics = [#tpu.dimension_semantics<parallel>], iteration_bounds = array<i64: 2>, scalar_prefetch = 0 : i64, scratch_operands = 0 : i64, tpu.core_type = #tpu.core_type<tc>, window_params = [{transform_indices = @transform_0, window_bounds = array<i64: 1584, 192>}, {pipeline_mode = #tpu.pipeline_mode<synchronous>, transform_indices = @transform_1, window_bounds = array<i64: 192, 32>}, {pipeline_mode = #tpu.pipeline_mode<synchronous>, transform_indices = @transform_2, window_bounds = array<i64: 1, 32>}, {transform_indices = @transform_3, window_bounds = array<i64: 1584, 32>}]} {
    %c0 = arith.constant 0 : index
    %c0_0 = arith.constant 0 : index
    %0 = vector.load %arg1[%c0, %c0_0] : memref<1584x192xf32, #tpu.memory_space<vmem>>, vector<1584x192xf32>
    %c0_1 = arith.constant 0 : index
    %c0_2 = arith.constant 0 : index
    %1 = vector.load %arg2[%c0_1, %c0_2] : memref<192x32xf32, #tpu.memory_space<vmem>>, vector<192x32xf32>
    %cst = arith.constant dense<0.000000e+00> : vector<1584x32xf32>
    %2 = tpu.matmul %0, %1, %cst {dimension_numbers = #tpu.dot_dimension_numbers<[1], [0], [0], [1], [0, 0, 1, 1], [], []>} : vector<1584x192xf32>, vector<192x32xf32>, vector<1584x32xf32> -> vector<1584x32xf32>
    %c0_3 = arith.constant 0 : index
    %c0_4 = arith.constant 0 : index
    %3 = vector.load %arg3[%c0_3, %c0_4] : memref<1x32xf32, #tpu.memory_space<vmem>>, vector<1x32xf32>
    %4 = vector.broadcast %3 : vector<1x32xf32> to vector<1584x32xf32>
    %5 = arith.addf %2, %4 : vector<1584x32xf32>
    %cst_5 = arith.constant 0.000000e+00 : f32
    %6 = vector.broadcast %cst_5 : f32 to vector<1584x32xf32>
    %7 = arith.maximumf %5, %6 : vector<1584x32xf32>
    %c0_6 = arith.constant 0 : index
    %c0_7 = arith.constant 0 : index
    %8 = vector.load %arg4[%c0_6, %c0_7] : memref<1584x32xf32, #tpu.memory_space<vmem>>, vector<1584x32xf32>
    tpu.vector_store %arg4[%c0_6, %c0_7], %7 {strides = array<i32>} : memref<1584x32xf32, #tpu.memory_space<vmem>>, vector<1584x32xf32>,
    return
  }
  func.func @transform_0(%arg0: i32) -> (i32, i32) {
    %c0_i32 = arith.constant 0 : i32
    %c0_i32_0 = arith.constant 0 : i32
    return %arg0, %c0_i32 : i32, i32
  }
  func.func @transform_1(%arg0: i32) -> (i32, i32) {
    %c0_i32 = arith.constant 0 : i32
    %c0_i32_0 = arith.constant 0 : i32
    %c0_i32_1 = arith.constant 0 : i32
    return %c0_i32, %c0_i32_0 : i32, i32
  }
  func.func @transform_2(%arg0: i32) -> (i32, i32) {
    %c0_i32 = arith.constant 0 : i32
    %c0_i32_0 = arith.constant 0 : i32
    %c0_i32_1 = arith.constant 0 : i32
    return %c0_i32, %c0_i32_0 : i32, i32
  }
  func.func @transform_3(%arg0: i32) -> (i32, i32) {
    %c0_i32 = arith.constant 0 : i32
    %c0_i32_0 = arith.constant 0 : i32
    return %arg0, %c0_i32 : i32, i32
  }
}

module attributes {stable_mosaic.version = 11 : i64} {
  func.func @_max4_kernel(%arg0: i32, %arg1: memref<4x1x99x128xf32, #tpu.memory_space<vmem>>, %arg2: memref<1x99x128xf32, #tpu.memory_space<vmem>>) attributes {dimension_semantics = [#tpu.dimension_semantics<parallel>], iteration_bounds = array<i64: 2>, scalar_prefetch = 0 : i64, scratch_operands = 0 : i64, tpu.core_type = #tpu.core_type<tc>, window_params = [{transform_indices = @transform_0, window_bounds = array<i64: 4, 1, 99, 128>}, {transform_indices = @transform_1, window_bounds = array<i64: 1, 99, 128>}]} {
    %c0 = arith.constant 0 : index
    %c0_0 = arith.constant 0 : index
    %c0_1 = arith.constant 0 : index
    %c0_2 = arith.constant 0 : index
    %0 = vector.load %arg1[%c0, %c0_0, %c0_1, %c0_2] : memref<4x1x99x128xf32, #tpu.memory_space<vmem>>, vector<1x1x99x128xf32>
    %1 = vector.shape_cast %0 : vector<1x1x99x128xf32> to vector<1x99x128xf32>
    %c1 = arith.constant 1 : index
    %c0_3 = arith.constant 0 : index
    %c0_4 = arith.constant 0 : index
    %c0_5 = arith.constant 0 : index
    %2 = vector.load %arg1[%c1, %c0_3, %c0_4, %c0_5] : memref<4x1x99x128xf32, #tpu.memory_space<vmem>>, vector<1x1x99x128xf32>
    %3 = vector.shape_cast %2 : vector<1x1x99x128xf32> to vector<1x99x128xf32>
    %4 = arith.maximumf %1, %3 : vector<1x99x128xf32>
    %c2 = arith.constant 2 : index
    %c0_6 = arith.constant 0 : index
    %c0_7 = arith.constant 0 : index
    %c0_8 = arith.constant 0 : index
    %5 = vector.load %arg1[%c2, %c0_6, %c0_7, %c0_8] : memref<4x1x99x128xf32, #tpu.memory_space<vmem>>, vector<1x1x99x128xf32>
    %6 = vector.shape_cast %5 : vector<1x1x99x128xf32> to vector<1x99x128xf32>
    %c3 = arith.constant 3 : index
    %c0_9 = arith.constant 0 : index
    %c0_10 = arith.constant 0 : index
    %c0_11 = arith.constant 0 : index
    %7 = vector.load %arg1[%c3, %c0_9, %c0_10, %c0_11] : memref<4x1x99x128xf32, #tpu.memory_space<vmem>>, vector<1x1x99x128xf32>
    %8 = vector.shape_cast %7 : vector<1x1x99x128xf32> to vector<1x99x128xf32>
    %9 = arith.maximumf %6, %8 : vector<1x99x128xf32>
    %10 = arith.maximumf %4, %9 : vector<1x99x128xf32>
    %c0_12 = arith.constant 0 : index
    %c0_13 = arith.constant 0 : index
    %c0_14 = arith.constant 0 : index
    %11 = vector.load %arg2[%c0_12, %c0_13, %c0_14] : memref<1x99x128xf32, #tpu.memory_space<vmem>>, vector<1x99x128xf32>
    tpu.vector_store %arg2[%c0_12, %c0_13, %c0_14], %10 {strides = array<i32>} : memref<1x99x128xf32, #tpu.memory_space<vmem>>, vector<1x99x128xf32>,
    return
  }
  func.func @transform_0(%arg0: i32) -> (i32, i32, i32, i32) {
    %c0_i32 = arith.constant 0 : i32
    %c0_i32_0 = arith.constant 0 : i32
    %c0_i32_1 = arith.constant 0 : i32
    %c0_i32_2 = arith.constant 0 : i32
    return %c0_i32, %arg0, %c0_i32_0, %c0_i32_1 : i32, i32, i32, i32
  }
  func.func @transform_1(%arg0: i32) -> (i32, i32, i32) {
    %c0_i32 = arith.constant 0 : i32
    %c0_i32_0 = arith.constant 0 : i32
    %c0_i32_1 = arith.constant 0 : i32
    return %arg0, %c0_i32, %c0_i32_0 : i32, i32, i32
  }
}

module attributes {stable_mosaic.version = 11 : i64} {
  func.func @_matmul_bias_relu_kernel(%arg0: i32, %arg1: memref<80x512xf32, #tpu.memory_space<vmem>>, %arg2: memref<512x64xf32, #tpu.memory_space<vmem>>, %arg3: memref<1x64xf32, #tpu.memory_space<vmem>>, %arg4: memref<80x64xf32, #tpu.memory_space<vmem>>) attributes {dimension_semantics = [#tpu.dimension_semantics<parallel>], iteration_bounds = array<i64: 2>, scalar_prefetch = 0 : i64, scratch_operands = 0 : i64, tpu.core_type = #tpu.core_type<tc>, window_params = [{transform_indices = @transform_0, window_bounds = array<i64: 80, 512>}, {pipeline_mode = #tpu.pipeline_mode<synchronous>, transform_indices = @transform_1, window_bounds = array<i64: 512, 64>}, {pipeline_mode = #tpu.pipeline_mode<synchronous>, transform_indices = @transform_2, window_bounds = array<i64: 1, 64>}, {transform_indices = @transform_3, window_bounds = array<i64: 80, 64>}]} {
    %c0 = arith.constant 0 : index
    %c0_0 = arith.constant 0 : index
    %0 = vector.load %arg1[%c0, %c0_0] : memref<80x512xf32, #tpu.memory_space<vmem>>, vector<80x512xf32>
    %c0_1 = arith.constant 0 : index
    %c0_2 = arith.constant 0 : index
    %1 = vector.load %arg2[%c0_1, %c0_2] : memref<512x64xf32, #tpu.memory_space<vmem>>, vector<512x64xf32>
    %cst = arith.constant dense<0.000000e+00> : vector<80x64xf32>
    %2 = tpu.matmul %0, %1, %cst {dimension_numbers = #tpu.dot_dimension_numbers<[1], [0], [0], [1], [0, 0, 1, 1], [], []>} : vector<80x512xf32>, vector<512x64xf32>, vector<80x64xf32> -> vector<80x64xf32>
    %c0_3 = arith.constant 0 : index
    %c0_4 = arith.constant 0 : index
    %3 = vector.load %arg3[%c0_3, %c0_4] : memref<1x64xf32, #tpu.memory_space<vmem>>, vector<1x64xf32>
    %4 = vector.broadcast %3 : vector<1x64xf32> to vector<80x64xf32>
    %5 = arith.addf %2, %4 : vector<80x64xf32>
    %cst_5 = arith.constant 0.000000e+00 : f32
    %6 = vector.broadcast %cst_5 : f32 to vector<80x64xf32>
    %7 = arith.maximumf %5, %6 : vector<80x64xf32>
    %c0_6 = arith.constant 0 : index
    %c0_7 = arith.constant 0 : index
    %8 = vector.load %arg4[%c0_6, %c0_7] : memref<80x64xf32, #tpu.memory_space<vmem>>, vector<80x64xf32>
    tpu.vector_store %arg4[%c0_6, %c0_7], %7 {strides = array<i32>} : memref<80x64xf32, #tpu.memory_space<vmem>>, vector<80x64xf32>,
    return
  }
  func.func @transform_0(%arg0: i32) -> (i32, i32) {
    %c0_i32 = arith.constant 0 : i32
    %c0_i32_0 = arith.constant 0 : i32
    return %arg0, %c0_i32 : i32, i32
  }
  func.func @transform_1(%arg0: i32) -> (i32, i32) {
    %c0_i32 = arith.constant 0 : i32
    %c0_i32_0 = arith.constant 0 : i32
    %c0_i32_1 = arith.constant 0 : i32
    return %c0_i32, %c0_i32_0 : i32, i32
  }
  func.func @transform_2(%arg0: i32) -> (i32, i32) {
    %c0_i32 = arith.constant 0 : i32
    %c0_i32_0 = arith.constant 0 : i32
    %c0_i32_1 = arith.constant 0 : i32
    return %c0_i32, %c0_i32_0 : i32, i32
  }
  func.func @transform_3(%arg0: i32) -> (i32, i32) {
    %c0_i32 = arith.constant 0 : i32
    %c0_i32_0 = arith.constant 0 : i32
    return %arg0, %c0_i32 : i32, i32
  }
}

module attributes {stable_mosaic.version = 11 : i64} {
  func.func @_tail_kernel(%arg0: i32, %arg1: memref<4x1x6x576xf32, #tpu.memory_space<vmem>>, %arg2: memref<576x64xf32, #tpu.memory_space<vmem>>, %arg3: memref<1x64xf32, #tpu.memory_space<vmem>>, %arg4: memref<6x64x128xf32, #tpu.memory_space<vmem>>, %arg5: memref<1x128xf32, #tpu.memory_space<vmem>>, %arg6: memref<128x128xf32, #tpu.memory_space<vmem>>, %arg7: memref<1x128xf32, #tpu.memory_space<vmem>>, %arg8: memref<128x1xf32, #tpu.memory_space<vmem>>, %arg9: memref<1x1xf32, #tpu.memory_space<vmem>>, %arg10: memref<1x1x1xf32, #tpu.memory_space<vmem>>) attributes {dimension_semantics = [#tpu.dimension_semantics<parallel>], iteration_bounds = array<i64: 2>, scalar_prefetch = 0 : i64, scratch_operands = 0 : i64, tpu.core_type = #tpu.core_type<tc>, window_params = [{transform_indices = @transform_0, window_bounds = array<i64: 4, 1, 6, 576>}, {pipeline_mode = #tpu.pipeline_mode<synchronous>, transform_indices = @transform_1, window_bounds = array<i64: 576, 64>}, {pipeline_mode = #tpu.pipeline_mode<synchronous>, transform_indices = @transform_2, window_bounds = array<i64: 1, 64>}, {pipeline_mode = #tpu.pipeline_mode<synchronous>, transform_indices = @transform_3, window_bounds = array<i64: 6, 64, 128>}, {pipeline_mode = #tpu.pipeline_mode<synchronous>, transform_indices = @transform_4, window_bounds = array<i64: 1, 128>}, {pipeline_mode = #tpu.pipeline_mode<synchronous>, transform_indices = @transform_5, window_bounds = array<i64: 128, 128>}, {pipeline_mode = #tpu.pipeline_mode<synchronous>, transform_indices = @transform_6, window_bounds = array<i64: 1, 128>}, {pipeline_mode = #tpu.pipeline_mode<synchronous>, transform_indices = @transform_7, window_bounds = array<i64: 128, 1>}, {pipeline_mode = #tpu.pipeline_mode<synchronous>, transform_indices = @transform_8, window_bounds = array<i64: 1, 1>}, {transform_indices = @transform_9, window_bounds = array<i64: 1, 1, 1>}]} {
    %c0 = arith.constant 0 : index
    %c0_0 = arith.constant 0 : index
    %c0_1 = arith.constant 0 : index
    %c0_2 = arith.constant 0 : index
    %0 = vector.load %arg1[%c0, %c0_0, %c0_1, %c0_2] : memref<4x1x6x576xf32, #tpu.memory_space<vmem>>, vector<1x1x6x576xf32>
    %1 = vector.shape_cast %0 : vector<1x1x6x576xf32> to vector<6x576xf32>
    %c1 = arith.constant 1 : index
    %c0_3 = arith.constant 0 : index
    %c0_4 = arith.constant 0 : index
    %c0_5 = arith.constant 0 : index
    %2 = vector.load %arg1[%c1, %c0_3, %c0_4, %c0_5] : memref<4x1x6x576xf32, #tpu.memory_space<vmem>>, vector<1x1x6x576xf32>
    %3 = vector.shape_cast %2 : vector<1x1x6x576xf32> to vector<6x576xf32>
    %4 = arith.maximumf %1, %3 : vector<6x576xf32>
    %c2 = arith.constant 2 : index
    %c0_6 = arith.constant 0 : index
    %c0_7 = arith.constant 0 : index
    %c0_8 = arith.constant 0 : index
    %5 = vector.load %arg1[%c2, %c0_6, %c0_7, %c0_8] : memref<4x1x6x576xf32, #tpu.memory_space<vmem>>, vector<1x1x6x576xf32>
    %6 = vector.shape_cast %5 : vector<1x1x6x576xf32> to vector<6x576xf32>
    %c3 = arith.constant 3 : index
    %c0_9 = arith.constant 0 : index
    %c0_10 = arith.constant 0 : index
    %c0_11 = arith.constant 0 : index
    %7 = vector.load %arg1[%c3, %c0_9, %c0_10, %c0_11] : memref<4x1x6x576xf32, #tpu.memory_space<vmem>>, vector<1x1x6x576xf32>
    %8 = vector.shape_cast %7 : vector<1x1x6x576xf32> to vector<6x576xf32>
    %9 = arith.maximumf %6, %8 : vector<6x576xf32>
    %10 = arith.maximumf %4, %9 : vector<6x576xf32>
    %c0_12 = arith.constant 0 : index
    %c0_13 = arith.constant 0 : index
    %11 = vector.load %arg2[%c0_12, %c0_13] : memref<576x64xf32, #tpu.memory_space<vmem>>, vector<576x64xf32>
    %cst = arith.constant dense<0.000000e+00> : vector<6x64xf32>
    %12 = tpu.matmul %10, %11, %cst {dimension_numbers = #tpu.dot_dimension_numbers<[1], [0], [0], [1], [0, 0, 1, 1], [], []>} : vector<6x576xf32>, vector<576x64xf32>, vector<6x64xf32> -> vector<6x64xf32>
    %c0_14 = arith.constant 0 : index
    %c0_15 = arith.constant 0 : index
    %13 = vector.load %arg3[%c0_14, %c0_15] : memref<1x64xf32, #tpu.memory_space<vmem>>, vector<1x64xf32>
    %14 = vector.broadcast %13 : vector<1x64xf32> to vector<6x64xf32>
    %15 = arith.addf %12, %14 : vector<6x64xf32>
    %cst_16 = arith.constant 0.000000e+00 : f32
    %16 = vector.broadcast %cst_16 : f32 to vector<6x64xf32>
    %17 = arith.maximumf %15, %16 : vector<6x64xf32>
    %c0_17 = arith.constant 0 : index
    %c0_18 = arith.constant 0 : index
    %18 = vector.load %arg5[%c0_17, %c0_18] : memref<1x128xf32, #tpu.memory_space<vmem>>, vector<1x128xf32>
    %19 = vector.extract_strided_slice %17 {offsets = [0, 0], sizes = [1, 64], strides = [1, 1]} : vector<6x64xf32> to vector<1x64xf32>
    %c0_19 = arith.constant 0 : index
    %c0_20 = arith.constant 0 : index
    %c0_21 = arith.constant 0 : index
    %20 = vector.load %arg4[%c0_19, %c0_20, %c0_21] : memref<6x64x128xf32, #tpu.memory_space<vmem>>, vector<1x64x128xf32>
    %21 = vector.shape_cast %20 : vector<1x64x128xf32> to vector<64x128xf32>
    %cst_22 = arith.constant dense<0.000000e+00> : vector<1x128xf32>
    %22 = tpu.matmul %19, %21, %cst_22 {dimension_numbers = #tpu.dot_dimension_numbers<[1], [0], [0], [1], [0, 0, 1, 1], [], []>} : vector<1x64xf32>, vector<64x128xf32>, vector<1x128xf32> -> vector<1x128xf32>
    %23 = arith.addf %18, %22 : vector<1x128xf32>
    %24 = vector.extract_strided_slice %17 {offsets = [1, 0], sizes = [1, 64], strides = [1, 1]} : vector<6x64xf32> to vector<1x64xf32>
    %c1_23 = arith.constant 1 : index
    %c0_24 = arith.constant 0 : index
    %c0_25 = arith.constant 0 : index
    %25 = vector.load %arg4[%c1_23, %c0_24, %c0_25] : memref<6x64x128xf32, #tpu.memory_space<vmem>>, vector<1x64x128xf32>
    %26 = vector.shape_cast %25 : vector<1x64x128xf32> to vector<64x128xf32>
    %cst_26 = arith.constant dense<0.000000e+00> : vector<1x128xf32>
    %27 = tpu.matmul %24, %26, %cst_26 {dimension_numbers = #tpu.dot_dimension_numbers<[1], [0], [0], [1], [0, 0, 1, 1], [], []>} : vector<1x64xf32>, vector<64x128xf32>, vector<1x128xf32> -> vector<1x128xf32>
    %28 = arith.addf %23, %27 : vector<1x128xf32>
    %29 = vector.extract_strided_slice %17 {offsets = [2, 0], sizes = [1, 64], strides = [1, 1]} : vector<6x64xf32> to vector<1x64xf32>
    %c2_27 = arith.constant 2 : index
    %c0_28 = arith.constant 0 : index
    %c0_29 = arith.constant 0 : index
    %30 = vector.load %arg4[%c2_27, %c0_28, %c0_29] : memref<6x64x128xf32, #tpu.memory_space<vmem>>, vector<1x64x128xf32>
    %31 = vector.shape_cast %30 : vector<1x64x128xf32> to vector<64x128xf32>
    %cst_30 = arith.constant dense<0.000000e+00> : vector<1x128xf32>
    %32 = tpu.matmul %29, %31, %cst_30 {dimension_numbers = #tpu.dot_dimension_numbers<[1], [0], [0], [1], [0, 0, 1, 1], [], []>} : vector<1x64xf32>, vector<64x128xf32>, vector<1x128xf32> -> vector<1x128xf32>
    %33 = arith.addf %28, %32 : vector<1x128xf32>
    %34 = vector.extract_strided_slice %17 {offsets = [3, 0], sizes = [1, 64], strides = [1, 1]} : vector<6x64xf32> to vector<1x64xf32>
    %c3_31 = arith.constant 3 : index
    %c0_32 = arith.constant 0 : index
    %c0_33 = arith.constant 0 : index
    %35 = vector.load %arg4[%c3_31, %c0_32, %c0_33] : memref<6x64x128xf32, #tpu.memory_space<vmem>>, vector<1x64x128xf32>
    %36 = vector.shape_cast %35 : vector<1x64x128xf32> to vector<64x128xf32>
    %cst_34 = arith.constant dense<0.000000e+00> : vector<1x128xf32>
    %37 = tpu.matmul %34, %36, %cst_34 {dimension_numbers = #tpu.dot_dimension_numbers<[1], [0], [0], [1], [0, 0, 1, 1], [], []>} : vector<1x64xf32>, vector<64x128xf32>, vector<1x128xf32> -> vector<1x128xf32>
    %38 = arith.addf %33, %37 : vector<1x128xf32>
    %39 = vector.extract_strided_slice %17 {offsets = [4, 0], sizes = [1, 64], strides = [1, 1]} : vector<6x64xf32> to vector<1x64xf32>
    %c4 = arith.constant 4 : index
    %c0_35 = arith.constant 0 : index
    %c0_36 = arith.constant 0 : index
    %40 = vector.load %arg4[%c4, %c0_35, %c0_36] : memref<6x64x128xf32, #tpu.memory_space<vmem>>, vector<1x64x128xf32>
    %41 = vector.shape_cast %40 : vector<1x64x128xf32> to vector<64x128xf32>
    %cst_37 = arith.constant dense<0.000000e+00> : vector<1x128xf32>
    %42 = tpu.matmul %39, %41, %cst_37 {dimension_numbers = #tpu.dot_dimension_numbers<[1], [0], [0], [1], [0, 0, 1, 1], [], []>} : vector<1x64xf32>, vector<64x128xf32>, vector<1x128xf32> -> vector<1x128xf32>
    %43 = arith.addf %38, %42 : vector<1x128xf32>
    %44 = vector.extract_strided_slice %17 {offsets = [5, 0], sizes = [1, 64], strides = [1, 1]} : vector<6x64xf32> to vector<1x64xf32>
    %c5 = arith.constant 5 : index
    %c0_38 = arith.constant 0 : index
    %c0_39 = arith.constant 0 : index
    %45 = vector.load %arg4[%c5, %c0_38, %c0_39] : memref<6x64x128xf32, #tpu.memory_space<vmem>>, vector<1x64x128xf32>
    %46 = vector.shape_cast %45 : vector<1x64x128xf32> to vector<64x128xf32>
    %cst_40 = arith.constant dense<0.000000e+00> : vector<1x128xf32>
    %47 = tpu.matmul %44, %46, %cst_40 {dimension_numbers = #tpu.dot_dimension_numbers<[1], [0], [0], [1], [0, 0, 1, 1], [], []>} : vector<1x64xf32>, vector<64x128xf32>, vector<1x128xf32> -> vector<1x128xf32>
    %48 = arith.addf %43, %47 : vector<1x128xf32>
    %cst_41 = arith.constant 0.000000e+00 : f32
    %49 = vector.broadcast %cst_41 : f32 to vector<1x128xf32>
    %50 = arith.maximumf %48, %49 : vector<1x128xf32>
    %c0_42 = arith.constant 0 : index
    %c0_43 = arith.constant 0 : index
    %51 = vector.load %arg6[%c0_42, %c0_43] : memref<128x128xf32, #tpu.memory_space<vmem>>, vector<128x128xf32>
    %cst_44 = arith.constant dense<0.000000e+00> : vector<1x128xf32>
    %52 = tpu.matmul %50, %51, %cst_44 {dimension_numbers = #tpu.dot_dimension_numbers<[1], [0], [0], [1], [0, 0, 1, 1], [], []>} : vector<1x128xf32>, vector<128x128xf32>, vector<1x128xf32> -> vector<1x128xf32>
    %c0_45 = arith.constant 0 : index
    %c0_46 = arith.constant 0 : index
    %53 = vector.load %arg7[%c0_45, %c0_46] : memref<1x128xf32, #tpu.memory_space<vmem>>, vector<1x128xf32>
    %54 = arith.addf %52, %53 : vector<1x128xf32>
    %cst_47 = arith.constant 0.000000e+00 : f32
    %55 = vector.broadcast %cst_47 : f32 to vector<1x128xf32>
    %56 = arith.maximumf %54, %55 : vector<1x128xf32>
    %c0_48 = arith.constant 0 : index
    %c0_49 = arith.constant 0 : index
    %57 = vector.load %arg8[%c0_48, %c0_49] : memref<128x1xf32, #tpu.memory_space<vmem>>, vector<128x1xf32>
    %cst_50 = arith.constant dense<0.000000e+00> : vector<1x1xf32>
    %58 = tpu.matmul %56, %57, %cst_50 {dimension_numbers = #tpu.dot_dimension_numbers<[1], [0], [0], [1], [0, 0, 1, 1], [], []>} : vector<1x128xf32>, vector<128x1xf32>, vector<1x1xf32> -> vector<1x1xf32>
    %c0_51 = arith.constant 0 : index
    %c0_52 = arith.constant 0 : index
    %59 = vector.load %arg9[%c0_51, %c0_52] : memref<1x1xf32, #tpu.memory_space<vmem>>, vector<1x1xf32>
    %60 = arith.addf %58, %59 : vector<1x1xf32>
    %c0_53 = arith.constant 0 : index
    %c0_54 = arith.constant 0 : index
    %c0_55 = arith.constant 0 : index
    %61 = vector.load %arg10[%c0_53, %c0_54, %c0_55] : memref<1x1x1xf32, #tpu.memory_space<vmem>>, vector<1x1x1xf32>
    %62 = vector.shape_cast %61 : vector<1x1x1xf32> to vector<1x1xf32>
    %63 = vector.shape_cast %60 : vector<1x1xf32> to vector<1x1x1xf32>
    tpu.vector_store %arg10[%c0_53, %c0_54, %c0_55], %63 {strides = array<i32>} : memref<1x1x1xf32, #tpu.memory_space<vmem>>, vector<1x1x1xf32>,
    return
  }
  func.func @transform_0(%arg0: i32) -> (i32, i32, i32, i32) {
    %c0_i32 = arith.constant 0 : i32
    %c0_i32_0 = arith.constant 0 : i32
    %c0_i32_1 = arith.constant 0 : i32
    %c0_i32_2 = arith.constant 0 : i32
    return %c0_i32, %arg0, %c0_i32_0, %c0_i32_1 : i32, i32, i32, i32
  }
  func.func @transform_1(%arg0: i32) -> (i32, i32) {
    %c0_i32 = arith.constant 0 : i32
    %c0_i32_0 = arith.constant 0 : i32
    %c0_i32_1 = arith.constant 0 : i32
    return %c0_i32, %c0_i32_0 : i32, i32
  }
  func.func @transform_2(%arg0: i32) -> (i32, i32) {
    %c0_i32 = arith.constant 0 : i32
    %c0_i32_0 = arith.constant 0 : i32
    %c0_i32_1 = arith.constant 0 : i32
    return %c0_i32, %c0_i32_0 : i32, i32
  }
  func.func @transform_3(%arg0: i32) -> (i32, i32, i32) {
    %c0_i32 = arith.constant 0 : i32
    %c0_i32_0 = arith.constant 0 : i32
    %c0_i32_1 = arith.constant 0 : i32
    %c0_i32_2 = arith.constant 0 : i32
    return %c0_i32, %c0_i32_0, %c0_i32_1 : i32, i32, i32
  }
  func.func @transform_4(%arg0: i32) -> (i32, i32) {
    %c0_i32 = arith.constant 0 : i32
    %c0_i32_0 = arith.constant 0 : i32
    %c0_i32_1 = arith.constant 0 : i32
    return %c0_i32, %c0_i32_0 : i32, i32
  }
  func.func @transform_5(%arg0: i32) -> (i32, i32) {
    %c0_i32 = arith.constant 0 : i32
    %c0_i32_0 = arith.constant 0 : i32
    %c0_i32_1 = arith.constant 0 : i32
    return %c0_i32, %c0_i32_0 : i32, i32
  }
  func.func @transform_6(%arg0: i32) -> (i32, i32) {
    %c0_i32 = arith.constant 0 : i32
    %c0_i32_0 = arith.constant 0 : i32
    %c0_i32_1 = arith.constant 0 : i32
    return %c0_i32, %c0_i32_0 : i32, i32
  }
  func.func @transform_7(%arg0: i32) -> (i32, i32) {
    %c0_i32 = arith.constant 0 : i32
    %c0_i32_0 = arith.constant 0 : i32
    %c0_i32_1 = arith.constant 0 : i32
    return %c0_i32, %c0_i32_0 : i32, i32
  }
  func.func @transform_8(%arg0: i32) -> (i32, i32) {
    %c0_i32 = arith.constant 0 : i32
    %c0_i32_0 = arith.constant 0 : i32
    %c0_i32_1 = arith.constant 0 : i32
    return %c0_i32, %c0_i32_0 : i32, i32
  }
  func.func @transform_9(%arg0: i32) -> (i32, i32, i32) {
    %c0_i32 = arith.constant 0 : i32
    %c0_i32_0 = arith.constant 0 : i32
    %c0_i32_1 = arith.constant 0 : i32
    return %arg0, %c0_i32, %c0_i32_0 : i32, i32, i32
  }
}

</mosaic_0001>

<llo_original>
// kernel: cnn_critic_forward.4
$region0: #{cnn_critic_forward.4}
  #allocation0 [shape = 'u32[]', space=smem, size = 0x4, offset = 0x4, fixed_abs, tag = 'smem constant byte address 0x4 - core index']
  #allocation1 [shape = 'u32[144,128]{1,0:T(1,128)}', space=vmem, size = 0x12000, scoped, tag = 'internal scratch']
  %s0 = inlined_call_operand.vmem [shape: f32[3168,192], index: 0, kind: input, shape index: {}]
  %s1 = inlined_call_operand.vmem [shape: f32[192,32], index: 1, kind: input, shape index: {}]
  %s2 = inlined_call_operand.vmem [shape: f32[1,32], index: 2, kind: input, shape index: {}]
  %s3 = inlined_call_operand.vmem [shape: f32[3168,32], index: 3, kind: output, shape index: {}]
  %s4 = sld [smem:[#allocation0]]
  $region45: #{cnn_critic_forward.4} parent=0
    _
  %s6 = ssub.s32 1, %s4
  %s7 = scalar_select 0, %s6, %s4
  loop: start=0, step=1, limit=4
  $region2: #{cnn_critic_forward.4} parent=0 // loop_pre_header
    _
  $region3: #{cnn_critic_forward.4} parent=0 // loop_header
    %s9 = sphi 0, %s13
    %p10 = scmp.ge.s32.totalorder %s9, 4
    %s19 = sphi 0, %s21
    %s22 = sphi 0, %s19
    %s23 = sphi 0, %s22
    %s39 = sphi 0, %s23
    %s43 = sphi 0, %s43
    %s45 = sphi 0, %s43
    %s46 = sphi 0, %s45
    %s60 = sphi 0, %s46
    %s64 = sphi 0, %s64
    %s66 = sphi 0, %s64
    %s67 = sphi 0, %s66
    %s81 = sphi 0, %s67
    %s87 = sphi 0, %s89
    %s90 = sphi 0, %s87
    %s91 = sphi 0, %s90
    %s107 = sphi 0, %s91
  $region4: #{cnn_critic_forward.4} parent=0 // loop_header_branch
    %12 = sbr.rel (%p10) target = $region8
  $region5: #{cnn_critic_forward.4} parent=0 // loop_body
    %s14 = ssub.s32 %s9, 1
    %s15 = ssub.s32 %s9, 2
    %s16 = sadd.s32 %s9, 1
    %s17 = ssub.s32 %s9, %s16
    %p18 = scmp.eq.s32.totalorder %s17, 0
    %s20 = sadd.s32 %s19, 1
    %s21 = scalar_select %p18, %s19, %s20
    %p24 = pneg %p18
    %p25 = scmp.eq.s32.totalorder %s9, 1
    %p26 = por %p24, %p25
    %p27 = scmp.ne.s32.totalorder %s19, %s22
    %p28 = scmp.eq.s32.totalorder %s9, 0
    %p29 = por %p27, %p28
    %p30 = scmp.ne.s32.totalorder %s19, %s22
    %p31 = scmp.eq.s32.totalorder %s14, 1
    %p32 = por %p30, %p31
    %p33 = scmp.ne.s32.totalorder %s22, %s23
    %p34 = scmp.eq.s32.totalorder %s14, 0
    %p35 = por %p33, %p34
    %p36 = scmp.ne.s32.totalorder %s22, %s23
    %p37 = scmp.eq.s32.totalorder %s15, 1
    %p38 = por %p36, %p37
    %p40 = scmp.ne.s32.totalorder %s23, %s39
    %p41 = scmp.eq.s32.totalorder %s15, 0
    %p42 = por %p40, %p41
    %s44 = sadd.s32 %s43, 1
    %p47 = scmp.eq.s32.totalorder %s9, 1
    %p48 = scmp.ne.s32.totalorder %s43, %s45
    %p49 = scmp.eq.s32.totalorder %s9, 0
    %p50 = por %p48, %p49
    %p51 = scmp.ne.s32.totalorder %s43, %s45
    %p52 = scmp.eq.s32.totalorder %s14, 1
    %p53 = por %p51, %p52
    %p54 = scmp.ne.s32.totalorder %s45, %s46
    %p55 = scmp.eq.s32.totalorder %s14, 0
    %p56 = por %p54, %p55
    %p57 = scmp.ne.s32.totalorder %s45, %s46
    %p58 = scmp.eq.s32.totalorder %s15, 1
    %p59 = por %p57, %p58
    %p61 = scmp.ne.s32.totalorder %s46, %s60
    %p62 = scmp.eq.s32.totalorder %s15, 0
    %p63 = por %p61, %p62
    %s65 = sadd.s32 %s64, 1
    %p68 = scmp.eq.s32.totalorder %s9, 1
    %p69 = scmp.ne.s32.totalorder %s64, %s66
    %p70 = scmp.eq.s32.totalorder %s9, 0
    %p71 = por %p69, %p70
    %p72 = scmp.ne.s32.totalorder %s64, %s66
    %p73 = scmp.eq.s32.totalorder %s14, 1
    %p74 = por %p72, %p73
    %p75 = scmp.ne.s32.totalorder %s66, %s67
    %p76 = scmp.eq.s32.totalorder %s14, 0
    %p77 = por %p75, %p76
    %p78 = scmp.ne.s32.totalorder %s66, %s67
    %p79 = scmp.eq.s32.totalorder %s15, 1
    %p80 = por %p78, %p79
    %p82 = scmp.ne.s32.totalorder %s67, %s81
    %p83 = scmp.eq.s32.totalorder %s15, 0
    %p84 = por %p82, %p83
    %s85 = ssub.s32 %s9, %s16
    %p86 = scmp.eq.s32.totalorder %s85, 0
    %s88 = sadd.s32 %s87, 1
    %s89 = scalar_select %p86, %s87, %s88
    %p92 = pneg %p86
    %p93 = scmp.eq.s32.totalorder %s9, 1
    %p94 = por %p92, %p93
    %p95 = scmp.ne.s32.totalorder %s87, %s90
    %p96 = scmp.eq.s32.totalorder %s9, 0
    %p97 = por %p95, %p96
    %p98 = scmp.ne.s32.totalorder %s87, %s90
    %p99 = scmp.eq.s32.totalorder %s14, 1
    %p100 = por %p98, %p99
    %p101 = scmp.ne.s32.totalorder %s90, %s91
    %p102 = scmp.eq.s32.totalorder %s14, 0
    %p103 = por %p101, %p102
    %p104 = scmp.ne.s32.totalorder %s90, %s91
    %p105 = scmp.eq.s32.totalorder %s15, 1
    %p106 = por %p104, %p105
    %p108 = scmp.ne.s32.totalorder %s91, %s107
    %p109 = scmp.eq.s32.totalorder %s15, 0
    %p110 = por %p108, %p109
    %p111 = scmp.le.s32.totalorder 1, %s9
    %p112 = scmp.lt.s32.totalorder %s9, 3
    %p113 = pnand %p111, %p112
    %p114 = pneg %p113
    // Predicated region
    $region9: #{cnn_critic_forward.4} parent=5 // pred_check
      _
    $region10: #{cnn_critic_forward.4} parent=5 // pred_check_branch
      %116 = sbr.rel (%p113) target = $region12
    $region11: #{cnn_critic_forward.4} parent=5 // pred_region
      %s117 = ssub.s32 %s9, 1
      // Predicated region
      $region13: #{cnn_critic_forward.4} parent=11 // pred_check
        %p118 = pneg %p56
      $region14: #{cnn_critic_forward.4} parent=11 // pred_check_branch
        %120 = sbr.rel (%p118) target = $region16
      $region15: #{cnn_critic_forward.4} parent=11 // pred_region
        _
      $region16: #{cnn_critic_forward.4} parent=11 // pred_fallthru
        _
      // Predicated region
      $region17: #{cnn_critic_forward.4} parent=11 // pred_check
        %p121 = pneg %p77
      $region18: #{cnn_critic_forward.4} parent=11 // pred_check_branch
        %123 = sbr.rel (%p121) target = $region20
      $region19: #{cnn_critic_forward.4} parent=11 // pred_region
        _
      $region20: #{cnn_critic_forward.4} parent=11 // pred_fallthru
        _
    $region12: #{cnn_critic_forward.4} parent=5 // pred_fallthru
      _
    %p124 = scmp.lt.s32.totalorder %s9, 2
    // Predicated region
    $region21: #{cnn_critic_forward.4} parent=5 // pred_check
      %p125 = pneg %p124
    $region22: #{cnn_critic_forward.4} parent=5 // pred_check_branch
      %127 = sbr.rel (%p125) target = $region24
    $region23: #{cnn_critic_forward.4} parent=5 // pred_region
      // Predicated region
      $region25: #{cnn_critic_forward.4} parent=23 // pred_check
        %p128 = pneg %p29
      $region26: #{cnn_critic_forward.4} parent=23 // pred_check_branch
        %130 = sbr.rel (%p128) target = $region28
      $region27: #{cnn_critic_forward.4} parent=23 // pred_region
        %s131 = smul.u32 198, %s9
        %p132 = scmp.lt.s32.totalorder %s131, 395
        %s133 = scalar_select %p132, %s131, 395
        %s134 = smul.addr %s133, 2
        %s135 = smul.addr %s134, 8
        %s136 = scalar_lea.vmem %s0, %s135
        %s137 = smul.u32 198, %s9
      $region28: #{cnn_critic_forward.4} parent=23 // pred_fallthru
        _
    $region24: #{cnn_critic_forward.4} parent=5 // pred_fallthru
      _
    %p138 = scmp.le.s32.totalorder 1, %s9
    %p139 = scmp.lt.s32.totalorder %s9, 3
    %p140 = pnand %p138, %p139
    %p141 = pneg %p140
    // Predicated region
    $region29: #{cnn_critic_forward.4} parent=5 // pred_check
      _
    $region30: #{cnn_critic_forward.4} parent=5 // pred_check_branch
      %143 = sbr.rel (%p140) target = $region32
    $region31: #{cnn_critic_forward.4} parent=5 // pred_region
      %s144 = ssub.s32 %s9, 1
      %s145 = smul.u32 198, %s14
      %p146 = scmp.lt.s32.totalorder %s145, 395
      %s147 = scalar_select %p146, %s145, 395
      %s148 = smul.addr %s147, 2
      %s149 = smul.addr %s148, 8
      %s150 = scalar_lea.vmem %s0, %s149
      %p151 = pneg %p35
      %p152 = pneg %p32
      %p153 = pneg %p56
      %p154 = pneg %p53
      %p155 = pneg %p77
      %p156 = pneg %p74
      %p157 = pneg %p103
      %p158 = pneg %p100
      %s159 = smul.u32 198, %s14
      %p160 = scmp.lt.s32.totalorder %s159, 395
      %s161 = scalar_select %p160, %s159, 395
      %s162 = smul.addr %s161, 8
      %s163 = scalar_lea.vmem %s3, %s162
      %s164 = smul.u32 198, %s14
      %p165 = scmp.lt.s32.totalorder %s164, 395
      %s166 = scalar_select %p165, %s164, 395
      %s167 = smul.addr %s166, 2
      %s168 = smul.addr %s167, 8
      %s169 = scalar_lea.vmem %s0, %s168
      %s170 = smul.u32 198, %s14
      %s171 = smul.u32 198, %s14
      %p172 = scmp.lt.s32.totalorder %s171, 395
      %s173 = scalar_select %p172, %s171, 395
      %s174 = smul.addr %s173, 8
      %s175 = scalar_lea.vmem %s3, %s174
      %s176 = smul.u32 198, %s14
      %v177 = vld [vmem:[%s169] sm:$0xff]
      %v178 = vld [vmem:[%s169 + $0x8] sm:$0xff]
      %v179 = vld [vmem:[%s169 + $0x10] sm:$0xff]
      %v180 = vld [vmem:[%s169 + $0x18] sm:$0xff]
      %v181 = vld [vmem:[%s169 + $0x20] sm:$0xff]
      %v182 = vld [vmem:[%s169 + $0x28] sm:$0xff]
      %v183 = vld [vmem:[%s169 + $0x30] sm:$0xff]
      %v184 = vld [vmem:[%s169 + $0x38] sm:$0xff]
      %v185 = vld [vmem:[%s169 + $0x40] sm:$0xff]
      %v186 = vld [vmem:[%s169 + $0x48] sm:$0xff]
      %v187 = vld [vmem:[%s169 + $0x50] sm:$0xff]
      %v188 = vld [vmem:[%s169 + $0x58] sm:$0xff]
      %v189 = vld [vmem:[%s169 + $0x60] sm:$0xff]
      %v190 = vld [vmem:[%s169 + $0x68] sm:$0xff]
      %v191 = vld [vmem:[%s169 + $0x70] sm:$0xff]
      %v192 = vld [vmem:[%s169 + $0x78] sm:$0xff]
      %v193 = vld [vmem:[%s169 + $0x80] sm:$0xff]
      %v194 = vld [vmem:[%s169 + $0x88] sm:$0xff]
      %v195 = vld [vmem:[%s169 + $0x90] sm:$0xff]
      %v196 = vld [vmem:[%s169 + $0x98] sm:$0xff]
      %v197 = vld [vmem:[%s169 + $0xa0] sm:$0xff]
      %v198 = vld [vmem:[%s169 + $0xa8] sm:$0xff]
      %v199 = vld [vmem:[%s169 + $0xb0] sm:$0xff]
      %v200 = vld [vmem:[%s169 + $0xb8] sm:$0xff]
      %v201 = vld [vmem:[%s169 + $0xc0] sm:$0xff]
      %v202 = vld [vmem:[%s169 + $0xc8] sm:$0xff]
      %v203 = vld [vmem:[%s169 + $0xd0] sm:$0xff]
      %v204 = vld [vmem:[%s169 + $0xd8] sm:$0xff]
      %v205 = vld [vmem:[%s169 + $0xe0] sm:$0xff]
      %v206 = vld [vmem:[%s169 + $0xe8] sm:$0xff]
      %v207 = vld [vmem:[%s169 + $0xf0] sm:$0xff]
      %v208 = vld [vmem:[%s169 + $0xf8] sm:$0xff]
      %v209 = vld [vmem:[%s169 + $0x100] sm:$0xff]
      %v210 = vld [vmem:[%s169 + $0x108] sm:$0xff]
      %v211 = vld [vmem:[%s169 + $0x110] sm:$0xff]
      %v212 = vld [vmem:[%s169 + $0x118] sm:$0xff]
      %v213 = vld [vmem:[%s169 + $0x120] sm:$0xff]
      %v214 = vld [vmem:[%s169 + $0x128] sm:$0xff]
      %v215 = vld [vmem:[%s169 + $0x130] sm:$0xff]
      %v216 = vld [vmem:[%s169 + $0x138] sm:$0xff]
      %v217 = vld [vmem:[%s169 + $0x140] sm:$0xff]
      %v218 = vld [vmem:[%s169 + $0x148] sm:$0xff]
      %v219 = vld [vmem:[%s169 + $0x150] sm:$0xff]
      %v220 = vld [vmem:[%s169 + $0x158] sm:$0xff]
      %v221 = vld [vmem:[%s169 + $0x160] sm:$0xff]
      %v222 = vld [vmem:[%s169 + $0x168] sm:$0xff]
      %v223 = vld [vmem:[%s169 + $0x170] sm:$0xff]
      %v224 = vld [vmem:[%s169 + $0x178] sm:$0xff]
      %v225 = vld [vmem:[%s169 + $0x180] sm:$0xff]
      %v226 = vld [vmem:[%s169 + $0x188] sm:$0xff]
      %v227 = vld [vmem:[%s169 + $0x190] sm:$0xff]
      %v228 = vld [vmem:[%s169 + $0x198] sm:$0xff]
      %v229 = vld [vmem:[%s169 + $0x1a0] sm:$0xff]
      %v230 = vld [vmem:[%s169 + $0x1a8] sm:$0xff]
      %v231 = vld [vmem:[%s169 + $0x1b0] sm:$0xff]
      %v232 = vld [vmem:[%s169 + $0x1b8] sm:$0xff]
      %v233 = vld [vmem:[%s169 + $0x1c0] sm:$0xff]
      %v234 = vld [vmem:[%s169 + $0x1c8] sm:$0xff]
      %v235 = vld [vmem:[%s169 + $0x1d0] sm:$0xff]
      %v236 = vld [vmem:[%s169 + $0x1d8] sm:$0xff]
      %v237 = vld [vmem:[%s169 + $0x1e0] sm:$0xff]
      %v238 = vld [vmem:[%s169 + $0x1e8] sm:$0xff]
      %v239 = vld [vmem:[%s169 + $0x1f0] sm:$0xff]
      %v240 = vld [vmem:[%s169 + $0x1f8] sm:$0xff]
      %v241 = vld [vmem:[%s169 + $0x200] sm:$0xff]
      %v242 = vld [vmem:[%s169 + $0x208] sm:$0xff]
      %v243 = vld [vmem:[%s169 + $0x210] sm:$0xff]
      %v244 = vld [vmem:[%s169 + $0x218] sm:$0xff]
      %v245 = vld [vmem:[%s169 + $0x220] sm:$0xff]
      %v246 = vld [vmem:[%s169 + $0x228] sm:$0xff]
      %v247 = vld [vmem:[%s169 + $0x230] sm:$0xff]
      %v248 = vld [vmem:[%s169 + $0x238] sm:$0xff]
      %v249 = vld [vmem:[%s169 + $0x240] sm:$0xff]
      %v250 = vld [vmem:[%s169 + $0x248] sm:$0xff]
      %v251 = vld [vmem:[%s169 + $0x250] sm:$0xff]
      %v252 = vld [vmem:[%s169 + $0x258] sm:$0xff]
      %v253 = vld [vmem:[%s169 + $0x260] sm:$0xff]
      %v254 = vld [vmem:[%s169 + $0x268] sm:$0xff]
      %v255 = vld [vmem:[%s169 + $0x270] sm:$0xff]
      %v256 = vld [vmem:[%s169 + $0x278] sm:$0xff]
      %v257 = vld [vmem:[%s169 + $0x280] sm:$0xff]
      %v258 = vld [vmem:[%s169 + $0x288] sm:$0xff]
      %v259 = vld [vmem:[%s169 + $0x290] sm:$0xff]
      %v260 = vld [vmem:[%s169 + $0x298] sm:$0xff]
      %v261 = vld [vmem:[%s169 + $0x2a0] sm:$0xff]
      %v262 = vld [vmem:[%s169 + $0x2a8] sm:$0xff]
      %v263 = vld [vmem:[%s169 + $0x2b0] sm:$0xff]
      %v264 = vld [vmem:[%s169 + $0x2b8] sm:$0xff]
      %v265 = vld [vmem:[%s169 + $0x2c0] sm:$0xff]
      %v266 = vld [vmem:[%s169 + $0x2c8] sm:$0xff]
      %v267 = vld [vmem:[%s169 + $0x2d0] sm:$0xff]
      %v268 = vld [vmem:[%s169 + $0x2d8] sm:$0xff]
      %v269 = vld [vmem:[%s169 + $0x2e0] sm:$0xff]
      %v270 = vld [vmem:[%s169 + $0x2e8] sm:$0xff]
      %v271 = vld [vmem:[%s169 + $0x2f0] sm:$0xff]
      %v272 = vld [vmem:[%s169 + $0x2f8] sm:$0xff]
      %v273 = vld [vmem:[%s169 + $0x300] sm:$0xff]
      %v274 = vld [vmem:[%s169 + $0x308] sm:$0xff]
      %v275 = vld [vmem:[%s169 + $0x310] sm:$0xff]
      %v276 = vld [vmem:[%s169 + $0x318] sm:$0xff]
      %v277 = vld [vmem:[%s169 + $0x320] sm:$0xff]
      %v278 = vld [vmem:[%s169 + $0x328] sm:$0xff]
      %v279 = vld [vmem:[%s169 + $0x330] sm:$0xff]
      %v280 = vld [vmem:[%s169 + $0x338] sm:$0xff]
      %v281 = vld [vmem:[%s169 + $0x340] sm:$0xff]
      %v282 = vld [vmem:[%s169 + $0x348] sm:$0xff]
      %v283 = vld [vmem:[%s169 + $0x350] sm:$0xff]
      %v284 = vld [vmem:[%s169 + $0x358] sm:$0xff]
      %v285 = vld [vmem:[%s169 + $0x360] sm:$0xff]
      %v286 = vld [vmem:[%s169 + $0x368] sm:$0xff]
      %v287 = vld [vmem:[%s169 + $0x370] sm:$0xff]
      %v288 = vld [vmem:[%s169 + $0x378] sm:$0xff]
      %v289 = vld [vmem:[%s169 + $0x380] sm:$0xff]
      %v290 = vld [vmem:[%s169 + $0x388] sm:$0xff]
      %v291 = vld [vmem:[%s169 + $0x390] sm:$0xff]
      %v292 = vld [vmem:[%s169 + $0x398] sm:$0xff]
      %v293 = vld [vmem:[%s169 + $0x3a0] sm:$0xff]
      %v294 = vld [vmem:[%s169 + $0x3a8] sm:$0xff]
      %v295 = vld [vmem:[%s169 + $0x3b0] sm:$0xff]
      %v296 = vld [vmem:[%s169 + $0x3b8] sm:$0xff]
      %v297 = vld [vmem:[%s169 + $0x3c0] sm:$0xff]
      %v298 = vld [vmem:[%s169 + $0x3c8] sm:$0xff]
      %v299 = vld [vmem:[%s169 + $0x3d0] sm:$0xff]
      %v300 = vld [vmem:[%s169 + $0x3d8] sm:$0xff]
      %v301 = vld [vmem:[%s169 + $0x3e0] sm:$0xff]
      %v302 = vld [vmem:[%s169 + $0x3e8] sm:$0xff]
      %v303 = vld [vmem:[%s169 + $0x3f0] sm:$0xff]
      %v304 = vld [vmem:[%s169 + $0x3f8] sm:$0xff]
      %v305 = vld [vmem:[%s169 + $0x400] sm:$0xff]
      %v306 = vld [vmem:[%s169 + $0x408] sm:$0xff]
      %v307 = vld [vmem:[%s169 + $0x410] sm:$0xff]
      %v308 = vld [vmem:[%s169 + $0x418] sm:$0xff]
      %v309 = vld [vmem:[%s169 + $0x420] sm:$0xff]
      %v310 = vld [vmem:[%s169 + $0x428] sm:$0xff]
      %v311 = vld [vmem:[%s169 + $0x430] sm:$0xff]
      %v312 = vld [vmem:[%s169 + $0x438] sm:$0xff]
      %v313 = vld [vmem:[%s169 + $0x440] sm:$0xff]
      %v314 = vld [vmem:[%s169 + $0x448] sm:$0xff]
      %v315 = vld [vmem:[%s169 + $0x450] sm:$0xff]
      %v316 = vld [vmem:[%s169 + $0x458] sm:$0xff]
      %v317 = vld [vmem:[%s169 + $0x460] sm:$0xff]
      %v318 = vld [vmem:[%s169 + $0x468] sm:$0xff]
      %v319 = vld [vmem:[%s169 + $0x470] sm:$0xff]
      %v320 = vld [vmem:[%s169 + $0x478] sm:$0xff]
      %v321 = vld [vmem:[%s169 + $0x480] sm:$0xff]
      %v322 = vld [vmem:[%s169 + $0x488] sm:$0xff]
      %v323 = vld [vmem:[%s169 + $0x490] sm:$0xff]
      %v324 = vld [vmem:[%s169 + $0x498] sm:$0xff]
      %v325 = vld [vmem:[%s169 + $0x4a0] sm:$0xff]
      %v326 = vld [vmem:[%s169 + $0x4a8] sm:$0xff]
      %v327 = vld [vmem:[%s169 + $0x4b0] sm:$0xff]
      %v328 = vld [vmem:[%s169 + $0x4b8] sm:$0xff]
      %v329 = vld [vmem:[%s169 + $0x4c0] sm:$0xff]
      %v330 = vld [vmem:[%s169 + $0x4c8] sm:$0xff]
      %v331 = vld [vmem:[%s169 + $0x4d0] sm:$0xff]
      %v332 = vld [vmem:[%s169 + $0x4d8] sm:$0xff]
      %v333 = vld [vmem:[%s169 + $0x4e0] sm:$0xff]
      %v334 = vld [vmem:[%s169 + $0x4e8] sm:$0xff]
      %v335 = vld [vmem:[%s169 + $0x4f0] sm:$0xff]
      %v336 = vld [vmem:[%s169 + $0x4f8] sm:$0xff]
      %v337 = vld [vmem:[%s169 + $0x500] sm:$0xff]
      %v338 = vld [vmem:[%s169 + $0x508] sm:$0xff]
      %v339 = vld [vmem:[%s169 + $0x510] sm:$0xff]
      %v340 = vld [vmem:[%s169 + $0x518] sm:$0xff]
      %v341 = vld [vmem:[%s169 + $0x520] sm:$0xff]
      %v342 = vld [vmem:[%s169 + $0x528] sm:$0xff]
      %v343 = vld [vmem:[%s169 + $0x530] sm:$0xff]
      %v344 = vld [vmem:[%s169 + $0x538] sm:$0xff]
      %v345 = vld [vmem:[%s169 + $0x540] sm:$0xff]
      %v346 = vld [vmem:[%s169 + $0x548] sm:$0xff]
      %v347 = vld [vmem:[%s169 + $0x550] sm:$0xff]
      %v348 = vld [vmem:[%s169 + $0x558] sm:$0xff]
      %v349 = vld [vmem:[%s169 + $0x560] sm:$0xff]
      %v350 = vld [vmem:[%s169 + $0x568] sm:$0xff]
      %v351 = vld [vmem:[%s169 + $0x570] sm:$0xff]
      %v352 = vld [vmem:[%s169 + $0x578] sm:$0xff]
      %v353 = vld [vmem:[%s169 + $0x580] sm:$0xff]
      %v354 = vld [vmem:[%s169 + $0x588] sm:$0xff]
      %v355 = vld [vmem:[%s169 + $0x590] sm:$0xff]
      %v356 = vld [vmem:[%s169 + $0x598] sm:$0xff]
      %v357 = vld [vmem:[%s169 + $0x5a0] sm:$0xff]
      %v358 = vld [vmem:[%s169 + $0x5a8] sm:$0xff]
      %v359 = vld [vmem:[%s169 + $0x5b0] sm:$0xff]
      %v360 = vld [vmem:[%s169 + $0x5b8] sm:$0xff]
      %v361 = vld [vmem:[%s169 + $0x5c0] sm:$0xff]
      %v362 = vld [vmem:[%s169 + $0x5c8] sm:$0xff]
      %v363 = vld [vmem:[%s169 + $0x5d0] sm:$0xff]
      %v364 = vld [vmem:[%s169 + $0x5d8] sm:$0xff]
      %v365 = vld [vmem:[%s169 + $0x5e0] sm:$0xff]
      %v366 = vld [vmem:[%s169 + $0x5e8] sm:$0xff]
      %v367 = vld [vmem:[%s169 + $0x5f0] sm:$0xff]
      %v368 = vld [vmem:[%s169 + $0x5f8] sm:$0xff]
      %v369 = vld [vmem:[%s169 + $0x600] sm:$0xff]
      %v370 = vld [vmem:[%s169 + $0x608] sm:$0xff]
      %v371 = vld [vmem:[%s169 + $0x610] sm:$0xff]
      %v372 = vld [vmem:[%s169 + $0x618] sm:$0xff]
      %v373 = vld [vmem:[%s169 + $0x620] sm:$0xff]
      %v374 = vld [vmem:[%s169 + $0x628] sm:$0xff]
      %v375 = vld [vmem:[%s169 + $0x630] sm:$0xff]
      %v376 = vld [vmem:[%s169 + $0x638] sm:$0xff]
      %v377 = vld [vmem:[%s169 + $0x640] sm:$0xff]
      %v378 = vld [vmem:[%s169 + $0x648] sm:$0xff]
      %v379 = vld [vmem:[%s169 + $0x650] sm:$0xff]
      %v380 = vld [vmem:[%s169 + $0x658] sm:$0xff]
      %v381 = vld [vmem:[%s169 + $0x660] sm:$0xff]
      %v382 = vld [vmem:[%s169 + $0x668] sm:$0xff]
      %v383 = vld [vmem:[%s169 + $0x670] sm:$0xff]
      %v384 = vld [vmem:[%s169 + $0x678] sm:$0xff]
      %v385 = vld [vmem:[%s169 + $0x680] sm:$0xff]
      %v386 = vld [vmem:[%s169 + $0x688] sm:$0xff]
      %v387 = vld [vmem:[%s169 + $0x690] sm:$0xff]
      %v388 = vld [vmem:[%s169 + $0x698] sm:$0xff]
      %v389 = vld [vmem:[%s169 + $0x6a0] sm:$0xff]
      %v390 = vld [vmem:[%s169 + $0x6a8] sm:$0xff]
      %v391 = vld [vmem:[%s169 + $0x6b0] sm:$0xff]
      %v392 = vld [vmem:[%s169 + $0x6b8] sm:$0xff]
      %v393 = vld [vmem:[%s169 + $0x6c0] sm:$0xff]
      %v394 = vld [vmem:[%s169 + $0x6c8] sm:$0xff]
      %v395 = vld [vmem:[%s169 + $0x6d0] sm:$0xff]
      %v396 = vld [vmem:[%s169 + $0x6d8] sm:$0xff]
      %v397 = vld [vmem:[%s169 + $0x6e0] sm:$0xff]
      %v398 = vld [vmem:[%s169 + $0x6e8] sm:$0xff]
      %v399 = vld [vmem:[%s169 + $0x6f0] sm:$0xff]
      %v400 = vld [vmem:[%s169 + $0x6f8] sm:$0xff]
      %v401 = vld [vmem:[%s169 + $0x700] sm:$0xff]
      %v402 = vld [vmem:[%s169 + $0x708] sm:$0xff]
      %v403 = vld [vmem:[%s169 + $0x710] sm:$0xff]
      %v404 = vld [vmem:[%s169 + $0x718] sm:$0xff]
      %v405 = vld [vmem:[%s169 + $0x720] sm:$0xff]
      %v406 = vld [vmem:[%s169 + $0x728] sm:$0xff]
      %v407 = vld [vmem:[%s169 + $0x730] sm:$0xff]
      %v408 = vld [vmem:[%s169 + $0x738] sm:$0xff]
      %v409 = vld [vmem:[%s169 + $0x740] sm:$0xff]
      %v410 = vld [vmem:[%s169 + $0x748] sm:$0xff]
      %v411 = vld [vmem:[%s169 + $0x750] sm:$0xff]
      %v412 = vld [vmem:[%s169 + $0x758] sm:$0xff]
      %v413 = vld [vmem:[%s169 + $0x760] sm:$0xff]
      %v414 = vld [vmem:[%s169 + $0x768] sm:$0xff]
      %v415 = vld [vmem:[%s169 + $0x770] sm:$0xff]
      %v416 = vld [vmem:[%s169 + $0x778] sm:$0xff]
      %v417 = vld [vmem:[%s169 + $0x780] sm:$0xff]
      %v418 = vld [vmem:[%s169 + $0x788] sm:$0xff]
      %v419 = vld [vmem:[%s169 + $0x790] sm:$0xff]
      %v420 = vld [vmem:[%s169 + $0x798] sm:$0xff]
      %v421 = vld [vmem:[%s169 + $0x7a0] sm:$0xff]
      %v422 = vld [vmem:[%s169 + $0x7a8] sm:$0xff]
      %v423 = vld [vmem:[%s169 + $0x7b0] sm:$0xff]
      %v424 = vld [vmem:[%s169 + $0x7b8] sm:$0xff]
      %v425 = vld [vmem:[%s169 + $0x7c0] sm:$0xff]
      %v426 = vld [vmem:[%s169 + $0x7c8] sm:$0xff]
      %v427 = vld [vmem:[%s169 + $0x7d0] sm:$0xff]
      %v428 = vld [vmem:[%s169 + $0x7d8] sm:$0xff]
      %v429 = vld [vmem:[%s169 + $0x7e0] sm:$0xff]
      %v430 = vld [vmem:[%s169 + $0x7e8] sm:$0xff]
      %v431 = vld [vmem:[%s169 + $0x7f0] sm:$0xff]
      %v432 = vld [vmem:[%s169 + $0x7f8] sm:$0xff]
      %v433 = vld [vmem:[%s169 + $0x800] sm:$0xff]
      %v434 = vld [vmem:[%s169 + $0x808] sm:$0xff]
      %v435 = vld [vmem:[%s169 + $0x810] sm:$0xff]
      %v436 = vld [vmem:[%s169 + $0x818] sm:$0xff]
      %v437 = vld [vmem:[%s169 + $0x820] sm:$0xff]
      %v438 = vld [vmem:[%s169 + $0x828] sm:$0xff]
      %v439 = vld [vmem:[%s169 + $0x830] sm:$0xff]
      %v440 = vld [vmem:[%s169 + $0x838] sm:$0xff]
      %v441 = vld [vmem:[%s169 + $0x840] sm:$0xff]
      %v442 = vld [vmem:[%s169 + $0x848] sm:$0xff]
      %v443 = vld [vmem:[%s169 + $0x850] sm:$0xff]
      %v444 = vld [vmem:[%s169 + $0x858] sm:$0xff]
      %v445 = vld [vmem:[%s169 + $0x860] sm:$0xff]
      %v446 = vld [vmem:[%s169 + $0x868] sm:$0xff]
      %v447 = vld [vmem:[%s169 + $0x870] sm:$0xff]
      %v448 = vld [vmem:[%s169 + $0x878] sm:$0xff]
      %v449 = vld [vmem:[%s169 + $0x880] sm:$0xff]
      %v450 = vld [vmem:[%s169 + $0x888] sm:$0xff]
      %v451 = vld [vmem:[%s169 + $0x890] sm:$0xff]
      %v452 = vld [vmem:[%s169 + $0x898] sm:$0xff]
      %v453 = vld [vmem:[%s169 + $0x8a0] sm:$0xff]
      %v454 = vld [vmem:[%s169 + $0x8a8] sm:$0xff]
      %v455 = vld [vmem:[%s169 + $0x8b0] sm:$0xff]
      %v456 = vld [vmem:[%s169 + $0x8b8] sm:$0xff]
      %v457 = vld [vmem:[%s169 + $0x8c0] sm:$0xff]
      %v458 = vld [vmem:[%s169 + $0x8c8] sm:$0xff]
      %v459 = vld [vmem:[%s169 + $0x8d0] sm:$0xff]
      %v460 = vld [vmem:[%s169 + $0x8d8] sm:$0xff]
      %v461 = vld [vmem:[%s169 + $0x8e0] sm:$0xff]
      %v462 = vld [vmem:[%s169 + $0x8e8] sm:$0xff]
      %v463 = vld [vmem:[%s169 + $0x8f0] sm:$0xff]
      %v464 = vld [vmem:[%s169 + $0x8f8] sm:$0xff]
      %v465 = vld [vmem:[%s169 + $0x900] sm:$0xff]
      %v466 = vld [vmem:[%s169 + $0x908] sm:$0xff]
      %v467 = vld [vmem:[%s169 + $0x910] sm:$0xff]
      %v468 = vld [vmem:[%s169 + $0x918] sm:$0xff]
      %v469 = vld [vmem:[%s169 + $0x920] sm:$0xff]
      %v470 = vld [vmem:[%s169 + $0x928] sm:$0xff]
      %v471 = vld [vmem:[%s169 + $0x930] sm:$0xff]
      %v472 = vld [vmem:[%s169 + $0x938] sm:$0xff]
      %v473 = vld [vmem:[%s169 + $0x940] sm:$0xff]
      %v474 = vld [vmem:[%s169 + $0x948] sm:$0xff]
      %v475 = vld [vmem:[%s169 + $0x950] sm:$0xff]
      %v476 = vld [vmem:[%s169 + $0x958] sm:$0xff]
      %v477 = vld [vmem:[%s169 + $0x960] sm:$0xff]
      %v478 = vld [vmem:[%s169 + $0x968] sm:$0xff]
      %v479 = vld [vmem:[%s169 + $0x970] sm:$0xff]
      %v480 = vld [vmem:[%s169 + $0x978] sm:$0xff]
      %v481 = vld [vmem:[%s169 + $0x980] sm:$0xff]
      %v482 = vld [vmem:[%s169 + $0x988] sm:$0xff]
      %v483 = vld [vmem:[%s169 + $0x990] sm:$0xff]
      %v484 = vld [vmem:[%s169 + $0x998] sm:$0xff]
      %v485 = vld [vmem:[%s169 + $0x9a0] sm:$0xff]
      %v486 = vld [vmem:[%s169 + $0x9a8] sm:$0xff]
      %v487 = vld [vmem:[%s169 + $0x9b0] sm:$0xff]
      %v488 = vld [vmem:[%s169 + $0x9b8] sm:$0xff]
      %v489 = vld [vmem:[%s169 + $0x9c0] sm:$0xff]
      %v490 = vld [vmem:[%s169 + $0x9c8] sm:$0xff]
      %v491 = vld [vmem:[%s169 + $0x9d0] sm:$0xff]
      %v492 = vld [vmem:[%s169 + $0x9d8] sm:$0xff]
      %v493 = vld [vmem:[%s169 + $0x9e0] sm:$0xff]
      %v494 = vld [vmem:[%s169 + $0x9e8] sm:$0xff]
      %v495 = vld [vmem:[%s169 + $0x9f0] sm:$0xff]
      %v496 = vld [vmem:[%s169 + $0x9f8] sm:$0xff]
      %v497 = vld [vmem:[%s169 + $0xa00] sm:$0xff]
      %v498 = vld [vmem:[%s169 + $0xa08] sm:$0xff]
      %v499 = vld [vmem:[%s169 + $0xa10] sm:$0xff]
      %v500 = vld [vmem:[%s169 + $0xa18] sm:$0xff]
      %v501 = vld [vmem:[%s169 + $0xa20] sm:$0xff]
      %v502 = vld [vmem:[%s169 + $0xa28] sm:$0xff]
      %v503 = vld [vmem:[%s169 + $0xa30] sm:$0xff]
      %v504 = vld [vmem:[%s169 + $0xa38] sm:$0xff]
      %v505 = vld [vmem:[%s169 + $0xa40] sm:$0xff]
      %v506 = vld [vmem:[%s169 + $0xa48] sm:$0xff]
      %v507 = vld [vmem:[%s169 + $0xa50] sm:$0xff]
      %v508 = vld [vmem:[%s169 + $0xa58] sm:$0xff]
      %v509 = vld [vmem:[%s169 + $0xa60] sm:$0xff]
      %v510 = vld [vmem:[%s169 + $0xa68] sm:$0xff]
      %v511 = vld [vmem:[%s169 + $0xa70] sm:$0xff]
      %v512 = vld [vmem:[%s169 + $0xa78] sm:$0xff]
      %v513 = vld [vmem:[%s169 + $0xa80] sm:$0xff]
      %v514 = vld [vmem:[%s169 + $0xa88] sm:$0xff]
      %v515 = vld [vmem:[%s169 + $0xa90] sm:$0xff]
      %v516 = vld [vmem:[%s169 + $0xa98] sm:$0xff]
      %v517 = vld [vmem:[%s169 + $0xaa0] sm:$0xff]
      %v518 = vld [vmem:[%s169 + $0xaa8] sm:$0xff]
      %v519 = vld [vmem:[%s169 + $0xab0] sm:$0xff]
      %v520 = vld [vmem:[%s169 + $0xab8] sm:$0xff]
      %v521 = vld [vmem:[%s169 + $0xac0] sm:$0xff]
      %v522 = vld [vmem:[%s169 + $0xac8] sm:$0xff]
      %v523 = vld [vmem:[%s169 + $0xad0] sm:$0xff]
      %v524 = vld [vmem:[%s169 + $0xad8] sm:$0xff]
      %v525 = vld [vmem:[%s169 + $0xae0] sm:$0xff]
      %v526 = vld [vmem:[%s169 + $0xae8] sm:$0xff]
      %v527 = vld [vmem:[%s169 + $0xaf0] sm:$0xff]
      %v528 = vld [vmem:[%s169 + $0xaf8] sm:$0xff]
      %v529 = vld [vmem:[%s169 + $0xb00] sm:$0xff]
      %v530 = vld [vmem:[%s169 + $0xb08] sm:$0xff]
      %v531 = vld [vmem:[%s169 + $0xb10] sm:$0xff]
      %v532 = vld [vmem:[%s169 + $0xb18] sm:$0xff]
      %v533 = vld [vmem:[%s169 + $0xb20] sm:$0xff]
      %v534 = vld [vmem:[%s169 + $0xb28] sm:$0xff]
      %v535 = vld [vmem:[%s169 + $0xb30] sm:$0xff]
      %v536 = vld [vmem:[%s169 + $0xb38] sm:$0xff]
      %v537 = vld [vmem:[%s169 + $0xb40] sm:$0xff]
      %v538 = vld [vmem:[%s169 + $0xb48] sm:$0xff]
      %v539 = vld [vmem:[%s169 + $0xb50] sm:$0xff]
      %v540 = vld [vmem:[%s169 + $0xb58] sm:$0xff]
      %v541 = vld [vmem:[%s169 + $0xb60] sm:$0xff]
      %v542 = vld [vmem:[%s169 + $0xb68] sm:$0xff]
      %v543 = vld [vmem:[%s169 + $0xb70] sm:$0xff]
      %v544 = vld [vmem:[%s169 + $0xb78] sm:$0xff]
      %v545 = vld [vmem:[%s169 + $0xb80] sm:$0xff]
      %v546 = vld [vmem:[%s169 + $0xb88] sm:$0xff]
      %v547 = vld [vmem:[%s169 + $0xb90] sm:$0xff]
      %v548 = vld [vmem:[%s169 + $0xb98] sm:$0xff]
      %v549 = vld [vmem:[%s169 + $0xba0] sm:$0xff]
      %v550 = vld [vmem:[%s169 + $0xba8] sm:$0xff]
      %v551 = vld [vmem:[%s169 + $0xbb0] sm:$0xff]
      %v552 = vld [vmem:[%s169 + $0xbb8] sm:$0xff]
      %v553 = vld [vmem:[%s169 + $0xbc0] sm:$0xff]
      %v554 = vld [vmem:[%s169 + $0xbc8] sm:$0xff]
      %v555 = vld [vmem:[%s169 + $0xbd0] sm:$0xff]
      %v556 = vld [vmem:[%s169 + $0xbd8] sm:$0xff]
      %v557 = vld [vmem:[%s169 + $0xbe0] sm:$0xff]
      %v558 = vld [vmem:[%s169 + $0xbe8] sm:$0xff]
      %v559 = vld [vmem:[%s169 + $0xbf0] sm:$0xff]
      %v560 = vld [vmem:[%s169 + $0xbf8] sm:$0xff]
      %v561 = vld [vmem:[%s169 + $0xc00] sm:$0xff]
      %v562 = vld [vmem:[%s169 + $0xc08] sm:$0xff]
      %v563 = vld [vmem:[%s169 + $0xc10] sm:$0xff]
      %v564 = vld [vmem:[%s169 + $0xc18] sm:$0xff]
      %v565 = vld [vmem:[%s169 + $0xc20] sm:$0xff]
      %v566 = vld [vmem:[%s169 + $0xc28] sm:$0xff]
      %v567 = vld [vmem:[%s169 + $0xc30] sm:$0xff]
      %v568 = vld [vmem:[%s169 + $0xc38] sm:$0xff]
      %v569 = vld [vmem:[%s169 + $0xc40] sm:$0xff]
      %v570 = vld [vmem:[%s169 + $0xc48] sm:$0xff]
      %v571 = vld [vmem:[%s169 + $0xc50] sm:$0xff]
      %v572 = vld [vmem:[%s169 + $0xc58] sm:$0xff]
      %v573 = vld [vmem:[%s1] sm:$0xff]
      %v574 = vld [vmem:[%s1 + $0x8] sm:$0xff]
      %v575 = vld [vmem:[%s1 + $0x10] sm:$0xff]
      %v576 = vld [vmem:[%s1 + $0x18] sm:$0xff]
      %v577 = vld [vmem:[%s1 + $0x20] sm:$0xff]
      %v578 = vld [vmem:[%s1 + $0x28] sm:$0xff]
      %v579 = vld [vmem:[%s1 + $0x30] sm:$0xff]
      %v580 = vld [vmem:[%s1 + $0x38] sm:$0xff]
      %v581 = vld [vmem:[%s1 + $0x40] sm:$0xff]
      %v582 = vld [vmem:[%s1 + $0x48] sm:$0xff]
      %v583 = vld [vmem:[%s1 + $0x50] sm:$0xff]
      %v584 = vld [vmem:[%s1 + $0x58] sm:$0xff]
      %v585 = vld [vmem:[%s1 + $0x60] sm:$0xff]
      %v586 = vld [vmem:[%s1 + $0x68] sm:$0xff]
      %v587 = vld [vmem:[%s1 + $0x70] sm:$0xff]
      %v588 = vld [vmem:[%s1 + $0x78] sm:$0xff]
      %v589 = vld [vmem:[%s1 + $0x80] sm:$0xff]
      %v590 = vld [vmem:[%s1 + $0x88] sm:$0xff]
      %v591 = vld [vmem:[%s1 + $0x90] sm:$0xff]
      %v592 = vld [vmem:[%s1 + $0x98] sm:$0xff]
      %v593 = vld [vmem:[%s1 + $0xa0] sm:$0xff]
      %v594 = vld [vmem:[%s1 + $0xa8] sm:$0xff]
      %v595 = vld [vmem:[%s1 + $0xb0] sm:$0xff]
      %v596 = vld [vmem:[%s1 + $0xb8] sm:$0xff]
      %v597 = vld [vmem:[%s2] sm:$0x1]
      %v599 = vlaneseq
      %v600 = vshrl.u32 %v599, 7
      %v601 = vsub.s32 0, %v600
      %v602 = vrot.slane %v597, %v601
      %vm604 = vcmask 523264
      %v606 = vsel %vm604, %v178, 0
      %v609 = vsel %vm604, %v180, 0
      %v612 = vsel %vm604, %v182, 0
      %v615 = vsel %vm604, %v184, 0
      %v618 = vsel %vm604, %v186, 0
      %v621 = vsel %vm604, %v188, 0
      %v624 = vsel %vm604, %v190, 0
      %v627 = vsel %vm604, %v192, 0
      %v630 = vsel %vm604, %v194, 0
      %v633 = vsel %vm604, %v196, 0
      %v636 = vsel %vm604, %v198, 0
      %v639 = vsel %vm604, %v200, 0
      %v642 = vsel %vm604, %v202, 0
      %v645 = vsel %vm604, %v204, 0
      %v648 = vsel %vm604, %v206, 0
      %v651 = vsel %vm604, %v208, 0
      %v654 = vsel %vm604, %v210, 0
      %v657 = vsel %vm604, %v212, 0
      %v660 = vsel %vm604, %v214, 0
      %v663 = vsel %vm604, %v216, 0
      %v666 = vsel %vm604, %v218, 0
      %v669 = vsel %vm604, %v220, 0
      %v672 = vsel %vm604, %v222, 0
      %v675 = vsel %vm604, %v224, 0
      %v678 = vsel %vm604, %v226, 0
      %v681 = vsel %vm604, %v228, 0
      %v684 = vsel %vm604, %v230, 0
      %v687 = vsel %vm604, %v232, 0
      %v690 = vsel %vm604, %v234, 0
      %v693 = vsel %vm604, %v236, 0
      %v696 = vsel %vm604, %v238, 0
      %v699 = vsel %vm604, %v240, 0
      %v702 = vsel %vm604, %v242, 0
      %v705 = vsel %vm604, %v244, 0
      %v708 = vsel %vm604, %v246, 0
      %v711 = vsel %vm604, %v248, 0
      %v714 = vsel %vm604, %v250, 0
      %v717 = vsel %vm604, %v252, 0
      %v720 = vsel %vm604, %v254, 0
      %v723 = vsel %vm604, %v256, 0
      %v726 = vsel %vm604, %v258, 0
      %v729 = vsel %vm604, %v260, 0
      %v732 = vsel %vm604, %v262, 0
      %v735 = vsel %vm604, %v264, 0
      %v738 = vsel %vm604, %v266, 0
      %v741 = vsel %vm604, %v268, 0
      %v744 = vsel %vm604, %v270, 0
      %v747 = vsel %vm604, %v272, 0
      %v750 = vsel %vm604, %v274, 0
      %v753 = vsel %vm604, %v276, 0
      %v756 = vsel %vm604, %v278, 0
      %v759 = vsel %vm604, %v280, 0
      %v762 = vsel %vm604, %v282, 0
      %v765 = vsel %vm604, %v284, 0
      %v768 = vsel %vm604, %v286, 0
      %v771 = vsel %vm604, %v288, 0
      %v774 = vsel %vm604, %v290, 0
      %v777 = vsel %vm604, %v292, 0
      %v780 = vsel %vm604, %v294, 0
      %v783 = vsel %vm604, %v296, 0
      %v786 = vsel %vm604, %v298, 0
      %v789 = vsel %vm604, %v300, 0
      %v792 = vsel %vm604, %v302, 0
      %v795 = vsel %vm604, %v304, 0
      %v798 = vsel %vm604, %v306, 0
      %v801 = vsel %vm604, %v308, 0
      %v804 = vsel %vm604, %v310, 0
      %v807 = vsel %vm604, %v312, 0
      %v810 = vsel %vm604, %v314, 0
      %v813 = vsel %vm604, %v316, 0
      %v816 = vsel %vm604, %v318, 0
      %v819 = vsel %vm604, %v320, 0
      %v822 = vsel %vm604, %v322, 0
      %v825 = vsel %vm604, %v324, 0
      %v828 = vsel %vm604, %v326, 0
      %v831 = vsel %vm604, %v328, 0
      %v834 = vsel %vm604, %v330, 0
      %v837 = vsel %vm604, %v332, 0
      %v840 = vsel %vm604, %v334, 0
      %v843 = vsel %vm604, %v336, 0
      %v846 = vsel %vm604, %v338, 0
      %v849 = vsel %vm604, %v340, 0
      %v852 = vsel %vm604, %v342, 0
      %v855 = vsel %vm604, %v344, 0
      %v858 = vsel %vm604, %v346, 0
      %v861 = vsel %vm604, %v348, 0
      %v864 = vsel %vm604, %v350, 0
      %v867 = vsel %vm604, %v352, 0
      %v870 = vsel %vm604, %v354, 0
      %v873 = vsel %vm604, %v356, 0
      %v876 = vsel %vm604, %v358, 0
      %v879 = vsel %vm604, %v360, 0
      %v882 = vsel %vm604, %v362, 0
      %v885 = vsel %vm604, %v364, 0
      %v888 = vsel %vm604, %v366, 0
      %v891 = vsel %vm604, %v368, 0
      %v894 = vsel %vm604, %v370, 0
      %v897 = vsel %vm604, %v372, 0
      %v900 = vsel %vm604, %v374, 0
      %v903 = vsel %vm604, %v376, 0
      %v906 = vsel %vm604, %v378, 0
      %v909 = vsel %vm604, %v380, 0
      %v912 = vsel %vm604, %v382, 0
      %v915 = vsel %vm604, %v384, 0
      %v918 = vsel %vm604, %v386, 0
      %v921 = vsel %vm604, %v388, 0
      %v924 = vsel %vm604, %v390, 0
      %v927 = vsel %vm604, %v392, 0
      %v930 = vsel %vm604, %v394, 0
      %v933 = vsel %vm604, %v396, 0
      %v936 = vsel %vm604, %v398, 0
      %v939 = vsel %vm604, %v400, 0
      %v942 = vsel %vm604, %v402, 0
      %v945 = vsel %vm604, %v404, 0
      %v948 = vsel %vm604, %v406, 0
      %v951 = vsel %vm604, %v408, 0
      %v954 = vsel %vm604, %v410, 0
      %v957 = vsel %vm604, %v412, 0
      %v960 = vsel %vm604, %v414, 0
      %v963 = vsel %vm604, %v416, 0
      %v966 = vsel %vm604, %v418, 0
      %v969 = vsel %vm604, %v420, 0
      %v972 = vsel %vm604, %v422, 0
      %v975 = vsel %vm604, %v424, 0
      %v978 = vsel %vm604, %v426, 0
      %v981 = vsel %vm604, %v428, 0
      %v984 = vsel %vm604, %v430, 0
      %v987 = vsel %vm604, %v432, 0
      %v990 = vsel %vm604, %v434, 0
      %v993 = vsel %vm604, %v436, 0
      %v996 = vsel %vm604, %v438, 0
      %v999 = vsel %vm604, %v440, 0
      %v1002 = vsel %vm604, %v442, 0
      %v1005 = vsel %vm604, %v444, 0
      %v1008 = vsel %vm604, %v446, 0
      %v1011 = vsel %vm604, %v448, 0
      %v1014 = vsel %vm604, %v450, 0
      %v1017 = vsel %vm604, %v452, 0
      %v1020 = vsel %vm604, %v454, 0
      %v1023 = vsel %vm604, %v456, 0
      %v1026 = vsel %vm604, %v458, 0
      %v1029 = vsel %vm604, %v460, 0
      %v1032 = vsel %vm604, %v462, 0
      %v1035 = vsel %vm604, %v464, 0
      %v1038 = vsel %vm604, %v466, 0
      %v1041 = vsel %vm604, %v468, 0
      %v1044 = vsel %vm604, %v470, 0
      %v1047 = vsel %vm604, %v472, 0
      %v1050 = vsel %vm604, %v474, 0
      %v1053 = vsel %vm604, %v476, 0
      %v1056 = vsel %vm604, %v478, 0
      %v1059 = vsel %vm604, %v480, 0
      %v1062 = vsel %vm604, %v482, 0
      %v1065 = vsel %vm604, %v484, 0
      %v1068 = vsel %vm604, %v486, 0
      %v1071 = vsel %vm604, %v488, 0
      %v1074 = vsel %vm604, %v490, 0
      %v1077 = vsel %vm604, %v492, 0
      %v1080 = vsel %vm604, %v494, 0
      %v1083 = vsel %vm604, %v496, 0
      %v1086 = vsel %vm604, %v498, 0
      %v1089 = vsel %vm604, %v500, 0
      %v1092 = vsel %vm604, %v502, 0
      %v1095 = vsel %vm604, %v504, 0
      %v1098 = vsel %vm604, %v506, 0
      %v1101 = vsel %vm604, %v508, 0
      %v1104 = vsel %vm604, %v510, 0
      %v1107 = vsel %vm604, %v512, 0
      %v1110 = vsel %vm604, %v514, 0
      %v1113 = vsel %vm604, %v516, 0
      %v1116 = vsel %vm604, %v518, 0
      %v1119 = vsel %vm604, %v520, 0
      %v1122 = vsel %vm604, %v522, 0
      %v1125 = vsel %vm604, %v524, 0
      %v1128 = vsel %vm604, %v526, 0
      %v1131 = vsel %vm604, %v528, 0
      %v1134 = vsel %vm604, %v530, 0
      %v1137 = vsel %vm604, %v532, 0
      %v1140 = vsel %vm604, %v534, 0
      %v1143 = vsel %vm604, %v536, 0
      %v1146 = vsel %vm604, %v538, 0
      %v1149 = vsel %vm604, %v540, 0
      %v1152 = vsel %vm604, %v542, 0
      %v1155 = vsel %vm604, %v544, 0
      %v1158 = vsel %vm604, %v546, 0
      %v1161 = vsel %vm604, %v548, 0
      %v1164 = vsel %vm604, %v550, 0
      %v1167 = vsel %vm604, %v552, 0
      %v1170 = vsel %vm604, %v554, 0
      %v1173 = vsel %vm604, %v556, 0
      %v1176 = vsel %vm604, %v558, 0
      %v1179 = vsel %vm604, %v560, 0
      %v1182 = vsel %vm604, %v562, 0
      %v1185 = vsel %vm604, %v564, 0
      %v1188 = vsel %vm604, %v566, 0
      %v1191 = vsel %vm604, %v568, 0
      %v1194 = vsel %vm604, %v570, 0
      %v1197 = vsel %vm604, %v572, 0
      %1199 = vmatprep.subr.mxu0 0.0
      %1200 = vmatpush1.msra.mxu0 %v588
      %1201 = vmatprep.subr.mxu0 0.0
      %1202 = vmatpush1.msra.mxu0 %v587
      %1203 = vmatprep.subr.mxu0 0.0
      %1204 = vmatpush1.msra.mxu0 %v586
      %1205 = vmatprep.subr.mxu0 0.0
      %1206 = vmatpush1.msra.mxu0 %v585
      %1207 = vmatprep.subr.mxu0 0.0
      %1208 = vmatpush1.msra.mxu0 %v584
      %1209 = vmatprep.subr.mxu0 0.0
      %1210 = vmatpush1.msra.mxu0 %v583
      %1211 = vmatprep.subr.mxu0 0.0
      %1212 = vmatpush1.msra.mxu0 %v582
      %1213 = vmatprep.subr.mxu0 0.0
      %1214 = vmatpush1.msra.mxu0 %v581
      %1215 = vmatprep.subr.mxu0 0.0
      %1216 = vmatpush1.msra.mxu0 %v580
      %1217 = vmatprep.subr.mxu0 0.0
      %1218 = vmatpush1.msra.mxu0 %v579
      %1219 = vmatprep.subr.mxu0 0.0
      %1220 = vmatpush1.msra.mxu0 %v578
      %1221 = vmatprep.subr.mxu0 0.0
      %1222 = vmatpush1.msra.mxu0 %v577
      %1223 = vmatprep.subr.mxu0 0.0
      %1224 = vmatpush1.msra.mxu0 %v576
      %1225 = vmatprep.subr.mxu0 0.0
      %1226 = vmatpush1.msra.mxu0 %v575
      %1227 = vmatprep.subr.mxu0 0.0
      %1228 = vmatpush1.msra.mxu0 %v574
      %1229 = vmatprep.subr.mxu0 0.0
      %1230 = vmatpush1.msra.mxu0 %v573
      %1231 = vmatprep.subr.mxu0 0.0
      %1232 = vmatpush2.msra.mxu0 0.0
      %1233 = vmatprep.subr.mxu0 0.0
      %1234 = vmatpush2.msra.mxu0 0.0
      %1235 = vmatprep.subr.mxu0 0.0
      %1236 = vmatpush2.msra.mxu0 0.0
      %1237 = vmatprep.subr.mxu0 0.0
      %1238 = vmatpush2.msra.mxu0 0.0
      %1239 = vmatprep.subr.mxu0 0.0
      %1240 = vmatpush2.msra.mxu0 0.0
      %1241 = vmatprep.subr.mxu0 0.0
      %1242 = vmatpush2.msra.mxu0 0.0
      %1243 = vmatprep.subr.mxu0 0.0
      %1244 = vmatpush2.msra.mxu0 0.0
      %1245 = vmatprep.subr.mxu0 0.0
      %1246 = vmatpush2.msra.mxu0 0.0
      %1247 = vmatprep.subr.mxu0 0.0
      %1248 = vmatpush2.msra.mxu0 %v596
      %1249 = vmatprep.subr.mxu0 0.0
      %1250 = vmatpush2.msra.mxu0 %v595
      %1251 = vmatprep.subr.mxu0 0.0
      %1252 = vmatpush2.msra.mxu0 %v594
      %1253 = vmatprep.subr.mxu0 0.0
      %1254 = vmatpush2.msra.mxu0 %v593
      %1255 = vmatprep.subr.mxu0 0.0
      %1256 = vmatpush2.msra.mxu0 %v592
      %1257 = vmatprep.subr.mxu0 0.0
      %1258 = vmatpush2.msra.mxu0 %v591
      %1259 = vmatprep.subr.mxu0 0.0
      %1260 = vmatpush2.msra.mxu0 %v590
      %1261 = vmatprep.subr.mxu0 0.0
      %1262 = vmatpush2.msra.mxu0 %v589
      %1263 = vmatprep.mubr.f32.mxu0 %v606
      %1264 = vmatmul.mubr.f32.gmra.mxu0 %v177
      %v1265 = vpop.f32.mrf.mxu0
      %v1266 = vadd.f32 %v602, %v1265
      %v1267 = vpop.f32.mrf.mxu0
      %1268 = vmatprep.mubr.f32.mxu0 %v609
      %1269 = vmatmul.mubr.f32.gmra.mxu0 %v179
      %v1270 = vpop.f32.mrf.mxu0
      %v1271 = vadd.f32 %v602, %v1270
      %v1272 = vpop.f32.mrf.mxu0
      %1273 = vmatprep.mubr.f32.mxu0 %v612
      %1274 = vmatmul.mubr.f32.gmra.mxu0 %v181
      %v1275 = vpop.f32.mrf.mxu0
      %v1276 = vadd.f32 %v602, %v1275
      %v1277 = vpop.f32.mrf.mxu0
      %1278 = vmatprep.mubr.f32.mxu0 %v615
      %1279 = vmatmul.mubr.f32.gmra.mxu0 %v183
      %v1280 = vpop.f32.mrf.mxu0
      %v1281 = vadd.f32 %v602, %v1280
      %v1282 = vpop.f32.mrf.mxu0
      %1283 = vmatprep.mubr.f32.mxu0 %v618
      %1284 = vmatmul.mubr.f32.gmra.mxu0 %v185
      %v1285 = vpop.f32.mrf.mxu0
      %v1286 = vadd.f32 %v602, %v1285
      %v1287 = vpop.f32.mrf.mxu0
      %1288 = vmatprep.mubr.f32.mxu0 %v621
      %1289 = vmatmul.mubr.f32.gmra.mxu0 %v187
      %v1290 = vpop.f32.mrf.mxu0
      %v1291 = vadd.f32 %v602, %v1290
      %v1292 = vpop.f32.mrf.mxu0
      %1293 = vmatprep.mubr.f32.mxu0 %v624
      %1294 = vmatmul.mubr.f32.gmra.mxu0 %v189
      %v1295 = vpop.f32.mrf.mxu0
      %v1296 = vadd.f32 %v602, %v1295
      %v1297 = vpop.f32.mrf.mxu0
      %1298 = vmatprep.mubr.f32.mxu0 %v627
      %1299 = vmatmul.mubr.f32.gmra.mxu0 %v191
      %v1300 = vpop.f32.mrf.mxu0
      %v1301 = vadd.f32 %v602, %v1300
      %v1302 = vpop.f32.mrf.mxu0
      %1303 = vmatprep.mubr.f32.mxu0 %v630
      %1304 = vmatmul.mubr.f32.gmra.mxu0 %v193
      %v1305 = vpop.f32.mrf.mxu0
      %v1306 = vadd.f32 %v602, %v1305
      %v1307 = vpop.f32.mrf.mxu0
      %1308 = vmatprep.mubr.f32.mxu0 %v633
      %1309 = vmatmul.mubr.f32.gmra.mxu0 %v195
      %v1310 = vpop.f32.mrf.mxu0
      %v1311 = vadd.f32 %v602, %v1310
      %v1312 = vpop.f32.mrf.mxu0
      %1313 = vmatprep.mubr.f32.mxu0 %v636
      %1314 = vmatmul.mubr.f32.gmra.mxu0 %v197
      %v1315 = vpop.f32.mrf.mxu0
      %v1316 = vadd.f32 %v602, %v1315
      %v1317 = vpop.f32.mrf.mxu0
      %1318 = vmatprep.mubr.f32.mxu0 %v639
      %1319 = vmatmul.mubr.f32.gmra.mxu0 %v199
      %v1320 = vpop.f32.mrf.mxu0
      %v1321 = vadd.f32 %v602, %v1320
      %v1322 = vpop.f32.mrf.mxu0
      %1323 = vmatprep.mubr.f32.mxu0 %v642
      %1324 = vmatmul.mubr.f32.gmra.mxu0 %v201
      %v1325 = vpop.f32.mrf.mxu0
      %v1326 = vadd.f32 %v602, %v1325
      %v1327 = vpop.f32.mrf.mxu0
      %1328 = vmatprep.mubr.f32.mxu0 %v645
      %1329 = vmatmul.mubr.f32.gmra.mxu0 %v203
      %v1330 = vpop.f32.mrf.mxu0
      %v1331 = vadd.f32 %v602, %v1330
      %v1332 = vpop.f32.mrf.mxu0
      %1333 = vmatprep.mubr.f32.mxu0 %v648
      %1334 = vmatmul.mubr.f32.gmra.mxu0 %v205
      %v1335 = vpop.f32.mrf.mxu0
      %v1336 = vadd.f32 %v602, %v1335
      %v1337 = vpop.f32.mrf.mxu0
      %1338 = vmatprep.mubr.f32.mxu0 %v651
      %1339 = vmatmul.mubr.f32.gmra.mxu0 %v207
      %v1340 = vpop.f32.mrf.mxu0
      %v1341 = vadd.f32 %v602, %v1340
      %v1342 = vpop.f32.mrf.mxu0
      %1343 = vmatprep.mubr.f32.mxu0 %v654
      %1344 = vmatmul.mubr.f32.gmra.mxu0 %v209
      %v1345 = vpop.f32.mrf.mxu0
      %v1346 = vadd.f32 %v602, %v1345
      %v1347 = vpop.f32.mrf.mxu0
      %1348 = vmatprep.mubr.f32.mxu0 %v657
      %1349 = vmatmul.mubr.f32.gmra.mxu0 %v211
      %v1350 = vpop.f32.mrf.mxu0
      %v1351 = vadd.f32 %v602, %v1350
      %v1352 = vpop.f32.mrf.mxu0
      %1353 = vmatprep.mubr.f32.mxu0 %v660
      %1354 = vmatmul.mubr.f32.gmra.mxu0 %v213
      %v1355 = vpop.f32.mrf.mxu0
      %v1356 = vadd.f32 %v602, %v1355
      %v1357 = vpop.f32.mrf.mxu0
      %1358 = vmatprep.mubr.f32.mxu0 %v663
      %1359 = vmatmul.mubr.f32.gmra.mxu0 %v215
      %v1360 = vpop.f32.mrf.mxu0
      %v1361 = vadd.f32 %v602, %v1360
      %v1362 = vpop.f32.mrf.mxu0
      %1363 = vmatprep.mubr.f32.mxu0 %v666
      %1364 = vmatmul.mubr.f32.gmra.mxu0 %v217
      %v1365 = vpop.f32.mrf.mxu0
      %v1366 = vadd.f32 %v602, %v1365
      %v1367 = vpop.f32.mrf.mxu0
      %1368 = vmatprep.mubr.f32.mxu0 %v669
      %1369 = vmatmul.mubr.f32.gmra.mxu0 %v219
      %v1370 = vpop.f32.mrf.mxu0
      %v1371 = vadd.f32 %v602, %v1370
      %v1372 = vpop.f32.mrf.mxu0
      %1373 = vmatprep.mubr.f32.mxu0 %v672
      %1374 = vmatmul.mubr.f32.gmra.mxu0 %v221
      %v1375 = vpop.f32.mrf.mxu0
      %v1376 = vadd.f32 %v602, %v1375
      %v1377 = vpop.f32.mrf.mxu0
      %1378 = vmatprep.mubr.f32.mxu0 %v675
      %1379 = vmatmul.mubr.f32.gmra.mxu0 %v223
      %v1380 = vpop.f32.mrf.mxu0
      %v1381 = vadd.f32 %v602, %v1380
      %v1382 = vpop.f32.mrf.mxu0
      %1383 = vmatprep.mubr.f32.mxu0 %v678
      %1384 = vmatmul.mubr.f32.gmra.mxu0 %v225
      %v1385 = vpop.f32.mrf.mxu0
      %v1386 = vadd.f32 %v602, %v1385
      %v1387 = vpop.f32.mrf.mxu0
      %1388 = vmatprep.mubr.f32.mxu0 %v681
      %1389 = vmatmul.mubr.f32.gmra.mxu0 %v227
      %v1390 = vpop.f32.mrf.mxu0
      %v1391 = vadd.f32 %v602, %v1390
      %v1392 = vpop.f32.mrf.mxu0
      %1393 = vmatprep.mubr.f32.mxu0 %v684
      %1394 = vmatmul.mubr.f32.gmra.mxu0 %v229
      %v1395 = vpop.f32.mrf.mxu0
      %v1396 = vadd.f32 %v602, %v1395
      %v1397 = vpop.f32.mrf.mxu0
      %1398 = vmatprep.mubr.f32.mxu0 %v687
      %1399 = vmatmul.mubr.f32.gmra.mxu0 %v231
      %v1400 = vpop.f32.mrf.mxu0
      %v1401 = vadd.f32 %v602, %v1400
      %v1402 = vpop.f32.mrf.mxu0
      %1403 = vmatprep.mubr.f32.mxu0 %v690
      %1404 = vmatmul.mubr.f32.gmra.mxu0 %v233
      %v1405 = vpop.f32.mrf.mxu0
      %v1406 = vadd.f32 %v602, %v1405
      %v1407 = vpop.f32.mrf.mxu0
      %1408 = vmatprep.mubr.f32.mxu0 %v693
      %1409 = vmatmul.mubr.f32.gmra.mxu0 %v235
      %v1410 = vpop.f32.mrf.mxu0
      %v1411 = vadd.f32 %v602, %v1410
      %v1412 = vpop.f32.mrf.mxu0
      %1413 = vmatprep.mubr.f32.mxu0 %v696
      %1414 = vmatmul.mubr.f32.gmra.mxu0 %v237
      %v1415 = vpop.f32.mrf.mxu0
      %v1416 = vadd.f32 %v602, %v1415
      %v1417 = vpop.f32.mrf.mxu0
      %1418 = vmatprep.mubr.f32.mxu0 %v699
      %1419 = vmatmul.mubr.f32.gmra.mxu0 %v239
      %v1420 = vpop.f32.mrf.mxu0
      %v1421 = vadd.f32 %v602, %v1420
      %v1422 = vpop.f32.mrf.mxu0
      %1423 = vmatprep.mubr.f32.mxu0 %v702
      %1424 = vmatmul.mubr.f32.gmra.mxu0 %v241
      %v1425 = vpop.f32.mrf.mxu0
      %v1426 = vadd.f32 %v602, %v1425
      %v1427 = vpop.f32.mrf.mxu0
      %1428 = vmatprep.mubr.f32.mxu0 %v705
      %1429 = vmatmul.mubr.f32.gmra.mxu0 %v243
      %v1430 = vpop.f32.mrf.mxu0
      %v1431 = vadd.f32 %v602, %v1430
      %v1432 = vpop.f32.mrf.mxu0
      %1433 = vmatprep.mubr.f32.mxu0 %v708
      %1434 = vmatmul.mubr.f32.gmra.mxu0 %v245
      %v1435 = vpop.f32.mrf.mxu0
      %v1436 = vadd.f32 %v602, %v1435
      %v1437 = vpop.f32.mrf.mxu0
      %1438 = vmatprep.mubr.f32.mxu0 %v711
      %1439 = vmatmul.mubr.f32.gmra.mxu0 %v247
      %v1440 = vpop.f32.mrf.mxu0
      %v1441 = vadd.f32 %v602, %v1440
      %v1442 = vpop.f32.mrf.mxu0
      %1443 = vmatprep.mubr.f32.mxu0 %v714
      %1444 = vmatmul.mubr.f32.gmra.mxu0 %v249
      %v1445 = vpop.f32.mrf.mxu0
      %v1446 = vadd.f32 %v602, %v1445
      %v1447 = vpop.f32.mrf.mxu0
      %1448 = vmatprep.mubr.f32.mxu0 %v717
      %1449 = vmatmul.mubr.f32.gmra.mxu0 %v251
      %v1450 = vpop.f32.mrf.mxu0
      %v1451 = vadd.f32 %v602, %v1450
      %v1452 = vpop.f32.mrf.mxu0
      %1453 = vmatprep.mubr.f32.mxu0 %v720
      %1454 = vmatmul.mubr.f32.gmra.mxu0 %v253
      %v1455 = vpop.f32.mrf.mxu0
      %v1456 = vadd.f32 %v602, %v1455
      %v1457 = vpop.f32.mrf.mxu0
      %1458 = vmatprep.mubr.f32.mxu0 %v723
      %1459 = vmatmul.mubr.f32.gmra.mxu0 %v255
      %v1460 = vpop.f32.mrf.mxu0
      %v1461 = vadd.f32 %v602, %v1460
      %v1462 = vpop.f32.mrf.mxu0
      %1463 = vmatprep.mubr.f32.mxu0 %v726
      %1464 = vmatmul.mubr.f32.gmra.mxu0 %v257
      %v1465 = vpop.f32.mrf.mxu0
      %v1466 = vadd.f32 %v602, %v1465
      %v1467 = vpop.f32.mrf.mxu0
      %1468 = vmatprep.mubr.f32.mxu0 %v729
      %1469 = vmatmul.mubr.f32.gmra.mxu0 %v259
      %v1470 = vpop.f32.mrf.mxu0
      %v1471 = vadd.f32 %v602, %v1470
      %v1472 = vpop.f32.mrf.mxu0
      %1473 = vmatprep.mubr.f32.mxu0 %v732
      %1474 = vmatmul.mubr.f32.gmra.mxu0 %v261
      %v1475 = vpop.f32.mrf.mxu0
      %v1476 = vadd.f32 %v602, %v1475
      %v1477 = vpop.f32.mrf.mxu0
      %1478 = vmatprep.mubr.f32.mxu0 %v735
      %1479 = vmatmul.mubr.f32.gmra.mxu0 %v263
      %v1480 = vpop.f32.mrf.mxu0
      %v1481 = vadd.f32 %v602, %v1480
      %v1482 = vpop.f32.mrf.mxu0
      %1483 = vmatprep.mubr.f32.mxu0 %v738
      %1484 = vmatmul.mubr.f32.gmra.mxu0 %v265
      %v1485 = vpop.f32.mrf.mxu0
      %v1486 = vadd.f32 %v602, %v1485
      %v1487 = vpop.f32.mrf.mxu0
      %1488 = vmatprep.mubr.f32.mxu0 %v741
      %1489 = vmatmul.mubr.f32.gmra.mxu0 %v267
      %v1490 = vpop.f32.mrf.mxu0
      %v1491 = vadd.f32 %v602, %v1490
      %v1492 = vpop.f32.mrf.mxu0
      %1493 = vmatprep.mubr.f32.mxu0 %v744
      %1494 = vmatmul.mubr.f32.gmra.mxu0 %v269
      %v1495 = vpop.f32.mrf.mxu0
      %v1496 = vadd.f32 %v602, %v1495
      %v1497 = vpop.f32.mrf.mxu0
      %1498 = vmatprep.mubr.f32.mxu0 %v747
      %1499 = vmatmul.mubr.f32.gmra.mxu0 %v271
      %v1500 = vpop.f32.mrf.mxu0
      %v1501 = vadd.f32 %v602, %v1500
      %v1502 = vpop.f32.mrf.mxu0
      %1503 = vmatprep.mubr.f32.mxu0 %v750
      %1504 = vmatmul.mubr.f32.gmra.mxu0 %v273
      %v1505 = vpop.f32.mrf.mxu0
      %v1506 = vadd.f32 %v602, %v1505
      %v1507 = vpop.f32.mrf.mxu0
      %1508 = vmatprep.mubr.f32.mxu0 %v753
      %1509 = vmatmul.mubr.f32.gmra.mxu0 %v275
      %v1510 = vpop.f32.mrf.mxu0
      %v1511 = vadd.f32 %v602, %v1510
      %v1512 = vpop.f32.mrf.mxu0
      %1513 = vmatprep.mubr.f32.mxu0 %v756
      %1514 = vmatmul.mubr.f32.gmra.mxu0 %v277
      %v1515 = vpop.f32.mrf.mxu0
      %v1516 = vadd.f32 %v602, %v1515
      %v1517 = vpop.f32.mrf.mxu0
      %1518 = vmatprep.mubr.f32.mxu0 %v759
      %1519 = vmatmul.mubr.f32.gmra.mxu0 %v279
      %v1520 = vpop.f32.mrf.mxu0
      %v1521 = vadd.f32 %v602, %v1520
      %v1522 = vpop.f32.mrf.mxu0
      %1523 = vmatprep.mubr.f32.mxu0 %v762
      %1524 = vmatmul.mubr.f32.gmra.mxu0 %v281
      %v1525 = vpop.f32.mrf.mxu0
      %v1526 = vadd.f32 %v602, %v1525
      %v1527 = vpop.f32.mrf.mxu0
      %1528 = vmatprep.mubr.f32.mxu0 %v765
      %1529 = vmatmul.mubr.f32.gmra.mxu0 %v283
      %v1530 = vpop.f32.mrf.mxu0
      %v1531 = vadd.f32 %v602, %v1530
      %v1532 = vpop.f32.mrf.mxu0
      %1533 = vmatprep.mubr.f32.mxu0 %v768
      %1534 = vmatmul.mubr.f32.gmra.mxu0 %v285
      %v1535 = vpop.f32.mrf.mxu0
      %v1536 = vadd.f32 %v602, %v1535
      %v1537 = vpop.f32.mrf.mxu0
      %1538 = vmatprep.mubr.f32.mxu0 %v771
      %1539 = vmatmul.mubr.f32.gmra.mxu0 %v287
      %v1540 = vpop.f32.mrf.mxu0
      %v1541 = vadd.f32 %v602, %v1540
      %v1542 = vpop.f32.mrf.mxu0
      %1543 = vmatprep.mubr.f32.mxu0 %v774
      %1544 = vmatmul.mubr.f32.gmra.mxu0 %v289
      %v1545 = vpop.f32.mrf.mxu0
      %v1546 = vadd.f32 %v602, %v1545
      %v1547 = vpop.f32.mrf.mxu0
      %1548 = vmatprep.mubr.f32.mxu0 %v777
      %1549 = vmatmul.mubr.f32.gmra.mxu0 %v291
      %v1550 = vpop.f32.mrf.mxu0
      %v1551 = vadd.f32 %v602, %v1550
      %v1552 = vpop.f32.mrf.mxu0
      %1553 = vmatprep.mubr.f32.mxu0 %v780
      %1554 = vmatmul.mubr.f32.gmra.mxu0 %v293
      %v1555 = vpop.f32.mrf.mxu0
      %v1556 = vadd.f32 %v602, %v1555
      %v1557 = vpop.f32.mrf.mxu0
      %1558 = vmatprep.mubr.f32.mxu0 %v783
      %1559 = vmatmul.mubr.f32.gmra.mxu0 %v295
      %v1560 = vpop.f32.mrf.mxu0
      %v1561 = vadd.f32 %v602, %v1560
      %v1562 = vpop.f32.mrf.mxu0
      %1563 = vmatprep.mubr.f32.mxu0 %v786
      %1564 = vmatmul.mubr.f32.gmra.mxu0 %v297
      %v1565 = vpop.f32.mrf.mxu0
      %v1566 = vadd.f32 %v602, %v1565
      %v1567 = vpop.f32.mrf.mxu0
      %1568 = vmatprep.mubr.f32.mxu0 %v789
      %1569 = vmatmul.mubr.f32.gmra.mxu0 %v299
      %v1570 = vpop.f32.mrf.mxu0
      %v1571 = vadd.f32 %v602, %v1570
      %v1572 = vpop.f32.mrf.mxu0
      %1573 = vmatprep.mubr.f32.mxu0 %v792
      %1574 = vmatmul.mubr.f32.gmra.mxu0 %v301
      %v1575 = vpop.f32.mrf.mxu0
      %v1576 = vadd.f32 %v602, %v1575
      %v1577 = vpop.f32.mrf.mxu0
      %1578 = vmatprep.mubr.f32.mxu0 %v795
      %1579 = vmatmul.mubr.f32.gmra.mxu0 %v303
      %v1580 = vpop.f32.mrf.mxu0
      %v1581 = vadd.f32 %v602, %v1580
      %v1582 = vpop.f32.mrf.mxu0
      %1583 = vmatprep.mubr.f32.mxu0 %v798
      %1584 = vmatmul.mubr.f32.gmra.mxu0 %v305
      %v1585 = vpop.f32.mrf.mxu0
      %v1586 = vadd.f32 %v602, %v1585
      %v1587 = vpop.f32.mrf.mxu0
      %1588 = vmatprep.mubr.f32.mxu0 %v801
      %1589 = vmatmul.mubr.f32.gmra.mxu0 %v307
      %v1590 = vpop.f32.mrf.mxu0
      %v1591 = vadd.f32 %v602, %v1590
      %v1592 = vpop.f32.mrf.mxu0
      %1593 = vmatprep.mubr.f32.mxu0 %v804
      %1594 = vmatmul.mubr.f32.gmra.mxu0 %v309
      %v1595 = vpop.f32.mrf.mxu0
      %v1596 = vadd.f32 %v602, %v1595
      %v1597 = vpop.f32.mrf.mxu0
      %1598 = vmatprep.mubr.f32.mxu0 %v807
      %1599 = vmatmul.mubr.f32.gmra.mxu0 %v311
      %v1600 = vpop.f32.mrf.mxu0
      %v1601 = vadd.f32 %v602, %v1600
      %v1602 = vpop.f32.mrf.mxu0
      %1603 = vmatprep.mubr.f32.mxu0 %v810
      %1604 = vmatmul.mubr.f32.gmra.mxu0 %v313
      %v1605 = vpop.f32.mrf.mxu0
      %v1606 = vadd.f32 %v602, %v1605
      %v1607 = vpop.f32.mrf.mxu0
      %1608 = vmatprep.mubr.f32.mxu0 %v813
      %1609 = vmatmul.mubr.f32.gmra.mxu0 %v315
      %v1610 = vpop.f32.mrf.mxu0
      %v1611 = vadd.f32 %v602, %v1610
      %v1612 = vpop.f32.mrf.mxu0
      %1613 = vmatprep.mubr.f32.mxu0 %v816
      %1614 = vmatmul.mubr.f32.gmra.mxu0 %v317
      %v1615 = vpop.f32.mrf.mxu0
      %v1616 = vadd.f32 %v602, %v1615
      %v1617 = vpop.f32.mrf.mxu0
      %1618 = vmatprep.mubr.f32.mxu0 %v819
      %1619 = vmatmul.mubr.f32.gmra.mxu0 %v319
      %v1620 = vpop.f32.mrf.mxu0
      %v1621 = vadd.f32 %v602, %v1620
      %v1622 = vpop.f32.mrf.mxu0
      %1623 = vmatprep.mubr.f32.mxu0 %v822
      %1624 = vmatmul.mubr.f32.gmra.mxu0 %v321
      %v1625 = vpop.f32.mrf.mxu0
      %v1626 = vadd.f32 %v602, %v1625
      %v1627 = vpop.f32.mrf.mxu0
      %1628 = vmatprep.mubr.f32.mxu0 %v825
      %1629 = vmatmul.mubr.f32.gmra.mxu0 %v323
      %v1630 = vpop.f32.mrf.mxu0
      %v1631 = vadd.f32 %v602, %v1630
      %v1632 = vpop.f32.mrf.mxu0
      %1633 = vmatprep.mubr.f32.mxu0 %v828
      %1634 = vmatmul.mubr.f32.gmra.mxu0 %v325
      %v1635 = vpop.f32.mrf.mxu0
      %v1636 = vadd.f32 %v602, %v1635
      %v1637 = vpop.f32.mrf.mxu0
      %1638 = vmatprep.mubr.f32.mxu0 %v831
      %1639 = vmatmul.mubr.f32.gmra.mxu0 %v327
      %v1640 = vpop.f32.mrf.mxu0
      %v1641 = vadd.f32 %v602, %v1640
      %v1642 = vpop.f32.mrf.mxu0
      %1643 = vmatprep.mubr.f32.mxu0 %v834
      %1644 = vmatmul.mubr.f32.gmra.mxu0 %v329
      %v1645 = vpop.f32.mrf.mxu0
      %v1646 = vadd.f32 %v602, %v1645
      %v1647 = vpop.f32.mrf.mxu0
      %1648 = vmatprep.mubr.f32.mxu0 %v837
      %1649 = vmatmul.mubr.f32.gmra.mxu0 %v331
      %v1650 = vpop.f32.mrf.mxu0
      %v1651 = vadd.f32 %v602, %v1650
      %v1652 = vpop.f32.mrf.mxu0
      %1653 = vmatprep.mubr.f32.mxu0 %v840
      %1654 = vmatmul.mubr.f32.gmra.mxu0 %v333
      %v1655 = vpop.f32.mrf.mxu0
      %v1656 = vadd.f32 %v602, %v1655
      %v1657 = vpop.f32.mrf.mxu0
      %1658 = vmatprep.mubr.f32.mxu0 %v843
      %1659 = vmatmul.mubr.f32.gmra.mxu0 %v335
      %v1660 = vpop.f32.mrf.mxu0
      %v1661 = vadd.f32 %v602, %v1660
      %v1662 = vpop.f32.mrf.mxu0
      %1663 = vmatprep.mubr.f32.mxu0 %v846
      %1664 = vmatmul.mubr.f32.gmra.mxu0 %v337
      %v1665 = vpop.f32.mrf.mxu0
      %v1666 = vadd.f32 %v602, %v1665
      %v1667 = vpop.f32.mrf.mxu0
      %1668 = vmatprep.mubr.f32.mxu0 %v849
      %1669 = vmatmul.mubr.f32.gmra.mxu0 %v339
      %v1670 = vpop.f32.mrf.mxu0
      %v1671 = vadd.f32 %v602, %v1670
      %v1672 = vpop.f32.mrf.mxu0
      %1673 = vmatprep.mubr.f32.mxu0 %v852
      %1674 = vmatmul.mubr.f32.gmra.mxu0 %v341
      %v1675 = vpop.f32.mrf.mxu0
      %v1676 = vadd.f32 %v602, %v1675
      %v1677 = vpop.f32.mrf.mxu0
      %1678 = vmatprep.mubr.f32.mxu0 %v855
      %1679 = vmatmul.mubr.f32.gmra.mxu0 %v343
      %v1680 = vpop.f32.mrf.mxu0
      %v1681 = vadd.f32 %v602, %v1680
      %v1682 = vpop.f32.mrf.mxu0
      %1683 = vmatprep.mubr.f32.mxu0 %v858
      %1684 = vmatmul.mubr.f32.gmra.mxu0 %v345
      %v1685 = vpop.f32.mrf.mxu0
      %v1686 = vadd.f32 %v602, %v1685
      %v1687 = vpop.f32.mrf.mxu0
      %1688 = vmatprep.mubr.f32.mxu0 %v861
      %1689 = vmatmul.mubr.f32.gmra.mxu0 %v347
      %v1690 = vpop.f32.mrf.mxu0
      %v1691 = vadd.f32 %v602, %v1690
      %v1692 = vpop.f32.mrf.mxu0
      %1693 = vmatprep.mubr.f32.mxu0 %v864
      %1694 = vmatmul.mubr.f32.gmra.mxu0 %v349
      %v1695 = vpop.f32.mrf.mxu0
      %v1696 = vadd.f32 %v602, %v1695
      %v1697 = vpop.f32.mrf.mxu0
      %1698 = vmatprep.mubr.f32.mxu0 %v867
      %1699 = vmatmul.mubr.f32.gmra.mxu0 %v351
      %v1700 = vpop.f32.mrf.mxu0
      %v1701 = vadd.f32 %v602, %v1700
      %v1702 = vpop.f32.mrf.mxu0
      %1703 = vmatprep.mubr.f32.mxu0 %v870
      %1704 = vmatmul.mubr.f32.gmra.mxu0 %v353
      %v1705 = vpop.f32.mrf.mxu0
      %v1706 = vadd.f32 %v602, %v1705
      %v1707 = vpop.f32.mrf.mxu0
      %1708 = vmatprep.mubr.f32.mxu0 %v873
      %1709 = vmatmul.mubr.f32.gmra.mxu0 %v355
      %v1710 = vpop.f32.mrf.mxu0
      %v1711 = vadd.f32 %v602, %v1710
      %v1712 = vpop.f32.mrf.mxu0
      %1713 = vmatprep.mubr.f32.mxu0 %v876
      %1714 = vmatmul.mubr.f32.gmra.mxu0 %v357
      %v1715 = vpop.f32.mrf.mxu0
      %v1716 = vadd.f32 %v602, %v1715
      %v1717 = vpop.f32.mrf.mxu0
      %1718 = vmatprep.mubr.f32.mxu0 %v879
      %1719 = vmatmul.mubr.f32.gmra.mxu0 %v359
      %v1720 = vpop.f32.mrf.mxu0
      %v1721 = vadd.f32 %v602, %v1720
      %v1722 = vpop.f32.mrf.mxu0
      %1723 = vmatprep.mubr.f32.mxu0 %v882
      %1724 = vmatmul.mubr.f32.gmra.mxu0 %v361
      %v1725 = vpop.f32.mrf.mxu0
      %v1726 = vadd.f32 %v602, %v1725
      %v1727 = vpop.f32.mrf.mxu0
      %1728 = vmatprep.mubr.f32.mxu0 %v885
      %1729 = vmatmul.mubr.f32.gmra.mxu0 %v363
      %v1730 = vpop.f32.mrf.mxu0
      %v1731 = vadd.f32 %v602, %v1730
      %v1732 = vpop.f32.mrf.mxu0
      %1733 = vmatprep.mubr.f32.mxu0 %v888
      %1734 = vmatmul.mubr.f32.gmra.mxu0 %v365
      %v1735 = vpop.f32.mrf.mxu0
      %v1736 = vadd.f32 %v602, %v1735
      %v1737 = vpop.f32.mrf.mxu0
      %1738 = vmatprep.mubr.f32.mxu0 %v891
      %1739 = vmatmul.mubr.f32.gmra.mxu0 %v367
      %v1740 = vpop.f32.mrf.mxu0
      %v1741 = vadd.f32 %v602, %v1740
      %v1742 = vpop.f32.mrf.mxu0
      %1743 = vmatprep.mubr.f32.mxu0 %v894
      %1744 = vmatmul.mubr.f32.gmra.mxu0 %v369
      %v1745 = vpop.f32.mrf.mxu0
      %v1746 = vadd.f32 %v602, %v1745
      %v1747 = vpop.f32.mrf.mxu0
      %1748 = vmatprep.mubr.f32.mxu0 %v897
      %1749 = vmatmul.mubr.f32.gmra.mxu0 %v371
      %v1750 = vpop.f32.mrf.mxu0
      %v1751 = vadd.f32 %v602, %v1750
      %v1752 = vpop.f32.mrf.mxu0
      %1753 = vmatprep.mubr.f32.mxu0 %v900
      %1754 = vmatmul.mubr.f32.gmra.mxu0 %v373
      %v1755 = vpop.f32.mrf.mxu0
      %v1756 = vadd.f32 %v602, %v1755
      %v1757 = vpop.f32.mrf.mxu0
      %1758 = vmatprep.mubr.f32.mxu0 %v903
      %1759 = vmatmul.mubr.f32.gmra.mxu0 %v375
      %v1760 = vpop.f32.mrf.mxu0
      %v1761 = vadd.f32 %v602, %v1760
      %v1762 = vpop.f32.mrf.mxu0
      %1763 = vmatprep.mubr.f32.mxu0 %v906
      %1764 = vmatmul.mubr.f32.gmra.mxu0 %v377
      %v1765 = vpop.f32.mrf.mxu0
      %v1766 = vadd.f32 %v602, %v1765
      %v1767 = vpop.f32.mrf.mxu0
      %1768 = vmatprep.mubr.f32.mxu0 %v909
      %1769 = vmatmul.mubr.f32.gmra.mxu0 %v379
      %v1770 = vpop.f32.mrf.mxu0
      %v1771 = vadd.f32 %v602, %v1770
      %v1772 = vpop.f32.mrf.mxu0
      %1773 = vmatprep.mubr.f32.mxu0 %v912
      %1774 = vmatmul.mubr.f32.gmra.mxu0 %v381
      %v1775 = vpop.f32.mrf.mxu0
      %v1776 = vadd.f32 %v602, %v1775
      %v1777 = vpop.f32.mrf.mxu0
      %1778 = vmatprep.mubr.f32.mxu0 %v915
      %1779 = vmatmul.mubr.f32.gmra.mxu0 %v383
      %v1780 = vpop.f32.mrf.mxu0
      %v1781 = vadd.f32 %v602, %v1780
      %v1782 = vpop.f32.mrf.mxu0
      %1783 = vmatprep.mubr.f32.mxu0 %v918
      %1784 = vmatmul.mubr.f32.gmra.mxu0 %v385
      %v1785 = vpop.f32.mrf.mxu0
      %v1786 = vadd.f32 %v602, %v1785
      %v1787 = vpop.f32.mrf.mxu0
      %1788 = vmatprep.mubr.f32.mxu0 %v921
      %1789 = vmatmul.mubr.f32.gmra.mxu0 %v387
      %v1790 = vpop.f32.mrf.mxu0
      %v1791 = vadd.f32 %v602, %v1790
      %v1792 = vpop.f32.mrf.mxu0
      %1793 = vmatprep.mubr.f32.mxu0 %v924
      %1794 = vmatmul.mubr.f32.gmra.mxu0 %v389
      %v1795 = vpop.f32.mrf.mxu0
      %v1796 = vadd.f32 %v602, %v1795
      %v1797 = vpop.f32.mrf.mxu0
      %1798 = vmatprep.mubr.f32.mxu0 %v927
      %1799 = vmatmul.mubr.f32.gmra.mxu0 %v391
      %v1800 = vpop.f32.mrf.mxu0
      %v1801 = vadd.f32 %v602, %v1800
      %v1802 = vpop.f32.mrf.mxu0
      %1803 = vmatprep.mubr.f32.mxu0 %v930
      %1804 = vmatmul.mubr.f32.gmra.mxu0 %v393
      %v1805 = vpop.f32.mrf.mxu0
      %v1806 = vadd.f32 %v602, %v1805
      %v1807 = vpop.f32.mrf.mxu0
      %1808 = vmatprep.mubr.f32.mxu0 %v933
      %1809 = vmatmul.mubr.f32.gmra.mxu0 %v395
      %v1810 = vpop.f32.mrf.mxu0
      %v1811 = vadd.f32 %v602, %v1810
      %v1812 = vpop.f32.mrf.mxu0
      %1813 = vmatprep.mubr.f32.mxu0 %v936
      %1814 = vmatmul.mubr.f32.gmra.mxu0 %v397
      %v1815 = vpop.f32.mrf.mxu0
      %v1816 = vadd.f32 %v602, %v1815
      %v1817 = vpop.f32.mrf.mxu0
      %1818 = vmatprep.mubr.f32.mxu0 %v939
      %1819 = vmatmul.mubr.f32.gmra.mxu0 %v399
      %v1820 = vpop.f32.mrf.mxu0
      %v1821 = vadd.f32 %v602, %v1820
      %v1822 = vpop.f32.mrf.mxu0
      %1823 = vmatprep.mubr.f32.mxu0 %v942
      %1824 = vmatmul.mubr.f32.gmra.mxu0 %v401
      %v1825 = vpop.f32.mrf.mxu0
      %v1826 = vadd.f32 %v602, %v1825
      %v1827 = vpop.f32.mrf.mxu0
      %1828 = vmatprep.mubr.f32.mxu0 %v945
      %1829 = vmatmul.mubr.f32.gmra.mxu0 %v403
      %v1830 = vpop.f32.mrf.mxu0
      %v1831 = vadd.f32 %v602, %v1830
      %v1832 = vpop.f32.mrf.mxu0
      %1833 = vmatprep.mubr.f32.mxu0 %v948
      %1834 = vmatmul.mubr.f32.gmra.mxu0 %v405
      %v1835 = vpop.f32.mrf.mxu0
      %v1836 = vadd.f32 %v602, %v1835
      %v1837 = vpop.f32.mrf.mxu0
      %1838 = vmatprep.mubr.f32.mxu0 %v951
      %1839 = vmatmul.mubr.f32.gmra.mxu0 %v407
      %v1840 = vpop.f32.mrf.mxu0
      %v1841 = vadd.f32 %v602, %v1840
      %v1842 = vpop.f32.mrf.mxu0
      %1843 = vmatprep.mubr.f32.mxu0 %v954
      %1844 = vmatmul.mubr.f32.gmra.mxu0 %v409
      %v1845 = vpop.f32.mrf.mxu0
      %v1846 = vadd.f32 %v602, %v1845
      %v1847 = vpop.f32.mrf.mxu0
      %1848 = vmatprep.mubr.f32.mxu0 %v957
      %1849 = vmatmul.mubr.f32.gmra.mxu0 %v411
      %v1850 = vpop.f32.mrf.mxu0
      %v1851 = vadd.f32 %v602, %v1850
      %v1852 = vpop.f32.mrf.mxu0
      %1853 = vmatprep.mubr.f32.mxu0 %v960
      %1854 = vmatmul.mubr.f32.gmra.mxu0 %v413
      %v1855 = vpop.f32.mrf.mxu0
      %v1856 = vadd.f32 %v602, %v1855
      %v1857 = vpop.f32.mrf.mxu0
      %1858 = vmatprep.mubr.f32.mxu0 %v963
      %1859 = vmatmul.mubr.f32.gmra.mxu0 %v415
      %v1860 = vpop.f32.mrf.mxu0
      %v1861 = vadd.f32 %v602, %v1860
      %v1862 = vpop.f32.mrf.mxu0
      %1863 = vmatprep.mubr.f32.mxu0 %v966
      %1864 = vmatmul.mubr.f32.gmra.mxu0 %v417
      %v1865 = vpop.f32.mrf.mxu0
      %v1866 = vadd.f32 %v602, %v1865
      %v1867 = vpop.f32.mrf.mxu0
      %1868 = vmatprep.mubr.f32.mxu0 %v969
      %1869 = vmatmul.mubr.f32.gmra.mxu0 %v419
      %v1870 = vpop.f32.mrf.mxu0
      %v1871 = vadd.f32 %v602, %v1870
      %v1872 = vpop.f32.mrf.mxu0
      %1873 = vmatprep.mubr.f32.mxu0 %v972
      %1874 = vmatmul.mubr.f32.gmra.mxu0 %v421
      %v1875 = vpop.f32.mrf.mxu0
      %v1876 = vadd.f32 %v602, %v1875
      %v1877 = vpop.f32.mrf.mxu0
      %1878 = vmatprep.mubr.f32.mxu0 %v975
      %1879 = vmatmul.mubr.f32.gmra.mxu0 %v423
      %v1880 = vpop.f32.mrf.mxu0
      %v1881 = vadd.f32 %v602, %v1880
      %v1882 = vpop.f32.mrf.mxu0
      %1883 = vmatprep.mubr.f32.mxu0 %v978
      %1884 = vmatmul.mubr.f32.gmra.mxu0 %v425
      %v1885 = vpop.f32.mrf.mxu0
      %v1886 = vadd.f32 %v602, %v1885
      %v1887 = vpop.f32.mrf.mxu0
      %1888 = vmatprep.mubr.f32.mxu0 %v981
      %1889 = vmatmul.mubr.f32.gmra.mxu0 %v427
      %v1890 = vpop.f32.mrf.mxu0
      %v1891 = vadd.f32 %v602, %v1890
      %v1892 = vpop.f32.mrf.mxu0
      %1893 = vmatprep.mubr.f32.mxu0 %v984
      %1894 = vmatmul.mubr.f32.gmra.mxu0 %v429
      %v1895 = vpop.f32.mrf.mxu0
      %v1896 = vadd.f32 %v602, %v1895
      %v1897 = vpop.f32.mrf.mxu0
      %1898 = vmatprep.mubr.f32.mxu0 %v987
      %1899 = vmatmul.mubr.f32.gmra.mxu0 %v431
      %v1900 = vpop.f32.mrf.mxu0
      %v1901 = vadd.f32 %v602, %v1900
      %v1902 = vpop.f32.mrf.mxu0
      %1903 = vmatprep.mubr.f32.mxu0 %v990
      %1904 = vmatmul.mubr.f32.gmra.mxu0 %v433
      %v1905 = vpop.f32.mrf.mxu0
      %v1906 = vadd.f32 %v602, %v1905
      %v1907 = vpop.f32.mrf.mxu0
      %1908 = vmatprep.mubr.f32.mxu0 %v993
      %1909 = vmatmul.mubr.f32.gmra.mxu0 %v435
      %v1910 = vpop.f32.mrf.mxu0
      %v1911 = vadd.f32 %v602, %v1910
      %v1912 = vpop.f32.mrf.mxu0
      %1913 = vmatprep.mubr.f32.mxu0 %v996
      %1914 = vmatmul.mubr.f32.gmra.mxu0 %v437
      %v1915 = vpop.f32.mrf.mxu0
      %v1916 = vadd.f32 %v602, %v1915
      %v1917 = vpop.f32.mrf.mxu0
      %1918 = vmatprep.mubr.f32.mxu0 %v999
      %1919 = vmatmul.mubr.f32.gmra.mxu0 %v439
      %v1920 = vpop.f32.mrf.mxu0
      %v1921 = vadd.f32 %v602, %v1920
      %v1922 = vpop.f32.mrf.mxu0
      %1923 = vmatprep.mubr.f32.mxu0 %v1002
      %1924 = vmatmul.mubr.f32.gmra.mxu0 %v441
      %v1925 = vpop.f32.mrf.mxu0
      %v1926 = vadd.f32 %v602, %v1925
      %v1927 = vpop.f32.mrf.mxu0
      %1928 = vmatprep.mubr.f32.mxu0 %v1005
      %1929 = vmatmul.mubr.f32.gmra.mxu0 %v443
      %v1930 = vpop.f32.mrf.mxu0
      %v1931 = vadd.f32 %v602, %v1930
      %v1932 = vpop.f32.mrf.mxu0
      %1933 = vmatprep.mubr.f32.mxu0 %v1008
      %1934 = vmatmul.mubr.f32.gmra.mxu0 %v445
      %v1935 = vpop.f32.mrf.mxu0
      %v1936 = vadd.f32 %v602, %v1935
      %v1937 = vpop.f32.mrf.mxu0
      %1938 = vmatprep.mubr.f32.mxu0 %v1011
      %1939 = vmatmul.mubr.f32.gmra.mxu0 %v447
      %v1940 = vpop.f32.mrf.mxu0
      %v1941 = vadd.f32 %v602, %v1940
      %v1942 = vpop.f32.mrf.mxu0
      %1943 = vmatprep.mubr.f32.mxu0 %v1014
      %1944 = vmatmul.mubr.f32.gmra.mxu0 %v449
      %v1945 = vpop.f32.mrf.mxu0
      %v1946 = vadd.f32 %v602, %v1945
      %v1947 = vpop.f32.mrf.mxu0
      %1948 = vmatprep.mubr.f32.mxu0 %v1017
      %1949 = vmatmul.mubr.f32.gmra.mxu0 %v451
      %v1950 = vpop.f32.mrf.mxu0
      %v1951 = vadd.f32 %v602, %v1950
      %v1952 = vpop.f32.mrf.mxu0
      %1953 = vmatprep.mubr.f32.mxu0 %v1020
      %1954 = vmatmul.mubr.f32.gmra.mxu0 %v453
      %v1955 = vpop.f32.mrf.mxu0
      %v1956 = vadd.f32 %v602, %v1955
      %v1957 = vpop.f32.mrf.mxu0
      %1958 = vmatprep.mubr.f32.mxu0 %v1023
      %1959 = vmatmul.mubr.f32.gmra.mxu0 %v455
      %v1960 = vpop.f32.mrf.mxu0
      %v1961 = vadd.f32 %v602, %v1960
      %v1962 = vpop.f32.mrf.mxu0
      %1963 = vmatprep.mubr.f32.mxu0 %v1026
      %1964 = vmatmul.mubr.f32.gmra.mxu0 %v457
      %v1965 = vpop.f32.mrf.mxu0
      %v1966 = vadd.f32 %v602, %v1965
      %v1967 = vpop.f32.mrf.mxu0
      %1968 = vmatprep.mubr.f32.mxu0 %v1029
      %1969 = vmatmul.mubr.f32.gmra.mxu0 %v459
      %v1970 = vpop.f32.mrf.mxu0
      %v1971 = vadd.f32 %v602, %v1970
      %v1972 = vpop.f32.mrf.mxu0
      %1973 = vmatprep.mubr.f32.mxu0 %v1032
      %1974 = vmatmul.mubr.f32.gmra.mxu0 %v461
      %v1975 = vpop.f32.mrf.mxu0
      %v1976 = vadd.f32 %v602, %v1975
      %v1977 = vpop.f32.mrf.mxu0
      %1978 = vmatprep.mubr.f32.mxu0 %v1035
      %1979 = vmatmul.mubr.f32.gmra.mxu0 %v463
      %v1980 = vpop.f32.mrf.mxu0
      %v1981 = vadd.f32 %v602, %v1980
      %v1982 = vpop.f32.mrf.mxu0
      %1983 = vmatprep.mubr.f32.mxu0 %v1038
      %1984 = vmatmul.mubr.f32.gmra.mxu0 %v465
      %v1985 = vpop.f32.mrf.mxu0
      %v1986 = vadd.f32 %v602, %v1985
      %v1987 = vpop.f32.mrf.mxu0
      %1988 = vmatprep.mubr.f32.mxu0 %v1041
      %1989 = vmatmul.mubr.f32.gmra.mxu0 %v467
      %v1990 = vpop.f32.mrf.mxu0
      %v1991 = vadd.f32 %v602, %v1990
      %v1992 = vpop.f32.mrf.mxu0
      %1993 = vmatprep.mubr.f32.mxu0 %v1044
      %1994 = vmatmul.mubr.f32.gmra.mxu0 %v469
      %v1995 = vpop.f32.mrf.mxu0
      %v1996 = vadd.f32 %v602, %v1995
      %v1997 = vpop.f32.mrf.mxu0
      %1998 = vmatprep.mubr.f32.mxu0 %v1047
      %1999 = vmatmul.mubr.f32.gmra.mxu0 %v471
      %v2000 = vpop.f32.mrf.mxu0
      %v2001 = vadd.f32 %v602, %v2000
      %v2002 = vpop.f32.mrf.mxu0
      %2003 = vmatprep.mubr.f32.mxu0 %v1050
      %2004 = vmatmul.mubr.f32.gmra.mxu0 %v473
      %v2005 = vpop.f32.mrf.mxu0
      %v2006 = vadd.f32 %v602, %v2005
      %v2007 = vpop.f32.mrf.mxu0
      %2008 = vmatprep.mubr.f32.mxu0 %v1053
      %2009 = vmatmul.mubr.f32.gmra.mxu0 %v475
      %v2010 = vpop.f32.mrf.mxu0
      %v2011 = vadd.f32 %v602, %v2010
      %v2012 = vpop.f32.mrf.mxu0
      %2013 = vmatprep.mubr.f32.mxu0 %v1056
      %2014 = vmatmul.mubr.f32.gmra.mxu0 %v477
      %v2015 = vpop.f32.mrf.mxu0
      %v2016 = vadd.f32 %v602, %v2015
      %v2017 = vpop.f32.mrf.mxu0
      %2018 = vmatprep.mubr.f32.mxu0 %v1059
      %2019 = vmatmul.mubr.f32.gmra.mxu0 %v479
      %v2020 = vpop.f32.mrf.mxu0
      %v2021 = vadd.f32 %v602, %v2020
      %v2022 = vpop.f32.mrf.mxu0
      %2023 = vmatprep.mubr.f32.mxu0 %v1062
      %2024 = vmatmul.mubr.f32.gmra.mxu0 %v481
      %v2025 = vpop.f32.mrf.mxu0
      %v2026 = vadd.f32 %v602, %v2025
      %v2027 = vpop.f32.mrf.mxu0
      %2028 = vmatprep.mubr.f32.mxu0 %v1065
      %2029 = vmatmul.mubr.f32.gmra.mxu0 %v483
      %v2030 = vpop.f32.mrf.mxu0
      %v2031 = vadd.f32 %v602, %v2030
      %v2032 = vpop.f32.mrf.mxu0
      %2033 = vmatprep.mubr.f32.mxu0 %v1068
      %2034 = vmatmul.mubr.f32.gmra.mxu0 %v485
      %v2035 = vpop.f32.mrf.mxu0
      %v2036 = vadd.f32 %v602, %v2035
      %v2037 = vpop.f32.mrf.mxu0
      %2038 = vmatprep.mubr.f32.mxu0 %v1071
      %2039 = vmatmul.mubr.f32.gmra.mxu0 %v487
      %v2040 = vpop.f32.mrf.mxu0
      %v2041 = vadd.f32 %v602, %v2040
      %v2042 = vpop.f32.mrf.mxu0
      %2043 = vmatprep.mubr.f32.mxu0 %v1074
      %2044 = vmatmul.mubr.f32.gmra.mxu0 %v489
      %v2045 = vpop.f32.mrf.mxu0
      %v2046 = vadd.f32 %v602, %v2045
      %v2047 = vpop.f32.mrf.mxu0
      %2048 = vmatprep.mubr.f32.mxu0 %v1077
      %2049 = vmatmul.mubr.f32.gmra.mxu0 %v491
      %v2050 = vpop.f32.mrf.mxu0
      %v2051 = vadd.f32 %v602, %v2050
      %v2052 = vpop.f32.mrf.mxu0
      %2053 = vmatprep.mubr.f32.mxu0 %v1080
      %2054 = vmatmul.mubr.f32.gmra.mxu0 %v493
      %v2055 = vpop.f32.mrf.mxu0
      %v2056 = vadd.f32 %v602, %v2055
      %v2057 = vpop.f32.mrf.mxu0
      %2058 = vmatprep.mubr.f32.mxu0 %v1083
      %2059 = vmatmul.mubr.f32.gmra.mxu0 %v495
      %v2060 = vpop.f32.mrf.mxu0
      %v2061 = vadd.f32 %v602, %v2060
      %v2062 = vpop.f32.mrf.mxu0
      %2063 = vmatprep.mubr.f32.mxu0 %v1086
      %2064 = vmatmul.mubr.f32.gmra.mxu0 %v497
      %v2065 = vpop.f32.mrf.mxu0
      %v2066 = vadd.f32 %v602, %v2065
      %v2067 = vpop.f32.mrf.mxu0
      %2068 = vmatprep.mubr.f32.mxu0 %v1089
      %2069 = vmatmul.mubr.f32.gmra.mxu0 %v499
      %v2070 = vpop.f32.mrf.mxu0
      %v2071 = vadd.f32 %v602, %v2070
      %v2072 = vpop.f32.mrf.mxu0
      %2073 = vmatprep.mubr.f32.mxu0 %v1092
      %2074 = vmatmul.mubr.f32.gmra.mxu0 %v501
      %v2075 = vpop.f32.mrf.mxu0
      %v2076 = vadd.f32 %v602, %v2075
      %v2077 = vpop.f32.mrf.mxu0
      %2078 = vmatprep.mubr.f32.mxu0 %v1095
      %2079 = vmatmul.mubr.f32.gmra.mxu0 %v503
      %v2080 = vpop.f32.mrf.mxu0
      %v2081 = vadd.f32 %v602, %v2080
      %v2082 = vpop.f32.mrf.mxu0
      %2083 = vmatprep.mubr.f32.mxu0 %v1098
      %2084 = vmatmul.mubr.f32.gmra.mxu0 %v505
      %v2085 = vpop.f32.mrf.mxu0
      %v2086 = vadd.f32 %v602, %v2085
      %v2087 = vpop.f32.mrf.mxu0
      %2088 = vmatprep.mubr.f32.mxu0 %v1101
      %2089 = vmatmul.mubr.f32.gmra.mxu0 %v507
      %v2090 = vpop.f32.mrf.mxu0
      %v2091 = vadd.f32 %v602, %v2090
      %v2092 = vpop.f32.mrf.mxu0
      %2093 = vmatprep.mubr.f32.mxu0 %v1104
      %2094 = vmatmul.mubr.f32.gmra.mxu0 %v509
      %v2095 = vpop.f32.mrf.mxu0
      %v2096 = vadd.f32 %v602, %v2095
      %v2097 = vpop.f32.mrf.mxu0
      %2098 = vmatprep.mubr.f32.mxu0 %v1107
      %2099 = vmatmul.mubr.f32.gmra.mxu0 %v511
      %v2100 = vpop.f32.mrf.mxu0
      %v2101 = vadd.f32 %v602, %v2100
      %v2102 = vpop.f32.mrf.mxu0
      %2103 = vmatprep.mubr.f32.mxu0 %v1110
      %2104 = vmatmul.mubr.f32.gmra.mxu0 %v513
      %v2105 = vpop.f32.mrf.mxu0
      %v2106 = vadd.f32 %v602, %v2105
      %v2107 = vpop.f32.mrf.mxu0
      %2108 = vmatprep.mubr.f32.mxu0 %v1113
      %2109 = vmatmul.mubr.f32.gmra.mxu0 %v515
      %v2110 = vpop.f32.mrf.mxu0
      %v2111 = vadd.f32 %v602, %v2110
      %v2112 = vpop.f32.mrf.mxu0
      %2113 = vmatprep.mubr.f32.mxu0 %v1116
      %2114 = vmatmul.mubr.f32.gmra.mxu0 %v517
      %v2115 = vpop.f32.mrf.mxu0
      %v2116 = vadd.f32 %v602, %v2115
      %v2117 = vpop.f32.mrf.mxu0
      %2118 = vmatprep.mubr.f32.mxu0 %v1119
      %2119 = vmatmul.mubr.f32.gmra.mxu0 %v519
      %v2120 = vpop.f32.mrf.mxu0
      %v2121 = vadd.f32 %v602, %v2120
      %v2122 = vpop.f32.mrf.mxu0
      %2123 = vmatprep.mubr.f32.mxu0 %v1122
      %2124 = vmatmul.mubr.f32.gmra.mxu0 %v521
      %v2125 = vpop.f32.mrf.mxu0
      %v2126 = vadd.f32 %v602, %v2125
      %v2127 = vpop.f32.mrf.mxu0
      %2128 = vmatprep.mubr.f32.mxu0 %v1125
      %2129 = vmatmul.mubr.f32.gmra.mxu0 %v523
      %v2130 = vpop.f32.mrf.mxu0
      %v2131 = vadd.f32 %v602, %v2130
      %v2132 = vpop.f32.mrf.mxu0
      %2133 = vmatprep.mubr.f32.mxu0 %v1128
      %2134 = vmatmul.mubr.f32.gmra.mxu0 %v525
      %v2135 = vpop.f32.mrf.mxu0
      %v2136 = vadd.f32 %v602, %v2135
      %v2137 = vpop.f32.mrf.mxu0
      %2138 = vmatprep.mubr.f32.mxu0 %v1131
      %2139 = vmatmul.mubr.f32.gmra.mxu0 %v527
      %v2140 = vpop.f32.mrf.mxu0
      %v2141 = vadd.f32 %v602, %v2140
      %v2142 = vpop.f32.mrf.mxu0
      %2143 = vmatprep.mubr.f32.mxu0 %v1134
      %2144 = vmatmul.mubr.f32.gmra.mxu0 %v529
      %v2145 = vpop.f32.mrf.mxu0
      %v2146 = vadd.f32 %v602, %v2145
      %v2147 = vpop.f32.mrf.mxu0
      %2148 = vmatprep.mubr.f32.mxu0 %v1137
      %2149 = vmatmul.mubr.f32.gmra.mxu0 %v531
      %v2150 = vpop.f32.mrf.mxu0
      %v2151 = vadd.f32 %v602, %v2150
      %v2152 = vpop.f32.mrf.mxu0
      %2153 = vmatprep.mubr.f32.mxu0 %v1140
      %2154 = vmatmul.mubr.f32.gmra.mxu0 %v533
      %v2155 = vpop.f32.mrf.mxu0
      %v2156 = vadd.f32 %v602, %v2155
      %v2157 = vpop.f32.mrf.mxu0
      %2158 = vmatprep.mubr.f32.mxu0 %v1143
      %2159 = vmatmul.mubr.f32.gmra.mxu0 %v535
      %v2160 = vpop.f32.mrf.mxu0
      %v2161 = vadd.f32 %v602, %v2160
      %v2162 = vpop.f32.mrf.mxu0
      %2163 = vmatprep.mubr.f32.mxu0 %v1146
      %2164 = vmatmul.mubr.f32.gmra.mxu0 %v537
      %v2165 = vpop.f32.mrf.mxu0
      %v2166 = vadd.f32 %v602, %v2165
      %v2167 = vpop.f32.mrf.mxu0
      %2168 = vmatprep.mubr.f32.mxu0 %v1149
      %2169 = vmatmul.mubr.f32.gmra.mxu0 %v539
      %v2170 = vpop.f32.mrf.mxu0
      %v2171 = vadd.f32 %v602, %v2170
      %v2172 = vpop.f32.mrf.mxu0
      %2173 = vmatprep.mubr.f32.mxu0 %v1152
      %2174 = vmatmul.mubr.f32.gmra.mxu0 %v541
      %v2175 = vpop.f32.mrf.mxu0
      %v2176 = vadd.f32 %v602, %v2175
      %v2177 = vpop.f32.mrf.mxu0
      %2178 = vmatprep.mubr.f32.mxu0 %v1155
      %2179 = vmatmul.mubr.f32.gmra.mxu0 %v543
      %v2180 = vpop.f32.mrf.mxu0
      %v2181 = vadd.f32 %v602, %v2180
      %v2182 = vpop.f32.mrf.mxu0
      %2183 = vmatprep.mubr.f32.mxu0 %v1158
      %2184 = vmatmul.mubr.f32.gmra.mxu0 %v545
      %v2185 = vpop.f32.mrf.mxu0
      %v2186 = vadd.f32 %v602, %v2185
      %v2187 = vpop.f32.mrf.mxu0
      %2188 = vmatprep.mubr.f32.mxu0 %v1161
      %2189 = vmatmul.mubr.f32.gmra.mxu0 %v547
      %v2190 = vpop.f32.mrf.mxu0
      %v2191 = vadd.f32 %v602, %v2190
      %v2192 = vpop.f32.mrf.mxu0
      %2193 = vmatprep.mubr.f32.mxu0 %v1164
      %2194 = vmatmul.mubr.f32.gmra.mxu0 %v549
      %v2195 = vpop.f32.mrf.mxu0
      %v2196 = vadd.f32 %v602, %v2195
      %v2197 = vpop.f32.mrf.mxu0
      %2198 = vmatprep.mubr.f32.mxu0 %v1167
      %2199 = vmatmul.mubr.f32.gmra.mxu0 %v551
      %v2200 = vpop.f32.mrf.mxu0
      %v2201 = vadd.f32 %v602, %v2200
      %v2202 = vpop.f32.mrf.mxu0
      %2203 = vmatprep.mubr.f32.mxu0 %v1170
      %2204 = vmatmul.mubr.f32.gmra.mxu0 %v553
      %v2205 = vpop.f32.mrf.mxu0
      %v2206 = vadd.f32 %v602, %v2205
      %v2207 = vpop.f32.mrf.mxu0
      %2208 = vmatprep.mubr.f32.mxu0 %v1173
      %2209 = vmatmul.mubr.f32.gmra.mxu0 %v555
      %v2210 = vpop.f32.mrf.mxu0
      %v2211 = vadd.f32 %v602, %v2210
      %v2212 = vpop.f32.mrf.mxu0
      %2213 = vmatprep.mubr.f32.mxu0 %v1176
      %2214 = vmatmul.mubr.f32.gmra.mxu0 %v557
      %v2215 = vpop.f32.mrf.mxu0
      %v2216 = vadd.f32 %v602, %v2215
      %v2217 = vpop.f32.mrf.mxu0
      %2218 = vmatprep.mubr.f32.mxu0 %v1179
      %2219 = vmatmul.mubr.f32.gmra.mxu0 %v559
      %v2220 = vpop.f32.mrf.mxu0
      %v2221 = vadd.f32 %v602, %v2220
      %v2222 = vpop.f32.mrf.mxu0
      %2223 = vmatprep.mubr.f32.mxu0 %v1182
      %2224 = vmatmul.mubr.f32.gmra.mxu0 %v561
      %v2225 = vpop.f32.mrf.mxu0
      %v2226 = vadd.f32 %v602, %v2225
      %v2227 = vpop.f32.mrf.mxu0
      %2228 = vmatprep.mubr.f32.mxu0 %v1185
      %2229 = vmatmul.mubr.f32.gmra.mxu0 %v563
      %v2230 = vpop.f32.mrf.mxu0
      %v2231 = vadd.f32 %v602, %v2230
      %v2232 = vpop.f32.mrf.mxu0
      %2233 = vmatprep.mubr.f32.mxu0 %v1188
      %2234 = vmatmul.mubr.f32.gmra.mxu0 %v565
      %v2235 = vpop.f32.mrf.mxu0
      %v2236 = vadd.f32 %v602, %v2235
      %v2237 = vpop.f32.mrf.mxu0
      %2238 = vmatprep.mubr.f32.mxu0 %v1191
      %2239 = vmatmul.mubr.f32.gmra.mxu0 %v567
      %v2240 = vpop.f32.mrf.mxu0
      %v2241 = vadd.f32 %v602, %v2240
      %v2242 = vpop.f32.mrf.mxu0
      %2243 = vmatprep.mubr.f32.mxu0 %v1194
      %2244 = vmatmul.mubr.f32.gmra.mxu0 %v569
      %v2245 = vpop.f32.mrf.mxu0
      %v2246 = vadd.f32 %v602, %v2245
      %v2247 = vpop.f32.mrf.mxu0
      %2248 = vmatprep.mubr.f32.mxu0 %v1197
      %2249 = vmatmul.mubr.f32.gmra.mxu0 %v571
      %v2250 = vpop.f32.mrf.mxu0
      %v2251 = vadd.f32 %v602, %v2250
      %v2252 = vpop.f32.mrf.mxu0
      %2253 = vdwg.mxu0
      %v2254 = vmax.f32 %v1266, 0.0
      %v2255 = vmax.f32 %v1271, 0.0
      %v2256 = vmax.f32 %v1276, 0.0
      %v2257 = vmax.f32 %v1281, 0.0
      %v2258 = vmax.f32 %v1286, 0.0
      %v2259 = vmax.f32 %v1291, 0.0
      %v2260 = vmax.f32 %v1296, 0.0
      %v2261 = vmax.f32 %v1301, 0.0
      %v2262 = vmax.f32 %v1306, 0.0
      %v2263 = vmax.f32 %v1311, 0.0
      %v2264 = vmax.f32 %v1316, 0.0
      %v2265 = vmax.f32 %v1321, 0.0
      %v2266 = vmax.f32 %v1326, 0.0
      %v2267 = vmax.f32 %v1331, 0.0
      %v2268 = vmax.f32 %v1336, 0.0
      %v2269 = vmax.f32 %v1341, 0.0
      %v2270 = vmax.f32 %v1346, 0.0
      %v2271 = vmax.f32 %v1351, 0.0
      %v2272 = vmax.f32 %v1356, 0.0
      %v2273 = vmax.f32 %v1361, 0.0
      %v2274 = vmax.f32 %v1366, 0.0
      %v2275 = vmax.f32 %v1371, 0.0
      %v2276 = vmax.f32 %v1376, 0.0
      %v2277 = vmax.f32 %v1381, 0.0
      %v2278 = vmax.f32 %v1386, 0.0
      %v2279 = vmax.f32 %v1391, 0.0
      %v2280 = vmax.f32 %v1396, 0.0
      %v2281 = vmax.f32 %v1401, 0.0
      %v2282 = vmax.f32 %v1406, 0.0
      %v2283 = vmax.f32 %v1411, 0.0
      %v2284 = vmax.f32 %v1416, 0.0
      %v2285 = vmax.f32 %v1421, 0.0
      %v2286 = vmax.f32 %v1426, 0.0
      %v2287 = vmax.f32 %v1431, 0.0
      %v2288 = vmax.f32 %v1436, 0.0
      %v2289 = vmax.f32 %v1441, 0.0
      %v2290 = vmax.f32 %v1446, 0.0
      %v2291 = vmax.f32 %v1451, 0.0
      %v2292 = vmax.f32 %v1456, 0.0
      %v2293 = vmax.f32 %v1461, 0.0
      %v2294 = vmax.f32 %v1466, 0.0
      %v2295 = vmax.f32 %v1471, 0.0
      %v2296 = vmax.f32 %v1476, 0.0
      %v2297 = vmax.f32 %v1481, 0.0
      %v2298 = vmax.f32 %v1486, 0.0
      %v2299 = vmax.f32 %v1491, 0.0
      %v2300 = vmax.f32 %v1496, 0.0
      %v2301 = vmax.f32 %v1501, 0.0
      %v2302 = vmax.f32 %v1506, 0.0
      %v2303 = vmax.f32 %v1511, 0.0
      %v2304 = vmax.f32 %v1516, 0.0
      %v2305 = vmax.f32 %v1521, 0.0
      %v2306 = vmax.f32 %v1526, 0.0
      %v2307 = vmax.f32 %v1531, 0.0
      %v2308 = vmax.f32 %v1536, 0.0
      %v2309 = vmax.f32 %v1541, 0.0
      %v2310 = vmax.f32 %v1546, 0.0
      %v2311 = vmax.f32 %v1551, 0.0
      %v2312 = vmax.f32 %v1556, 0.0
      %v2313 = vmax.f32 %v1561, 0.0
      %v2314 = vmax.f32 %v1566, 0.0
      %v2315 = vmax.f32 %v1571, 0.0
      %v2316 = vmax.f32 %v1576, 0.0
      %v2317 = vmax.f32 %v1581, 0.0
      %v2318 = vmax.f32 %v1586, 0.0
      %v2319 = vmax.f32 %v1591, 0.0
      %v2320 = vmax.f32 %v1596, 0.0
      %v2321 = vmax.f32 %v1601, 0.0
      %v2322 = vmax.f32 %v1606, 0.0
      %v2323 = vmax.f32 %v1611, 0.0
      %v2324 = vmax.f32 %v1616, 0.0
      %v2325 = vmax.f32 %v1621, 0.0
      %v2326 = vmax.f32 %v1626, 0.0
      %v2327 = vmax.f32 %v1631, 0.0
      %v2328 = vmax.f32 %v1636, 0.0
      %v2329 = vmax.f32 %v1641, 0.0
      %v2330 = vmax.f32 %v1646, 0.0
      %v2331 = vmax.f32 %v1651, 0.0
      %v2332 = vmax.f32 %v1656, 0.0
      %v2333 = vmax.f32 %v1661, 0.0
      %v2334 = vmax.f32 %v1666, 0.0
      %v2335 = vmax.f32 %v1671, 0.0
      %v2336 = vmax.f32 %v1676, 0.0
      %v2337 = vmax.f32 %v1681, 0.0
      %v2338 = vmax.f32 %v1686, 0.0
      %v2339 = vmax.f32 %v1691, 0.0
      %v2340 = vmax.f32 %v1696, 0.0
      %v2341 = vmax.f32 %v1701, 0.0
      %v2342 = vmax.f32 %v1706, 0.0
      %v2343 = vmax.f32 %v1711, 0.0
      %v2344 = vmax.f32 %v1716, 0.0
      %v2345 = vmax.f32 %v1721, 0.0
      %v2346 = vmax.f32 %v1726, 0.0
      %v2347 = vmax.f32 %v1731, 0.0
      %v2348 = vmax.f32 %v1736, 0.0
      %v2349 = vmax.f32 %v1741, 0.0
      %v2350 = vmax.f32 %v1746, 0.0
      %v2351 = vmax.f32 %v1751, 0.0
      %v2352 = vmax.f32 %v1756, 0.0
      %v2353 = vmax.f32 %v1761, 0.0
      %v2354 = vmax.f32 %v1766, 0.0
      %v2355 = vmax.f32 %v1771, 0.0
      %v2356 = vmax.f32 %v1776, 0.0
      %v2357 = vmax.f32 %v1781, 0.0
      %v2358 = vmax.f32 %v1786, 0.0
      %v2359 = vmax.f32 %v1791, 0.0
      %v2360 = vmax.f32 %v1796, 0.0
      %v2361 = vmax.f32 %v1801, 0.0
      %v2362 = vmax.f32 %v1806, 0.0
      %v2363 = vmax.f32 %v1811, 0.0
      %v2364 = vmax.f32 %v1816, 0.0
      %v2365 = vmax.f32 %v1821, 0.0
      %v2366 = vmax.f32 %v1826, 0.0
      %v2367 = vmax.f32 %v1831, 0.0
      %v2368 = vmax.f32 %v1836, 0.0
      %v2369 = vmax.f32 %v1841, 0.0
      %v2370 = vmax.f32 %v1846, 0.0
      %v2371 = vmax.f32 %v1851, 0.0
      %v2372 = vmax.f32 %v1856, 0.0
      %v2373 = vmax.f32 %v1861, 0.0
      %v2374 = vmax.f32 %v1866, 0.0
      %v2375 = vmax.f32 %v1871, 0.0
      %v2376 = vmax.f32 %v1876, 0.0
      %v2377 = vmax.f32 %v1881, 0.0
      %v2378 = vmax.f32 %v1886, 0.0
      %v2379 = vmax.f32 %v1891, 0.0
      %v2380 = vmax.f32 %v1896, 0.0
      %v2381 = vmax.f32 %v1901, 0.0
      %v2382 = vmax.f32 %v1906, 0.0
      %v2383 = vmax.f32 %v1911, 0.0
      %v2384 = vmax.f32 %v1916, 0.0
      %v2385 = vmax.f32 %v1921, 0.0
      %v2386 = vmax.f32 %v1926, 0.0
      %v2387 = vmax.f32 %v1931, 0.0
      %v2388 = vmax.f32 %v1936, 0.0
      %v2389 = vmax.f32 %v1941, 0.0
      %v2390 = vmax.f32 %v1946, 0.0
      %v2391 = vmax.f32 %v1951, 0.0
      %v2392 = vmax.f32 %v1956, 0.0
      %v2393 = vmax.f32 %v1961, 0.0
      %v2394 = vmax.f32 %v1966, 0.0
      %v2395 = vmax.f32 %v1971, 0.0
      %v2396 = vmax.f32 %v1976, 0.0
      %v2397 = vmax.f32 %v1981, 0.0
      %v2398 = vmax.f32 %v1986, 0.0
      %v2399 = vmax.f32 %v1991, 0.0
      %v2400 = vmax.f32 %v1996, 0.0
      %v2401 = vmax.f32 %v2001, 0.0
      %v2402 = vmax.f32 %v2006, 0.0
      %v2403 = vmax.f32 %v2011, 0.0
      %v2404 = vmax.f32 %v2016, 0.0
      %v2405 = vmax.f32 %v2021, 0.0
      %v2406 = vmax.f32 %v2026, 0.0
      %v2407 = vmax.f32 %v2031, 0.0
      %v2408 = vmax.f32 %v2036, 0.0
      %v2409 = vmax.f32 %v2041, 0.0
      %v2410 = vmax.f32 %v2046, 0.0
      %v2411 = vmax.f32 %v2051, 0.0
      %v2412 = vmax.f32 %v2056, 0.0
      %v2413 = vmax.f32 %v2061, 0.0
      %v2414 = vmax.f32 %v2066, 0.0
      %v2415 = vmax.f32 %v2071, 0.0
      %v2416 = vmax.f32 %v2076, 0.0
      %v2417 = vmax.f32 %v2081, 0.0
      %v2418 = vmax.f32 %v2086, 0.0
      %v2419 = vmax.f32 %v2091, 0.0
      %v2420 = vmax.f32 %v2096, 0.0
      %v2421 = vmax.f32 %v2101, 0.0
      %v2422 = vmax.f32 %v2106, 0.0
      %v2423 = vmax.f32 %v2111, 0.0
      %v2424 = vmax.f32 %v2116, 0.0
      %v2425 = vmax.f32 %v2121, 0.0
      %v2426 = vmax.f32 %v2126, 0.0
      %v2427 = vmax.f32 %v2131, 0.0
      %v2428 = vmax.f32 %v2136, 0.0
      %v2429 = vmax.f32 %v2141, 0.0
      %v2430 = vmax.f32 %v2146, 0.0
      %v2431 = vmax.f32 %v2151, 0.0
      %v2432 = vmax.f32 %v2156, 0.0
      %v2433 = vmax.f32 %v2161, 0.0
      %v2434 = vmax.f32 %v2166, 0.0
      %v2435 = vmax.f32 %v2171, 0.0
      %v2436 = vmax.f32 %v2176, 0.0
      %v2437 = vmax.f32 %v2181, 0.0
      %v2438 = vmax.f32 %v2186, 0.0
      %v2439 = vmax.f32 %v2191, 0.0
      %v2440 = vmax.f32 %v2196, 0.0
      %v2441 = vmax.f32 %v2201, 0.0
      %v2442 = vmax.f32 %v2206, 0.0
      %v2443 = vmax.f32 %v2211, 0.0
      %v2444 = vmax.f32 %v2216, 0.0
      %v2445 = vmax.f32 %v2221, 0.0
      %v2446 = vmax.f32 %v2226, 0.0
      %v2447 = vmax.f32 %v2231, 0.0
      %v2448 = vmax.f32 %v2236, 0.0
      %v2449 = vmax.f32 %v2241, 0.0
      %v2450 = vmax.f32 %v2246, 0.0
      %v2451 = vmax.f32 %v2251, 0.0
      %vm2452 = vcmask 261120
      %2453 = vst.msk [vmem:[%s175] sm:$0xff] %vm2452, %v2254
      %2454 = vst.msk [vmem:[%s175 + $0x8] sm:$0xff] %vm2452, %v2255
      %2455 = vst.msk [vmem:[%s175 + $0x10] sm:$0xff] %vm2452, %v2256
      %2456 = vst.msk [vmem:[%s175 + $0x18] sm:$0xff] %vm2452, %v2257
      %2457 = vst.msk [vmem:[%s175 + $0x20] sm:$0xff] %vm2452, %v2258
      %2458 = vst.msk [vmem:[%s175 + $0x28] sm:$0xff] %vm2452, %v2259
      %2459 = vst.msk [vmem:[%s175 + $0x30] sm:$0xff] %vm2452, %v2260
      %2460 = vst.msk [vmem:[%s175 + $0x38] sm:$0xff] %vm2452, %v2261
      %2461 = vst.msk [vmem:[%s175 + $0x40] sm:$0xff] %vm2452, %v2262
      %2462 = vst.msk [vmem:[%s175 + $0x48] sm:$0xff] %vm2452, %v2263
      %2463 = vst.msk [vmem:[%s175 + $0x50] sm:$0xff] %vm2452, %v2264
      %2464 = vst.msk [vmem:[%s175 + $0x58] sm:$0xff] %vm2452, %v2265
      %2465 = vst.msk [vmem:[%s175 + $0x60] sm:$0xff] %vm2452, %v2266
      %2466 = vst.msk [vmem:[%s175 + $0x68] sm:$0xff] %vm2452, %v2267
      %2467 = vst.msk [vmem:[%s175 + $0x70] sm:$0xff] %vm2452, %v2268
      %2468 = vst.msk [vmem:[%s175 + $0x78] sm:$0xff] %vm2452, %v2269
      %2469 = vst.msk [vmem:[%s175 + $0x80] sm:$0xff] %vm2452, %v2270
      %2470 = vst.msk [vmem:[%s175 + $0x88] sm:$0xff] %vm2452, %v2271
      %2471 = vst.msk [vmem:[%s175 + $0x90] sm:$0xff] %vm2452, %v2272
      %2472 = vst.msk [vmem:[%s175 + $0x98] sm:$0xff] %vm2452, %v2273
      %2473 = vst.msk [vmem:[%s175 + $0xa0] sm:$0xff] %vm2452, %v2274
      %2474 = vst.msk [vmem:[%s175 + $0xa8] sm:$0xff] %vm2452, %v2275
      %2475 = vst.msk [vmem:[%s175 + $0xb0] sm:$0xff] %vm2452, %v2276
      %2476 = vst.msk [vmem:[%s175 + $0xb8] sm:$0xff] %vm2452, %v2277
      %2477 = vst.msk [vmem:[%s175 + $0xc0] sm:$0xff] %vm2452, %v2278
      %2478 = vst.msk [vmem:[%s175 + $0xc8] sm:$0xff] %vm2452, %v2279
      %2479 = vst.msk [vmem:[%s175 + $0xd0] sm:$0xff] %vm2452, %v2280
      %2480 = vst.msk [vmem:[%s175 + $0xd8] sm:$0xff] %vm2452, %v2281
      %2481 = vst.msk [vmem:[%s175 + $0xe0] sm:$0xff] %vm2452, %v2282
      %2482 = vst.msk [vmem:[%s175 + $0xe8] sm:$0xff] %vm2452, %v2283
      %2483 = vst.msk [vmem:[%s175 + $0xf0] sm:$0xff] %vm2452, %v2284
      %2484 = vst.msk [vmem:[%s175 + $0xf8] sm:$0xff] %vm2452, %v2285
      %2485 = vst.msk [vmem:[%s175 + $0x100] sm:$0xff] %vm2452, %v2286
      %2486 = vst.msk [vmem:[%s175 + $0x108] sm:$0xff] %vm2452, %v2287
      %2487 = vst.msk [vmem:[%s175 + $0x110] sm:$0xff] %vm2452, %v2288
      %2488 = vst.msk [vmem:[%s175 + $0x118] sm:$0xff] %vm2452, %v2289
      %2489 = vst.msk [vmem:[%s175 + $0x120] sm:$0xff] %vm2452, %v2290
      %2490 = vst.msk [vmem:[%s175 + $0x128] sm:$0xff] %vm2452, %v2291
      %2491 = vst.msk [vmem:[%s175 + $0x130] sm:$0xff] %vm2452, %v2292
      %2492 = vst.msk [vmem:[%s175 + $0x138] sm:$0xff] %vm2452, %v2293
      %2493 = vst.msk [vmem:[%s175 + $0x140] sm:$0xff] %vm2452, %v2294
      %2494 = vst.msk [vmem:[%s175 + $0x148] sm:$0xff] %vm2452, %v2295
      %2495 = vst.msk [vmem:[%s175 + $0x150] sm:$0xff] %vm2452, %v2296
      %2496 = vst.msk [vmem:[%s175 + $0x158] sm:$0xff] %vm2452, %v2297
      %2497 = vst.msk [vmem:[%s175 + $0x160] sm:$0xff] %vm2452, %v2298
      %2498 = vst.msk [vmem:[%s175 + $0x168] sm:$0xff] %vm2452, %v2299
      %2499 = vst.msk [vmem:[%s175 + $0x170] sm:$0xff] %vm2452, %v2300
      %2500 = vst.msk [vmem:[%s175 + $0x178] sm:$0xff] %vm2452, %v2301
      %2501 = vst.msk [vmem:[%s175 + $0x180] sm:$0xff] %vm2452, %v2302
      %2502 = vst.msk [vmem:[%s175 + $0x188] sm:$0xff] %vm2452, %v2303
      %2503 = vst.msk [vmem:[%s175 + $0x190] sm:$0xff] %vm2452, %v2304
      %2504 = vst.msk [vmem:[%s175 + $0x198] sm:$0xff] %vm2452, %v2305
      %2505 = vst.msk [vmem:[%s175 + $0x1a0] sm:$0xff] %vm2452, %v2306
      %2506 = vst.msk [vmem:[%s175 + $0x1a8] sm:$0xff] %vm2452, %v2307
      %2507 = vst.msk [vmem:[%s175 + $0x1b0] sm:$0xff] %vm2452, %v2308
      %2508 = vst.msk [vmem:[%s175 + $0x1b8] sm:$0xff] %vm2452, %v2309
      %2509 = vst.msk [vmem:[%s175 + $0x1c0] sm:$0xff] %vm2452, %v2310
      %2510 = vst.msk [vmem:[%s175 + $0x1c8] sm:$0xff] %vm2452, %v2311
      %2511 = vst.msk [vmem:[%s175 + $0x1d0] sm:$0xff] %vm2452, %v2312
      %2512 = vst.msk [vmem:[%s175 + $0x1d8] sm:$0xff] %vm2452, %v2313
      %2513 = vst.msk [vmem:[%s175 + $0x1e0] sm:$0xff] %vm2452, %v2314
      %2514 = vst.msk [vmem:[%s175 + $0x1e8] sm:$0xff] %vm2452, %v2315
      %2515 = vst.msk [vmem:[%s175 + $0x1f0] sm:$0xff] %vm2452, %v2316
      %2516 = vst.msk [vmem:[%s175 + $0x1f8] sm:$0xff] %vm2452, %v2317
      %2517 = vst.msk [vmem:[%s175 + $0x200] sm:$0xff] %vm2452, %v2318
      %2518 = vst.msk [vmem:[%s175 + $0x208] sm:$0xff] %vm2452, %v2319
      %2519 = vst.msk [vmem:[%s175 + $0x210] sm:$0xff] %vm2452, %v2320
      %2520 = vst.msk [vmem:[%s175 + $0x218] sm:$0xff] %vm2452, %v2321
      %2521 = vst.msk [vmem:[%s175 + $0x220] sm:$0xff] %vm2452, %v2322
      %2522 = vst.msk [vmem:[%s175 + $0x228] sm:$0xff] %vm2452, %v2323
      %2523 = vst.msk [vmem:[%s175 + $0x230] sm:$0xff] %vm2452, %v2324
      %2524 = vst.msk [vmem:[%s175 + $0x238] sm:$0xff] %vm2452, %v2325
      %2525 = vst.msk [vmem:[%s175 + $0x240] sm:$0xff] %vm2452, %v2326
      %2526 = vst.msk [vmem:[%s175 + $0x248] sm:$0xff] %vm2452, %v2327
      %2527 = vst.msk [vmem:[%s175 + $0x250] sm:$0xff] %vm2452, %v2328
      %2528 = vst.msk [vmem:[%s175 + $0x258] sm:$0xff] %vm2452, %v2329
      %2529 = vst.msk [vmem:[%s175 + $0x260] sm:$0xff] %vm2452, %v2330
      %2530 = vst.msk [vmem:[%s175 + $0x268] sm:$0xff] %vm2452, %v2331
      %2531 = vst.msk [vmem:[%s175 + $0x270] sm:$0xff] %vm2452, %v2332
      %2532 = vst.msk [vmem:[%s175 + $0x278] sm:$0xff] %vm2452, %v2333
      %2533 = vst.msk [vmem:[%s175 + $0x280] sm:$0xff] %vm2452, %v2334
      %2534 = vst.msk [vmem:[%s175 + $0x288] sm:$0xff] %vm2452, %v2335
      %2535 = vst.msk [vmem:[%s175 + $0x290] sm:$0xff] %vm2452, %v2336
      %2536 = vst.msk [vmem:[%s175 + $0x298] sm:$0xff] %vm2452, %v2337
      %2537 = vst.msk [vmem:[%s175 + $0x2a0] sm:$0xff] %vm2452, %v2338
      %2538 = vst.msk [vmem:[%s175 + $0x2a8] sm:$0xff] %vm2452, %v2339
      %2539 = vst.msk [vmem:[%s175 + $0x2b0] sm:$0xff] %vm2452, %v2340
      %2540 = vst.msk [vmem:[%s175 + $0x2b8] sm:$0xff] %vm2452, %v2341
      %2541 = vst.msk [vmem:[%s175 + $0x2c0] sm:$0xff] %vm2452, %v2342
      %2542 = vst.msk [vmem:[%s175 + $0x2c8] sm:$0xff] %vm2452, %v2343
      %2543 = vst.msk [vmem:[%s175 + $0x2d0] sm:$0xff] %vm2452, %v2344
      %2544 = vst.msk [vmem:[%s175 + $0x2d8] sm:$0xff] %vm2452, %v2345
      %2545 = vst.msk [vmem:[%s175 + $0x2e0] sm:$0xff] %vm2452, %v2346
      %2546 = vst.msk [vmem:[%s175 + $0x2e8] sm:$0xff] %vm2452, %v2347
      %2547 = vst.msk [vmem:[%s175 + $0x2f0] sm:$0xff] %vm2452, %v2348
      %2548 = vst.msk [vmem:[%s175 + $0x2f8] sm:$0xff] %vm2452, %v2349
      %2549 = vst.msk [vmem:[%s175 + $0x300] sm:$0xff] %vm2452, %v2350
      %2550 = vst.msk [vmem:[%s175 + $0x308] sm:$0xff] %vm2452, %v2351
      %2551 = vst.msk [vmem:[%s175 + $0x310] sm:$0xff] %vm2452, %v2352
      %2552 = vst.msk [vmem:[%s175 + $0x318] sm:$0xff] %vm2452, %v2353
      %2553 = vst.msk [vmem:[%s175 + $0x320] sm:$0xff] %vm2452, %v2354
      %2554 = vst.msk [vmem:[%s175 + $0x328] sm:$0xff] %vm2452, %v2355
      %2555 = vst.msk [vmem:[%s175 + $0x330] sm:$0xff] %vm2452, %v2356
      %2556 = vst.msk [vmem:[%s175 + $0x338] sm:$0xff] %vm2452, %v2357
      %2557 = vst.msk [vmem:[%s175 + $0x340] sm:$0xff] %vm2452, %v2358
      %2558 = vst.msk [vmem:[%s175 + $0x348] sm:$0xff] %vm2452, %v2359
      %2559 = vst.msk [vmem:[%s175 + $0x350] sm:$0xff] %vm2452, %v2360
      %2560 = vst.msk [vmem:[%s175 + $0x358] sm:$0xff] %vm2452, %v2361
      %2561 = vst.msk [vmem:[%s175 + $0x360] sm:$0xff] %vm2452, %v2362
      %2562 = vst.msk [vmem:[%s175 + $0x368] sm:$0xff] %vm2452, %v2363
      %2563 = vst.msk [vmem:[%s175 + $0x370] sm:$0xff] %vm2452, %v2364
      %2564 = vst.msk [vmem:[%s175 + $0x378] sm:$0xff] %vm2452, %v2365
      %2565 = vst.msk [vmem:[%s175 + $0x380] sm:$0xff] %vm2452, %v2366
      %2566 = vst.msk [vmem:[%s175 + $0x388] sm:$0xff] %vm2452, %v2367
      %2567 = vst.msk [vmem:[%s175 + $0x390] sm:$0xff] %vm2452, %v2368
      %2568 = vst.msk [vmem:[%s175 + $0x398] sm:$0xff] %vm2452, %v2369
      %2569 = vst.msk [vmem:[%s175 + $0x3a0] sm:$0xff] %vm2452, %v2370
      %2570 = vst.msk [vmem:[%s175 + $0x3a8] sm:$0xff] %vm2452, %v2371
      %2571 = vst.msk [vmem:[%s175 + $0x3b0] sm:$0xff] %vm2452, %v2372
      %2572 = vst.msk [vmem:[%s175 + $0x3b8] sm:$0xff] %vm2452, %v2373
      %2573 = vst.msk [vmem:[%s175 + $0x3c0] sm:$0xff] %vm2452, %v2374
      %2574 = vst.msk [vmem:[%s175 + $0x3c8] sm:$0xff] %vm2452, %v2375
      %2575 = vst.msk [vmem:[%s175 + $0x3d0] sm:$0xff] %vm2452, %v2376
      %2576 = vst.msk [vmem:[%s175 + $0x3d8] sm:$0xff] %vm2452, %v2377
      %2577 = vst.msk [vmem:[%s175 + $0x3e0] sm:$0xff] %vm2452, %v2378
      %2578 = vst.msk [vmem:[%s175 + $0x3e8] sm:$0xff] %vm2452, %v2379
      %2579 = vst.msk [vmem:[%s175 + $0x3f0] sm:$0xff] %vm2452, %v2380
      %2580 = vst.msk [vmem:[%s175 + $0x3f8] sm:$0xff] %vm2452, %v2381
      %2581 = vst.msk [vmem:[%s175 + $0x400] sm:$0xff] %vm2452, %v2382
      %2582 = vst.msk [vmem:[%s175 + $0x408] sm:$0xff] %vm2452, %v2383
      %2583 = vst.msk [vmem:[%s175 + $0x410] sm:$0xff] %vm2452, %v2384
      %2584 = vst.msk [vmem:[%s175 + $0x418] sm:$0xff] %vm2452, %v2385
      %2585 = vst.msk [vmem:[%s175 + $0x420] sm:$0xff] %vm2452, %v2386
      %2586 = vst.msk [vmem:[%s175 + $0x428] sm:$0xff] %vm2452, %v2387
      %2587 = vst.msk [vmem:[%s175 + $0x430] sm:$0xff] %vm2452, %v2388
      %2588 = vst.msk [vmem:[%s175 + $0x438] sm:$0xff] %vm2452, %v2389
      %2589 = vst.msk [vmem:[%s175 + $0x440] sm:$0xff] %vm2452, %v2390
      %2590 = vst.msk [vmem:[%s175 + $0x448] sm:$0xff] %vm2452, %v2391
      %2591 = vst.msk [vmem:[%s175 + $0x450] sm:$0xff] %vm2452, %v2392
      %2592 = vst.msk [vmem:[%s175 + $0x458] sm:$0xff] %vm2452, %v2393
      %2593 = vst.msk [vmem:[%s175 + $0x460] sm:$0xff] %vm2452, %v2394
      %2594 = vst.msk [vmem:[%s175 + $0x468] sm:$0xff] %vm2452, %v2395
      %2595 = vst.msk [vmem:[%s175 + $0x470] sm:$0xff] %vm2452, %v2396
      %2596 = vst.msk [vmem:[%s175 + $0x478] sm:$0xff] %vm2452, %v2397
      %2597 = vst.msk [vmem:[%s175 + $0x480] sm:$0xff] %vm2452, %v2398
      %2598 = vst.msk [vmem:[%s175 + $0x488] sm:$0xff] %vm2452, %v2399
      %2599 = vst.msk [vmem:[%s175 + $0x490] sm:$0xff] %vm2452, %v2400
      %2600 = vst.msk [vmem:[%s175 + $0x498] sm:$0xff] %vm2452, %v2401
      %2601 = vst.msk [vmem:[%s175 + $0x4a0] sm:$0xff] %vm2452, %v2402
      %2602 = vst.msk [vmem:[%s175 + $0x4a8] sm:$0xff] %vm2452, %v2403
      %2603 = vst.msk [vmem:[%s175 + $0x4b0] sm:$0xff] %vm2452, %v2404
      %2604 = vst.msk [vmem:[%s175 + $0x4b8] sm:$0xff] %vm2452, %v2405
      %2605 = vst.msk [vmem:[%s175 + $0x4c0] sm:$0xff] %vm2452, %v2406
      %2606 = vst.msk [vmem:[%s175 + $0x4c8] sm:$0xff] %vm2452, %v2407
      %2607 = vst.msk [vmem:[%s175 + $0x4d0] sm:$0xff] %vm2452, %v2408
      %2608 = vst.msk [vmem:[%s175 + $0x4d8] sm:$0xff] %vm2452, %v2409
      %2609 = vst.msk [vmem:[%s175 + $0x4e0] sm:$0xff] %vm2452, %v2410
      %2610 = vst.msk [vmem:[%s175 + $0x4e8] sm:$0xff] %vm2452, %v2411
      %2611 = vst.msk [vmem:[%s175 + $0x4f0] sm:$0xff] %vm2452, %v2412
      %2612 = vst.msk [vmem:[%s175 + $0x4f8] sm:$0xff] %vm2452, %v2413
      %2613 = vst.msk [vmem:[%s175 + $0x500] sm:$0xff] %vm2452, %v2414
      %2614 = vst.msk [vmem:[%s175 + $0x508] sm:$0xff] %vm2452, %v2415
      %2615 = vst.msk [vmem:[%s175 + $0x510] sm:$0xff] %vm2452, %v2416
      %2616 = vst.msk [vmem:[%s175 + $0x518] sm:$0xff] %vm2452, %v2417
      %2617 = vst.msk [vmem:[%s175 + $0x520] sm:$0xff] %vm2452, %v2418
      %2618 = vst.msk [vmem:[%s175 + $0x528] sm:$0xff] %vm2452, %v2419
      %2619 = vst.msk [vmem:[%s175 + $0x530] sm:$0xff] %vm2452, %v2420
      %2620 = vst.msk [vmem:[%s175 + $0x538] sm:$0xff] %vm2452, %v2421
      %2621 = vst.msk [vmem:[%s175 + $0x540] sm:$0xff] %vm2452, %v2422
      %2622 = vst.msk [vmem:[%s175 + $0x548] sm:$0xff] %vm2452, %v2423
      %2623 = vst.msk [vmem:[%s175 + $0x550] sm:$0xff] %vm2452, %v2424
      %2624 = vst.msk [vmem:[%s175 + $0x558] sm:$0xff] %vm2452, %v2425
      %2625 = vst.msk [vmem:[%s175 + $0x560] sm:$0xff] %vm2452, %v2426
      %2626 = vst.msk [vmem:[%s175 + $0x568] sm:$0xff] %vm2452, %v2427
      %2627 = vst.msk [vmem:[%s175 + $0x570] sm:$0xff] %vm2452, %v2428
      %2628 = vst.msk [vmem:[%s175 + $0x578] sm:$0xff] %vm2452, %v2429
      %2629 = vst.msk [vmem:[%s175 + $0x580] sm:$0xff] %vm2452, %v2430
      %2630 = vst.msk [vmem:[%s175 + $0x588] sm:$0xff] %vm2452, %v2431
      %2631 = vst.msk [vmem:[%s175 + $0x590] sm:$0xff] %vm2452, %v2432
      %2632 = vst.msk [vmem:[%s175 + $0x598] sm:$0xff] %vm2452, %v2433
      %2633 = vst.msk [vmem:[%s175 + $0x5a0] sm:$0xff] %vm2452, %v2434
      %2634 = vst.msk [vmem:[%s175 + $0x5a8] sm:$0xff] %vm2452, %v2435
      %2635 = vst.msk [vmem:[%s175 + $0x5b0] sm:$0xff] %vm2452, %v2436
      %2636 = vst.msk [vmem:[%s175 + $0x5b8] sm:$0xff] %vm2452, %v2437
      %2637 = vst.msk [vmem:[%s175 + $0x5c0] sm:$0xff] %vm2452, %v2438
      %2638 = vst.msk [vmem:[%s175 + $0x5c8] sm:$0xff] %vm2452, %v2439
      %2639 = vst.msk [vmem:[%s175 + $0x5d0] sm:$0xff] %vm2452, %v2440
      %2640 = vst.msk [vmem:[%s175 + $0x5d8] sm:$0xff] %vm2452, %v2441
      %2641 = vst.msk [vmem:[%s175 + $0x5e0] sm:$0xff] %vm2452, %v2442
      %2642 = vst.msk [vmem:[%s175 + $0x5e8] sm:$0xff] %vm2452, %v2443
      %2643 = vst.msk [vmem:[%s175 + $0x5f0] sm:$0xff] %vm2452, %v2444
      %2644 = vst.msk [vmem:[%s175 + $0x5f8] sm:$0xff] %vm2452, %v2445
      %2645 = vst.msk [vmem:[%s175 + $0x600] sm:$0xff] %vm2452, %v2446
      %2646 = vst.msk [vmem:[%s175 + $0x608] sm:$0xff] %vm2452, %v2447
      %2647 = vst.msk [vmem:[%s175 + $0x610] sm:$0xff] %vm2452, %v2448
      %2648 = vst.msk [vmem:[%s175 + $0x618] sm:$0xff] %vm2452, %v2449
      %2649 = vst.msk [vmem:[%s175 + $0x620] sm:$0xff] %vm2452, %v2450
      %2650 = vst.msk [vmem:[%s175 + $0x628] sm:$0xff] %vm2452, %v2451
      %s2651 = smul.u32 198, %s14
      %p2652 = scmp.lt.s32.totalorder %s2651, 395
      %s2653 = scalar_select %p2652, %s2651, 395
      %s2654 = smul.addr %s2653, 8
      %s2655 = scalar_lea.vmem %s3, %s2654
      // Predicated region
      $region33: #{cnn_critic_forward.4} parent=31 // pred_check
        %p2656 = pneg %p100
      $region34: #{cnn_critic_forward.4} parent=31 // pred_check_branch
        %2658 = sbr.rel (%p2656) target = $region36
      $region35: #{cnn_critic_forward.4} parent=31 // pred_region
        %s2659 = smul.u32 198, %s14
      $region36: #{cnn_critic_forward.4} parent=31 // pred_fallthru
        _
    $region32: #{cnn_critic_forward.4} parent=5 // pred_fallthru
      _
    %p2660 = scmp.le.s32.totalorder 2, %s9
    // Predicated region
    $region37: #{cnn_critic_forward.4} parent=5 // pred_check
      %p2661 = pneg %p2660
    $region38: #{cnn_critic_forward.4} parent=5 // pred_check_branch
      %2663 = sbr.rel (%p2661) target = $region40
    $region39: #{cnn_critic_forward.4} parent=5 // pred_region
      %s2664 = ssub.s32 %s9, 2
      // Predicated region
      $region41: #{cnn_critic_forward.4} parent=39 // pred_check
        %p2665 = pneg %p106
      $region42: #{cnn_critic_forward.4} parent=39 // pred_check_branch
        %2667 = sbr.rel (%p2665) target = $region44
      $region43: #{cnn_critic_forward.4} parent=39 // pred_region
        %s2668 = smul.u32 198, %s15
        %p2669 = scmp.lt.s32.totalorder %s2668, 395
        %s2670 = scalar_select %p2669, %s2668, 395
        %s2671 = smul.addr %s2670, 8
        %s2672 = scalar_lea.vmem %s3, %s2671
      $region44: #{cnn_critic_forward.4} parent=39 // pred_fallthru
        _
    $region40: #{cnn_critic_forward.4} parent=5 // pred_fallthru
      _
  $region6: #{cnn_critic_forward.4} parent=0 // loop_footer
    %s13 = sadd.s32 1, %s9
  $region7: #{cnn_critic_forward.4} parent=0 // loop_footer_branch
    %8 = sbr.rel target = $region3
  $region8: #{cnn_critic_forward.4} parent=0 // loop_exit
    _

// kernel: cnn_critic_forward.5
$region0: #{cnn_critic_forward.5}
  #allocation0 [shape = 'u32[]', space=smem, size = 0x4, offset = 0x4, fixed_abs, tag = 'smem constant byte address 0x4 - core index']
  #allocation1 [shape = 'u32[144,128]{1,0:T(1,128)}', space=vmem, size = 0x12000, scoped, tag = 'internal scratch']
  %s0 = inlined_call_operand.vmem [shape: f32[4,2,99,128], index: 0, kind: input, shape index: {}]
  %s1 = inlined_call_operand.vmem [shape: f32[2,99,128], index: 1, kind: output, shape index: {}]
  %s2 = sld [smem:[#allocation0]]
  $region75: #{cnn_critic_forward.5} parent=0
    _
  %s4 = ssub.s32 1, %s2
  %s5 = scalar_select 0, %s4, %s2
  $region1: #{cnn_critic_forward.5} parent=0
    #allocation2 [shape = 'u8[425984]{0}', space=vmem, size = 0x68000, scoped, tag = 'input window, operand 0']
    loop: start=0, step=1, limit=4
    $region2: #{cnn_critic_forward.5} parent=1 // loop_pre_header
      _
    $region3: #{cnn_critic_forward.5} parent=1 // loop_header
      %s7 = sphi 0, %s11
      %p8 = scmp.ge.s32.totalorder %s7, 4
      %s17 = sphi 0, %s19
      %s20 = sphi 0, %s17
      %s21 = sphi 0, %s20
      %s37 = sphi 0, %s21
      %s43 = sphi 0, %s45
      %s46 = sphi 0, %s43
      %s47 = sphi 0, %s46
      %s63 = sphi 0, %s47
    $region4: #{cnn_critic_forward.5} parent=1 // loop_header_branch
      %10 = sbr.rel (%p8) target = $region8
    $region5: #{cnn_critic_forward.5} parent=1 // loop_body
      %s12 = ssub.s32 %s7, 1
      %s13 = ssub.s32 %s7, 2
      %s14 = sadd.s32 %s7, 1
      %s15 = ssub.s32 %s7, %s14
      %p16 = scmp.eq.s32.totalorder %s15, 0
      %s18 = sadd.s32 %s17, 1
      %s19 = scalar_select %p16, %s17, %s18
      %p22 = pneg %p16
      %p23 = scmp.eq.s32.totalorder %s7, 1
      %p24 = por %p22, %p23
      %p25 = scmp.ne.s32.totalorder %s17, %s20
      %p26 = scmp.eq.s32.totalorder %s7, 0
      %p27 = por %p25, %p26
      %p28 = scmp.ne.s32.totalorder %s17, %s20
      %p29 = scmp.eq.s32.totalorder %s12, 1
      %p30 = por %p28, %p29
      %p31 = scmp.ne.s32.totalorder %s20, %s21
      %p32 = scmp.eq.s32.totalorder %s12, 0
      %p33 = por %p31, %p32
      %p34 = scmp.ne.s32.totalorder %s20, %s21
      %p35 = scmp.eq.s32.totalorder %s13, 1
      %p36 = por %p34, %p35
      %p38 = scmp.ne.s32.totalorder %s21, %s37
      %p39 = scmp.eq.s32.totalorder %s13, 0
      %p40 = por %p38, %p39
      %s41 = ssub.s32 %s7, %s14
      %p42 = scmp.eq.s32.totalorder %s41, 0
      %s44 = sadd.s32 %s43, 1
      %s45 = scalar_select %p42, %s43, %s44
      %p48 = pneg %p42
      %p49 = scmp.eq.s32.totalorder %s7, 1
      %p50 = por %p48, %p49
      %p51 = scmp.ne.s32.totalorder %s43, %s46
      %p52 = scmp.eq.s32.totalorder %s7, 0
      %p53 = por %p51, %p52
      %p54 = scmp.ne.s32.totalorder %s43, %s46
      %p55 = scmp.eq.s32.totalorder %s12, 1
      %p56 = por %p54, %p55
      %p57 = scmp.ne.s32.totalorder %s46, %s47
      %p58 = scmp.eq.s32.totalorder %s12, 0
      %p59 = por %p57, %p58
      %p60 = scmp.ne.s32.totalorder %s46, %s47
      %p61 = scmp.eq.s32.totalorder %s13, 1
      %p62 = por %p60, %p61
      %p64 = scmp.ne.s32.totalorder %s47, %s63
      %p65 = scmp.eq.s32.totalorder %s13, 0
      %p66 = por %p64, %p65
      %p67 = scmp.le.s32.totalorder 1, %s7
      %p68 = scmp.lt.s32.totalorder %s7, 3
      %p69 = pnand %p67, %p68
      %p70 = pneg %p69
      // Predicated region
      $region9: #{cnn_critic_forward.5} parent=5 // pred_check
        _
      $region10: #{cnn_critic_forward.5} parent=5 // pred_check_branch
        %72 = sbr.rel (%p69) target = $region12
      $region11: #{cnn_critic_forward.5} parent=5 // pred_region
        %s73 = ssub.s32 %s7, 1
      $region12: #{cnn_critic_forward.5} parent=5 // pred_fallthru
        _
      %p74 = scmp.lt.s32.totalorder %s7, 2
      // Predicated region
      $region13: #{cnn_critic_forward.5} parent=5 // pred_check
        %p75 = pneg %p74
      $region14: #{cnn_critic_forward.5} parent=5 // pred_check_branch
        %77 = sbr.rel (%p75) target = $region16
      $region15: #{cnn_critic_forward.5} parent=5 // pred_region
        // Predicated region
        $region17: #{cnn_critic_forward.5} parent=15 // pred_check
          %p78 = pneg %p27
        $region18: #{cnn_critic_forward.5} parent=15 // pred_check_branch
          %80 = sbr.rel (%p78) target = $region20
        $region19: #{cnn_critic_forward.5} parent=15 // pred_region
          %s81 = sand.u32 %s17, 1
          %s82 = sand.u32 %s17, 1
          %s83 = smul.addr %s82, 416
          %s84 = scalar_lea.vmem [#allocation2], %s83
          %s85 = smul.addr %s7, 13
          %s86 = smul.addr %s85, 8
          %s87 = scalar_lea.vmem %s0, %s86
          // Predicated region
          $region21: #{cnn_critic_forward.5} parent=19 // pred_check
            _
          $region22: #{cnn_critic_forward.5} parent=19 // pred_check_branch
            %89 = sbr.rel (0) target = $region24
          $region23: #{cnn_critic_forward.5} parent=19 // pred_region
            // Predicated region
            $region25: #{cnn_critic_forward.5} parent=23 // pred_check
              _
            $region26: #{cnn_critic_forward.5} parent=23 // pred_check_branch
              %91 = sbr.rel (0) target = $region28
            $region27: #{cnn_critic_forward.5} parent=23 // pred_region
              // Predicated region
              $region40: #{cnn_critic_forward.5} parent=27 // pred_check
                _
              $region41: #{cnn_critic_forward.5} parent=27 // pred_check_branch
                %209 = sbr.rel (0) target = $region43
              $region42: #{cnn_critic_forward.5} parent=27 // pred_region
                loop: start=0, step=1, limit=1
                $region44: #{cnn_critic_forward.5} parent=42 // loop_pre_header
                  _
                $region45: #{cnn_critic_forward.5} parent=42 // loop_header
                  %s211 = sphi 0, %s215
                  %p212 = scmp.ge.s32.totalorder %s211, 1
                  %s216 = sphi %s87, %s87
                  %s217 = sphi %s84, %s84
                $region46: #{cnn_critic_forward.5} parent=42 // loop_header_branch
                  %214 = sbr.rel (%p212) target = $region50
                $region47: #{cnn_critic_forward.5} parent=42 // loop_body
                  %v218 = vld [vmem:[%s216] sm:$0xff]
                  %219 = vst [vmem:[%s217] sm:$0xff] %v218
                  %v220 = vld [vmem:[%s216 + $0x8] sm:$0xff]
                  %221 = vst [vmem:[%s217 + $0x8] sm:$0xff] %v220
                  %v222 = vld [vmem:[%s216 + $0x10] sm:$0xff]
                  %223 = vst [vmem:[%s217 + $0x10] sm:$0xff] %v222
                  %v224 = vld [vmem:[%s216 + $0x18] sm:$0xff]
                  %225 = vst [vmem:[%s217 + $0x18] sm:$0xff] %v224
                  %v226 = vld [vmem:[%s216 + $0x20] sm:$0xff]
                  %227 = vst [vmem:[%s217 + $0x20] sm:$0xff] %v226
                  %v228 = vld [vmem:[%s216 + $0x28] sm:$0xff]
                  %229 = vst [vmem:[%s217 + $0x28] sm:$0xff] %v228
                  %v230 = vld [vmem:[%s216 + $0x30] sm:$0xff]
                  %231 = vst [vmem:[%s217 + $0x30] sm:$0xff] %v230
                  %v232 = vld [vmem:[%s216 + $0x38] sm:$0xff]
                  %233 = vst [vmem:[%s217 + $0x38] sm:$0xff] %v232
                  %v234 = vld [vmem:[%s216 + $0x40] sm:$0xff]
                  %235 = vst [vmem:[%s217 + $0x40] sm:$0xff] %v234
                  %v236 = vld [vmem:[%s216 + $0x48] sm:$0xff]
                  %237 = vst [vmem:[%s217 + $0x48] sm:$0xff] %v236
                  %v238 = vld [vmem:[%s216 + $0x50] sm:$0xff]
                  %239 = vst [vmem:[%s217 + $0x50] sm:$0xff] %v238
                  %v240 = vld [vmem:[%s216 + $0x58] sm:$0xff]
                  %241 = vst [vmem:[%s217 + $0x58] sm:$0xff] %v240
                  %v242 = vld [vmem:[%s216 + $0x60] sm:$0xff]
                  %243 = vst [vmem:[%s217 + $0x60] sm:$0xff] %v242
                  %v244 = vld [vmem:[%s216 + $0xd0] sm:$0xff]
                  %245 = vst [vmem:[%s217 + $0x68] sm:$0xff] %v244
                  %v246 = vld [vmem:[%s216 + $0xd8] sm:$0xff]
                  %247 = vst [vmem:[%s217 + $0x70] sm:$0xff] %v246
                  %v248 = vld [vmem:[%s216 + $0xe0] sm:$0xff]
                  %249 = vst [vmem:[%s217 + $0x78] sm:$0xff] %v248
                  %v250 = vld [vmem:[%s216 + $0xe8] sm:$0xff]
                  %251 = vst [vmem:[%s217 + $0x80] sm:$0xff] %v250
                  %v252 = vld [vmem:[%s216 + $0xf0] sm:$0xff]
                  %253 = vst [vmem:[%s217 + $0x88] sm:$0xff] %v252
                  %v254 = vld [vmem:[%s216 + $0xf8] sm:$0xff]
                  %255 = vst [vmem:[%s217 + $0x90] sm:$0xff] %v254
                  %v256 = vld [vmem:[%s216 + $0x100] sm:$0xff]
                  %257 = vst [vmem:[%s217 + $0x98] sm:$0xff] %v256
                  %v258 = vld [vmem:[%s216 + $0x108] sm:$0xff]
                  %259 = vst [vmem:[%s217 + $0xa0] sm:$0xff] %v258
                  %v260 = vld [vmem:[%s216 + $0x110] sm:$0xff]
                  %261 = vst [vmem:[%s217 + $0xa8] sm:$0xff] %v260
                  %v262 = vld [vmem:[%s216 + $0x118] sm:$0xff]
                  %263 = vst [vmem:[%s217 + $0xb0] sm:$0xff] %v262
                  %v264 = vld [vmem:[%s216 + $0x120] sm:$0xff]
                  %265 = vst [vmem:[%s217 + $0xb8] sm:$0xff] %v264
                  %v266 = vld [vmem:[%s216 + $0x128] sm:$0xff]
                  %267 = vst [vmem:[%s217 + $0xc0] sm:$0xff] %v266
                  %v268 = vld [vmem:[%s216 + $0x130] sm:$0xff]
                  %269 = vst [vmem:[%s217 + $0xc8] sm:$0xff] %v268
                  %v270 = vld [vmem:[%s216 + $0x1a0] sm:$0xff]
                  %271 = vst [vmem:[%s217 + $0xd0] sm:$0xff] %v270
                  %v272 = vld [vmem:[%s216 + $0x1a8] sm:$0xff]
                  %273 = vst [vmem:[%s217 + $0xd8] sm:$0xff] %v272
                  %v274 = vld [vmem:[%s216 + $0x1b0] sm:$0xff]
                  %275 = vst [vmem:[%s217 + $0xe0] sm:$0xff] %v274
                  %v276 = vld [vmem:[%s216 + $0x1b8] sm:$0xff]
                  %277 = vst [vmem:[%s217 + $0xe8] sm:$0xff] %v276
                  %v278 = vld [vmem:[%s216 + $0x1c0] sm:$0xff]
                  %279 = vst [vmem:[%s217 + $0xf0] sm:$0xff] %v278
                  %v280 = vld [vmem:[%s216 + $0x1c8] sm:$0xff]
                  %281 = vst [vmem:[%s217 + $0xf8] sm:$0xff] %v280
                  %v282 = vld [vmem:[%s216 + $0x1d0] sm:$0xff]
                  %283 = vst [vmem:[%s217 + $0x100] sm:$0xff] %v282
                  %v284 = vld [vmem:[%s216 + $0x1d8] sm:$0xff]
                  %285 = vst [vmem:[%s217 + $0x108] sm:$0xff] %v284
                  %v286 = vld [vmem:[%s216 + $0x1e0] sm:$0xff]
                  %287 = vst [vmem:[%s217 + $0x110] sm:$0xff] %v286
                  %v288 = vld [vmem:[%s216 + $0x1e8] sm:$0xff]
                  %289 = vst [vmem:[%s217 + $0x118] sm:$0xff] %v288
                  %v290 = vld [vmem:[%s216 + $0x1f0] sm:$0xff]
                  %291 = vst [vmem:[%s217 + $0x120] sm:$0xff] %v290
                  %v292 = vld [vmem:[%s216 + $0x1f8] sm:$0xff]
                  %293 = vst [vmem:[%s217 + $0x128] sm:$0xff] %v292
                  %v294 = vld [vmem:[%s216 + $0x200] sm:$0xff]
                  %295 = vst [vmem:[%s217 + $0x130] sm:$0xff] %v294
                  %v296 = vld [vmem:[%s216 + $0x270] sm:$0xff]
                  %297 = vst [vmem:[%s217 + $0x138] sm:$0xff] %v296
                  %v298 = vld [vmem:[%s216 + $0x278] sm:$0xff]
                  %299 = vst [vmem:[%s217 + $0x140] sm:$0xff] %v298
                  %v300 = vld [vmem:[%s216 + $0x280] sm:$0xff]
                  %301 = vst [vmem:[%s217 + $0x148] sm:$0xff] %v300
                  %v302 = vld [vmem:[%s216 + $0x288] sm:$0xff]
                  %303 = vst [vmem:[%s217 + $0x150] sm:$0xff] %v302
                  %v304 = vld [vmem:[%s216 + $0x290] sm:$0xff]
                  %305 = vst [vmem:[%s217 + $0x158] sm:$0xff] %v304
                  %v306 = vld [vmem:[%s216 + $0x298] sm:$0xff]
                  %307 = vst [vmem:[%s217 + $0x160] sm:$0xff] %v306
                  %v308 = vld [vmem:[%s216 + $0x2a0] sm:$0xff]
                  %309 = vst [vmem:[%s217 + $0x168] sm:$0xff] %v308
                  %v310 = vld [vmem:[%s216 + $0x2a8] sm:$0xff]
                  %311 = vst [vmem:[%s217 + $0x170] sm:$0xff] %v310
                  %v312 = vld [vmem:[%s216 + $0x2b0] sm:$0xff]
                  %313 = vst [vmem:[%s217 + $0x178] sm:$0xff] %v312
                  %v314 = vld [vmem:[%s216 + $0x2b8] sm:$0xff]
                  %315 = vst [vmem:[%s217 + $0x180] sm:$0xff] %v314
                  %v316 = vld [vmem:[%s216 + $0x2c0] sm:$0xff]
                  %317 = vst [vmem:[%s217 + $0x188] sm:$0xff] %v316
                  %v318 = vld [vmem:[%s216 + $0x2c8] sm:$0xff]
                  %319 = vst [vmem:[%s217 + $0x190] sm:$0xff] %v318
                  %v320 = vld [vmem:[%s216 + $0x2d0] sm:$0xff]
                  %321 = vst [vmem:[%s217 + $0x198] sm:$0xff] %v320
                $region48: #{cnn_critic_forward.5} parent=42 // loop_footer
                  %s215 = sadd.s32 1, %s211
                $region49: #{cnn_critic_forward.5} parent=42 // loop_footer_branch
                  %210 = sbr.rel target = $region45
                $region50: #{cnn_critic_forward.5} parent=42 // loop_exit
                  _
              $region43: #{cnn_critic_forward.5} parent=27 // pred_fallthru
                _
              // Predicated region
              $region51: #{cnn_critic_forward.5} parent=27 // pred_check
                _
              $region52: #{cnn_critic_forward.5} parent=27 // pred_check_branch
                %323 = sbr.rel target = $region54
              $region53: #{cnn_critic_forward.5} parent=27 // pred_region
                _
              $region54: #{cnn_critic_forward.5} parent=27 // pred_fallthru
                _
            $region28: #{cnn_critic_forward.5} parent=23 // pred_fallthru
              _
            // Predicated region
            $region29: #{cnn_critic_forward.5} parent=23 // pred_check
              _
            $region30: #{cnn_critic_forward.5} parent=23 // pred_check_branch
              %93 = sbr.rel target = $region32
            $region31: #{cnn_critic_forward.5} parent=23 // pred_region
              %s95 = ssub.s32 256, 1
              loop: start=0, step=1, limit=1
              $region33: #{cnn_critic_forward.5} parent=31 // loop_pre_header
                _
              $region34: #{cnn_critic_forward.5} parent=31 // loop_header
                %s97 = sphi 0, %s101
                %p98 = scmp.ge.s32.totalorder %s97, 1
                %s102 = sphi %s87, %s87
                %s103 = sphi %s84, %s84
              $region35: #{cnn_critic_forward.5} parent=31 // loop_header_branch
                %100 = sbr.rel (%p98) target = $region39
              $region36: #{cnn_critic_forward.5} parent=31 // loop_body
                %v104 = vld [vmem:[%s102] sm:%s95]
                %105 = vst [vmem:[%s103] sm:%s95] %v104
                %v106 = vld [vmem:[%s102 + $0x8] sm:%s95]
                %107 = vst [vmem:[%s103 + $0x8] sm:%s95] %v106
                %v108 = vld [vmem:[%s102 + $0x10] sm:%s95]
                %109 = vst [vmem:[%s103 + $0x10] sm:%s95] %v108
                %v110 = vld [vmem:[%s102 + $0x18] sm:%s95]
                %111 = vst [vmem:[%s103 + $0x18] sm:%s95] %v110
                %v112 = vld [vmem:[%s102 + $0x20] sm:%s95]
                %113 = vst [vmem:[%s103 + $0x20] sm:%s95] %v112
                %v114 = vld [vmem:[%s102 + $0x28] sm:%s95]
                %115 = vst [vmem:[%s103 + $0x28] sm:%s95] %v114
                %v116 = vld [vmem:[%s102 + $0x30] sm:%s95]
                %117 = vst [vmem:[%s103 + $0x30] sm:%s95] %v116
                %v118 = vld [vmem:[%s102 + $0x38] sm:%s95]
                %119 = vst [vmem:[%s103 + $0x38] sm:%s95] %v118
                %v120 = vld [vmem:[%s102 + $0x40] sm:%s95]
                %121 = vst [vmem:[%s103 + $0x40] sm:%s95] %v120
                %v122 = vld [vmem:[%s102 + $0x48] sm:%s95]
                %123 = vst [vmem:[%s103 + $0x48] sm:%s95] %v122
                %v124 = vld [vmem:[%s102 + $0x50] sm:%s95]
                %125 = vst [vmem:[%s103 + $0x50] sm:%s95] %v124
                %v126 = vld [vmem:[%s102 + $0x58] sm:%s95]
                %127 = vst [vmem:[%s103 + $0x58] sm:%s95] %v126
                %v128 = vld [vmem:[%s102 + $0x60] sm:%s95]
                %129 = vst [vmem:[%s103 + $0x60] sm:%s95] %v128
                %v130 = vld [vmem:[%s102 + $0xd0] sm:%s95]
                %131 = vst [vmem:[%s103 + $0x68] sm:%s95] %v130
                %v132 = vld [vmem:[%s102 + $0xd8] sm:%s95]
                %133 = vst [vmem:[%s103 + $0x70] sm:%s95] %v132
                %v134 = vld [vmem:[%s102 + $0xe0] sm:%s95]
                %135 = vst [vmem:[%s103 + $0x78] sm:%s95] %v134
                %v136 = vld [vmem:[%s102 + $0xe8] sm:%s95]
                %137 = vst [vmem:[%s103 + $0x80] sm:%s95] %v136
                %v138 = vld [vmem:[%s102 + $0xf0] sm:%s95]
                %139 = vst [vmem:[%s103 + $0x88] sm:%s95] %v138
                %v140 = vld [vmem:[%s102 + $0xf8] sm:%s95]
                %141 = vst [vmem:[%s103 + $0x90] sm:%s95] %v140
                %v142 = vld [vmem:[%s102 + $0x100] sm:%s95]
                %143 = vst [vmem:[%s103 + $0x98] sm:%s95] %v142
                %v144 = vld [vmem:[%s102 + $0x108] sm:%s95]
                %145 = vst [vmem:[%s103 + $0xa0] sm:%s95] %v144
                %v146 = vld [vmem:[%s102 + $0x110] sm:%s95]
                %147 = vst [vmem:[%s103 + $0xa8] sm:%s95] %v146
                %v148 = vld [vmem:[%s102 + $0x118] sm:%s95]
                %149 = vst [vmem:[%s103 + $0xb0] sm:%s95] %v148
                %v150 = vld [vmem:[%s102 + $0x120] sm:%s95]
                %151 = vst [vmem:[%s103 + $0xb8] sm:%s95] %v150
                %v152 = vld [vmem:[%s102 + $0x128] sm:%s95]
                %153 = vst [vmem:[%s103 + $0xc0] sm:%s95] %v152
                %v154 = vld [vmem:[%s102 + $0x130] sm:%s95]
                %155 = vst [vmem:[%s103 + $0xc8] sm:%s95] %v154
                %v156 = vld [vmem:[%s102 + $0x1a0] sm:%s95]
                %157 = vst [vmem:[%s103 + $0xd0] sm:%s95] %v156
                %v158 = vld [vmem:[%s102 + $0x1a8] sm:%s95]
                %159 = vst [vmem:[%s103 + $0xd8] sm:%s95] %v158
                %v160 = vld [vmem:[%s102 + $0x1b0] sm:%s95]
                %161 = vst [vmem:[%s103 + $0xe0] sm:%s95] %v160
                %v162 = vld [vmem:[%s102 + $0x1b8] sm:%s95]
                %163 = vst [vmem:[%s103 + $0xe8] sm:%s95] %v162
                %v164 = vld [vmem:[%s102 + $0x1c0] sm:%s95]
                %165 = vst [vmem:[%s103 + $0xf0] sm:%s95] %v164
                %v166 = vld [vmem:[%s102 + $0x1c8] sm:%s95]
                %167 = vst [vmem:[%s103 + $0xf8] sm:%s95] %v166
                %v168 = vld [vmem:[%s102 + $0x1d0] sm:%s95]
                %169 = vst [vmem:[%s103 + $0x100] sm:%s95] %v168
                %v170 = vld [vmem:[%s102 + $0x1d8] sm:%s95]
                %171 = vst [vmem:[%s103 + $0x108] sm:%s95] %v170
                %v172 = vld [vmem:[%s102 + $0x1e0] sm:%s95]
                %173 = vst [vmem:[%s103 + $0x110] sm:%s95] %v172
                %v174 = vld [vmem:[%s102 + $0x1e8] sm:%s95]
                %175 = vst [vmem:[%s103 + $0x118] sm:%s95] %v174
                %v176 = vld [vmem:[%s102 + $0x1f0] sm:%s95]
                %177 = vst [vmem:[%s103 + $0x120] sm:%s95] %v176
                %v178 = vld [vmem:[%s102 + $0x1f8] sm:%s95]
                %179 = vst [vmem:[%s103 + $0x128] sm:%s95] %v178
                %v180 = vld [vmem:[%s102 + $0x200] sm:%s95]
                %181 = vst [vmem:[%s103 + $0x130] sm:%s95] %v180
                %v182 = vld [vmem:[%s102 + $0x270] sm:%s95]
                %183 = vst [vmem:[%s103 + $0x138] sm:%s95] %v182
                %v184 = vld [vmem:[%s102 + $0x278] sm:%s95]
                %185 = vst [vmem:[%s103 + $0x140] sm:%s95] %v184
                %v186 = vld [vmem:[%s102 + $0x280] sm:%s95]
                %187 = vst [vmem:[%s103 + $0x148] sm:%s95] %v186
                %v188 = vld [vmem:[%s102 + $0x288] sm:%s95]
                %189 = vst [vmem:[%s103 + $0x150] sm:%s95] %v188
                %v190 = vld [vmem:[%s102 + $0x290] sm:%s95]
                %191 = vst [vmem:[%s103 + $0x158] sm:%s95] %v190
                %v192 = vld [vmem:[%s102 + $0x298] sm:%s95]
                %193 = vst [vmem:[%s103 + $0x160] sm:%s95] %v192
                %v194 = vld [vmem:[%s102 + $0x2a0] sm:%s95]
                %195 = vst [vmem:[%s103 + $0x168] sm:%s95] %v194
                %v196 = vld [vmem:[%s102 + $0x2a8] sm:%s95]
                %197 = vst [vmem:[%s103 + $0x170] sm:%s95] %v196
                %v198 = vld [vmem:[%s102 + $0x2b0] sm:%s95]
                %199 = vst [vmem:[%s103 + $0x178] sm:%s95] %v198
                %v200 = vld [vmem:[%s102 + $0x2b8] sm:%s95]
                %201 = vst [vmem:[%s103 + $0x180] sm:%s95] %v200
                %v202 = vld [vmem:[%s102 + $0x2c0] sm:%s95]
                %203 = vst [vmem:[%s103 + $0x188] sm:%s95] %v202
                %v204 = vld [vmem:[%s102 + $0x2c8] sm:%s95]
                %205 = vst [vmem:[%s103 + $0x190] sm:%s95] %v204
                %v206 = vld [vmem:[%s102 + $0x2d0] sm:%s95]
                %207 = vst [vmem:[%s103 + $0x198] sm:%s95] %v206
              $region37: #{cnn_critic_forward.5} parent=31 // loop_footer
                %s101 = sadd.s32 1, %s97
              $region38: #{cnn_critic_forward.5} parent=31 // loop_footer_branch
                %96 = sbr.rel target = $region34
              $region39: #{cnn_critic_forward.5} parent=31 // loop_exit
                _
            $region32: #{cnn_critic_forward.5} parent=23 // pred_fallthru
              _
          $region24: #{cnn_critic_forward.5} parent=19 // pred_fallthru
            _
          %324 = vnop
        $region20: #{cnn_critic_forward.5} parent=15 // pred_fallthru
          _
      $region16: #{cnn_critic_forward.5} parent=5 // pred_fallthru
        _
      %p325 = scmp.le.s32.totalorder 1, %s7
      %p326 = scmp.lt.s32.totalorder %s7, 3
      %p327 = pnand %p325, %p326
      %p328 = pneg %p327
      // Predicated region
      $region55: #{cnn_critic_forward.5} parent=5 // pred_check
        _
      $region56: #{cnn_critic_forward.5} parent=5 // pred_check_branch
        %330 = sbr.rel (%p327) target = $region58
      $region57: #{cnn_critic_forward.5} parent=5 // pred_region
        %s331 = ssub.s32 %s7, 1
        %s332 = sand.u32 %s20, 1
        %s333 = sand.u32 %s20, 1
        %s334 = smul.addr %s333, 416
        %s335 = scalar_lea.vmem [#allocation2], %s334
        // Predicated region
        $region59: #{cnn_critic_forward.5} parent=57 // pred_check
          %p336 = pneg %p33
        $region60: #{cnn_critic_forward.5} parent=57 // pred_check_branch
          %338 = sbr.rel (%p336) target = $region62
        $region61: #{cnn_critic_forward.5} parent=57 // pred_region
          _
        $region62: #{cnn_critic_forward.5} parent=57 // pred_fallthru
          _
        %s339 = sand.u32 %s20, 1
        %s340 = sand.u32 %s20, 1
        %s341 = smul.addr %s340, 416
        %s342 = scalar_lea.vmem [#allocation2], %s341
        %p343 = pneg %p33
        %p344 = pneg %p30
        %p345 = pneg %p59
        %p346 = pneg %p56
        %p347 = scmp.lt.s32.totalorder %s12, 1
        %s348 = scalar_select %p347, %s12, 1
        %s349 = smul.addr %s348, 13
        %s350 = smul.addr %s349, 8
        %s351 = scalar_lea.vmem %s1, %s350
        %p352 = scmp.lt.s32.totalorder %s12, 1
        %s353 = scalar_select %p352, %s12, 1
        %s354 = smul.addr %s353, 13
        %s355 = smul.addr %s354, 8
        %s356 = scalar_lea.vmem %s1, %s355
        %v357 = vld [vmem:[%s335] sm:$0xff]
        %v358 = vld [vmem:[%s335 + $0x8] sm:$0xff]
        %v359 = vld [vmem:[%s335 + $0x10] sm:$0xff]
        %v360 = vld [vmem:[%s335 + $0x18] sm:$0xff]
        %v361 = vld [vmem:[%s335 + $0x20] sm:$0xff]
        %v362 = vld [vmem:[%s335 + $0x28] sm:$0xff]
        %v363 = vld [vmem:[%s335 + $0x30] sm:$0xff]
        %v364 = vld [vmem:[%s335 + $0x38] sm:$0xff]
        %v365 = vld [vmem:[%s335 + $0x40] sm:$0xff]
        %v366 = vld [vmem:[%s335 + $0x48] sm:$0xff]
        %v367 = vld [vmem:[%s335 + $0x50] sm:$0xff]
        %v368 = vld [vmem:[%s335 + $0x58] sm:$0xff]
        %v369 = vld [vmem:[%s335 + $0x60] sm:$0x7]
        %s370 = scalar_lea.vmem %s335, 104 [#allocation2]
        %v371 = vld [vmem:[%s370] sm:$0xff]
        %v372 = vld [vmem:[%s370 + $0x8] sm:$0xff]
        %v373 = vld [vmem:[%s370 + $0x10] sm:$0xff]
        %v374 = vld [vmem:[%s370 + $0x18] sm:$0xff]
        %v375 = vld [vmem:[%s370 + $0x20] sm:$0xff]
        %v376 = vld [vmem:[%s370 + $0x28] sm:$0xff]
        %v377 = vld [vmem:[%s370 + $0x30] sm:$0xff]
        %v378 = vld [vmem:[%s370 + $0x38] sm:$0xff]
        %v379 = vld [vmem:[%s370 + $0x40] sm:$0xff]
        %v380 = vld [vmem:[%s370 + $0x48] sm:$0xff]
        %v381 = vld [vmem:[%s370 + $0x50] sm:$0xff]
        %v382 = vld [vmem:[%s370 + $0x58] sm:$0xff]
        %v383 = vld [vmem:[%s370 + $0x60] sm:$0x7]
        %v384 = vmax.f32 %v357, %v371
        %v385 = vmax.f32 %v358, %v372
        %v386 = vmax.f32 %v359, %v373
        %v387 = vmax.f32 %v360, %v374
        %v388 = vmax.f32 %v361, %v375
        %v389 = vmax.f32 %v362, %v376
        %v390 = vmax.f32 %v363, %v377
        %v391 = vmax.f32 %v364, %v378
        %v392 = vmax.f32 %v365, %v379
        %v393 = vmax.f32 %v366, %v380
        %v394 = vmax.f32 %v367, %v381
        %v395 = vmax.f32 %v368, %v382
        %v396 = vmax.f32 %v369, %v383
        %s397 = scalar_lea.vmem %s335, 208 [#allocation2]
        %v398 = vld [vmem:[%s397] sm:$0xff]
        %v399 = vld [vmem:[%s397 + $0x8] sm:$0xff]
        %v400 = vld [vmem:[%s397 + $0x10] sm:$0xff]
        %v401 = vld [vmem:[%s397 + $0x18] sm:$0xff]
        %v402 = vld [vmem:[%s397 + $0x20] sm:$0xff]
        %v403 = vld [vmem:[%s397 + $0x28] sm:$0xff]
        %v404 = vld [vmem:[%s397 + $0x30] sm:$0xff]
        %v405 = vld [vmem:[%s397 + $0x38] sm:$0xff]
        %v406 = vld [vmem:[%s397 + $0x40] sm:$0xff]
        %v407 = vld [vmem:[%s397 + $0x48] sm:$0xff]
        %v408 = vld [vmem:[%s397 + $0x50] sm:$0xff]
        %v409 = vld [vmem:[%s397 + $0x58] sm:$0xff]
        %v410 = vld [vmem:[%s397 + $0x60] sm:$0x7]
        %s411 = scalar_lea.vmem %s335, 312 [#allocation2]
        %v412 = vld [vmem:[%s411] sm:$0xff]
        %v413 = vld [vmem:[%s411 + $0x8] sm:$0xff]
        %v414 = vld [vmem:[%s411 + $0x10] sm:$0xff]
        %v415 = vld [vmem:[%s411 + $0x18] sm:$0xff]
        %v416 = vld [vmem:[%s411 + $0x20] sm:$0xff]
        %v417 = vld [vmem:[%s411 + $0x28] sm:$0xff]
        %v418 = vld [vmem:[%s411 + $0x30] sm:$0xff]
        %v419 = vld [vmem:[%s411 + $0x38] sm:$0xff]
        %v420 = vld [vmem:[%s411 + $0x40] sm:$0xff]
        %v421 = vld [vmem:[%s411 + $0x48] sm:$0xff]
        %v422 = vld [vmem:[%s411 + $0x50] sm:$0xff]
        %v423 = vld [vmem:[%s411 + $0x58] sm:$0xff]
        %v424 = vld [vmem:[%s411 + $0x60] sm:$0x7]
        %v425 = vmax.f32 %v398, %v412
        %v426 = vmax.f32 %v399, %v413
        %v427 = vmax.f32 %v400, %v414
        %v428 = vmax.f32 %v401, %v415
        %v429 = vmax.f32 %v402, %v416
        %v430 = vmax.f32 %v403, %v417
        %v431 = vmax.f32 %v404, %v418
        %v432 = vmax.f32 %v405, %v419
        %v433 = vmax.f32 %v406, %v420
        %v434 = vmax.f32 %v407, %v421
        %v435 = vmax.f32 %v408, %v422
        %v436 = vmax.f32 %v409, %v423
        %v437 = vmax.f32 %v410, %v424
        %v438 = vmax.f32 %v384, %v425
        %v439 = vmax.f32 %v385, %v426
        %v440 = vmax.f32 %v386, %v427
        %v441 = vmax.f32 %v387, %v428
        %v442 = vmax.f32 %v388, %v429
        %v443 = vmax.f32 %v389, %v430
        %v444 = vmax.f32 %v390, %v431
        %v445 = vmax.f32 %v391, %v432
        %v446 = vmax.f32 %v392, %v433
        %v447 = vmax.f32 %v393, %v434
        %v448 = vmax.f32 %v394, %v435
        %v449 = vmax.f32 %v395, %v436
        %v450 = vmax.f32 %v396, %v437
        %451 = vst [vmem:[%s356] sm:$0xff] %v438
        %452 = vst [vmem:[%s356 + $0x8] sm:$0xff] %v439
        %453 = vst [vmem:[%s356 + $0x10] sm:$0xff] %v440
        %454 = vst [vmem:[%s356 + $0x18] sm:$0xff] %v441
        %455 = vst [vmem:[%s356 + $0x20] sm:$0xff] %v442
        %456 = vst [vmem:[%s356 + $0x28] sm:$0xff] %v443
        %457 = vst [vmem:[%s356 + $0x30] sm:$0xff] %v444
        %458 = vst [vmem:[%s356 + $0x38] sm:$0xff] %v445
        %459 = vst [vmem:[%s356 + $0x40] sm:$0xff] %v446
        %460 = vst [vmem:[%s356 + $0x48] sm:$0xff] %v447
        %461 = vst [vmem:[%s356 + $0x50] sm:$0xff] %v448
        %462 = vst [vmem:[%s356 + $0x58] sm:$0xff] %v449
        %463 = vst [vmem:[%s356 + $0x60] sm:$0x7] %v450
        %p464 = scmp.lt.s32.totalorder %s12, 1
        %s465 = scalar_select %p464, %s12, 1
        %s466 = smul.addr %s465, 13
        %s467 = smul.addr %s466, 8
        %s468 = scalar_lea.vmem %s1, %s467
        // Predicated region
        $region63: #{cnn_critic_forward.5} parent=57 // pred_check
          %p469 = pneg %p56
        $region64: #{cnn_critic_forward.5} parent=57 // pred_check_branch
          %471 = sbr.rel (%p469) target = $region66
        $region65: #{cnn_critic_forward.5} parent=57 // pred_region
          _
        $region66: #{cnn_critic_forward.5} parent=57 // pred_fallthru
          _
      $region58: #{cnn_critic_forward.5} parent=5 // pred_fallthru
        _
      %p472 = scmp.le.s32.totalorder 2, %s7
      // Predicated region
      $region67: #{cnn_critic_forward.5} parent=5 // pred_check
        %p473 = pneg %p472
      $region68: #{cnn_critic_forward.5} parent=5 // pred_check_branch
        %475 = sbr.rel (%p473) target = $region70
      $region69: #{cnn_critic_forward.5} parent=5 // pred_region
        %s476 = ssub.s32 %s7, 2
        // Predicated region
        $region71: #{cnn_critic_forward.5} parent=69 // pred_check
          %p477 = pneg %p62
        $region72: #{cnn_critic_forward.5} parent=69 // pred_check_branch
          %479 = sbr.rel (%p477) target = $region74
        $region73: #{cnn_critic_forward.5} parent=69 // pred_region
          %p480 = scmp.lt.s32.totalorder %s13, 1
          %s481 = scalar_select %p480, %s13, 1
          %s482 = smul.addr %s481, 13
          %s483 = smul.addr %s482, 8
          %s484 = scalar_lea.vmem %s1, %s483
        $region74: #{cnn_critic_forward.5} parent=69 // pred_fallthru
          _
      $region70: #{cnn_critic_forward.5} parent=5 // pred_fallthru
        _
    $region6: #{cnn_critic_forward.5} parent=1 // loop_footer
      %s11 = sadd.s32 1, %s7
    $region7: #{cnn_critic_forward.5} parent=1 // loop_footer_branch
      %6 = sbr.rel target = $region3
    $region8: #{cnn_critic_forward.5} parent=1 // loop_exit
      _

// kernel: cnn_critic_forward.6
$region0: #{cnn_critic_forward.6}
  #allocation0 [shape = 'u32[]', space=smem, size = 0x4, offset = 0x4, fixed_abs, tag = 'smem constant byte address 0x4 - core index']
  #allocation1 [shape = 'u32[144,128]{1,0:T(1,128)}', space=vmem, size = 0x12000, scoped, tag = 'internal scratch']
  %s0 = inlined_call_operand.vmem [shape: f32[160,512], index: 0, kind: input, shape index: {}]
  %s1 = inlined_call_operand.vmem [shape: f32[512,64], index: 1, kind: input, shape index: {}]
  %s2 = inlined_call_operand.vmem [shape: f32[1,64], index: 2, kind: input, shape index: {}]
  %s3 = inlined_call_operand.vmem [shape: f32[160,64], index: 3, kind: output, shape index: {}]
  %s4 = sld [smem:[#allocation0]]
  $region45: #{cnn_critic_forward.6} parent=0
    _
  %s6 = ssub.s32 1, %s4
  %s7 = scalar_select 0, %s6, %s4
  loop: start=0, step=1, limit=4
  $region2: #{cnn_critic_forward.6} parent=0 // loop_pre_header
    _
  $region3: #{cnn_critic_forward.6} parent=0 // loop_header
    %s9 = sphi 0, %s13
    %p10 = scmp.ge.s32.totalorder %s9, 4
    %s19 = sphi 0, %s21
    %s22 = sphi 0, %s19
    %s23 = sphi 0, %s22
    %s39 = sphi 0, %s23
    %s43 = sphi 0, %s43
    %s45 = sphi 0, %s43
    %s46 = sphi 0, %s45
    %s60 = sphi 0, %s46
    %s64 = sphi 0, %s64
    %s66 = sphi 0, %s64
    %s67 = sphi 0, %s66
    %s81 = sphi 0, %s67
    %s87 = sphi 0, %s89
    %s90 = sphi 0, %s87
    %s91 = sphi 0, %s90
    %s107 = sphi 0, %s91
  $region4: #{cnn_critic_forward.6} parent=0 // loop_header_branch
    %12 = sbr.rel (%p10) target = $region8
  $region5: #{cnn_critic_forward.6} parent=0 // loop_body
    %s14 = ssub.s32 %s9, 1
    %s15 = ssub.s32 %s9, 2
    %s16 = sadd.s32 %s9, 1
    %s17 = ssub.s32 %s9, %s16
    %p18 = scmp.eq.s32.totalorder %s17, 0
    %s20 = sadd.s32 %s19, 1
    %s21 = scalar_select %p18, %s19, %s20
    %p24 = pneg %p18
    %p25 = scmp.eq.s32.totalorder %s9, 1
    %p26 = por %p24, %p25
    %p27 = scmp.ne.s32.totalorder %s19, %s22
    %p28 = scmp.eq.s32.totalorder %s9, 0
    %p29 = por %p27, %p28
    %p30 = scmp.ne.s32.totalorder %s19, %s22
    %p31 = scmp.eq.s32.totalorder %s14, 1
    %p32 = por %p30, %p31
    %p33 = scmp.ne.s32.totalorder %s22, %s23
    %p34 = scmp.eq.s32.totalorder %s14, 0
    %p35 = por %p33, %p34
    %p36 = scmp.ne.s32.totalorder %s22, %s23
    %p37 = scmp.eq.s32.totalorder %s15, 1
    %p38 = por %p36, %p37
    %p40 = scmp.ne.s32.totalorder %s23, %s39
    %p41 = scmp.eq.s32.totalorder %s15, 0
    %p42 = por %p40, %p41
    %s44 = sadd.s32 %s43, 1
    %p47 = scmp.eq.s32.totalorder %s9, 1
    %p48 = scmp.ne.s32.totalorder %s43, %s45
    %p49 = scmp.eq.s32.totalorder %s9, 0
    %p50 = por %p48, %p49
    %p51 = scmp.ne.s32.totalorder %s43, %s45
    %p52 = scmp.eq.s32.totalorder %s14, 1
    %p53 = por %p51, %p52
    %p54 = scmp.ne.s32.totalorder %s45, %s46
    %p55 = scmp.eq.s32.totalorder %s14, 0
    %p56 = por %p54, %p55
    %p57 = scmp.ne.s32.totalorder %s45, %s46
    %p58 = scmp.eq.s32.totalorder %s15, 1
    %p59 = por %p57, %p58
    %p61 = scmp.ne.s32.totalorder %s46, %s60
    %p62 = scmp.eq.s32.totalorder %s15, 0
    %p63 = por %p61, %p62
    %s65 = sadd.s32 %s64, 1
    %p68 = scmp.eq.s32.totalorder %s9, 1
    %p69 = scmp.ne.s32.totalorder %s64, %s66
    %p70 = scmp.eq.s32.totalorder %s9, 0
    %p71 = por %p69, %p70
    %p72 = scmp.ne.s32.totalorder %s64, %s66
    %p73 = scmp.eq.s32.totalorder %s14, 1
    %p74 = por %p72, %p73
    %p75 = scmp.ne.s32.totalorder %s66, %s67
    %p76 = scmp.eq.s32.totalorder %s14, 0
    %p77 = por %p75, %p76
    %p78 = scmp.ne.s32.totalorder %s66, %s67
    %p79 = scmp.eq.s32.totalorder %s15, 1
    %p80 = por %p78, %p79
    %p82 = scmp.ne.s32.totalorder %s67, %s81
    %p83 = scmp.eq.s32.totalorder %s15, 0
    %p84 = por %p82, %p83
    %s85 = ssub.s32 %s9, %s16
    %p86 = scmp.eq.s32.totalorder %s85, 0
    %s88 = sadd.s32 %s87, 1
    %s89 = scalar_select %p86, %s87, %s88
    %p92 = pneg %p86
    %p93 = scmp.eq.s32.totalorder %s9, 1
    %p94 = por %p92, %p93
    %p95 = scmp.ne.s32.totalorder %s87, %s90
    %p96 = scmp.eq.s32.totalorder %s9, 0
    %p97 = por %p95, %p96
    %p98 = scmp.ne.s32.totalorder %s87, %s90
    %p99 = scmp.eq.s32.totalorder %s14, 1
    %p100 = por %p98, %p99
    %p101 = scmp.ne.s32.totalorder %s90, %s91
    %p102 = scmp.eq.s32.totalorder %s14, 0
    %p103 = por %p101, %p102
    %p104 = scmp.ne.s32.totalorder %s90, %s91
    %p105 = scmp.eq.s32.totalorder %s15, 1
    %p106 = por %p104, %p105
    %p108 = scmp.ne.s32.totalorder %s91, %s107
    %p109 = scmp.eq.s32.totalorder %s15, 0
    %p110 = por %p108, %p109
    %p111 = scmp.le.s32.totalorder 1, %s9
    %p112 = scmp.lt.s32.totalorder %s9, 3
    %p113 = pnand %p111, %p112
    %p114 = pneg %p113
    // Predicated region
    $region9: #{cnn_critic_forward.6} parent=5 // pred_check
      _
    $region10: #{cnn_critic_forward.6} parent=5 // pred_check_branch
      %116 = sbr.rel (%p113) target = $region12
    $region11: #{cnn_critic_forward.6} parent=5 // pred_region
      %s117 = ssub.s32 %s9, 1
      // Predicated region
      $region13: #{cnn_critic_forward.6} parent=11 // pred_check
        %p118 = pneg %p56
      $region14: #{cnn_critic_forward.6} parent=11 // pred_check_branch
        %120 = sbr.rel (%p118) target = $region16
      $region15: #{cnn_critic_forward.6} parent=11 // pred_region
        _
      $region16: #{cnn_critic_forward.6} parent=11 // pred_fallthru
        _
      // Predicated region
      $region17: #{cnn_critic_forward.6} parent=11 // pred_check
        %p121 = pneg %p77
      $region18: #{cnn_critic_forward.6} parent=11 // pred_check_branch
        %123 = sbr.rel (%p121) target = $region20
      $region19: #{cnn_critic_forward.6} parent=11 // pred_region
        _
      $region20: #{cnn_critic_forward.6} parent=11 // pred_fallthru
        _
    $region12: #{cnn_critic_forward.6} parent=5 // pred_fallthru
      _
    %p124 = scmp.lt.s32.totalorder %s9, 2
    // Predicated region
    $region21: #{cnn_critic_forward.6} parent=5 // pred_check
      %p125 = pneg %p124
    $region22: #{cnn_critic_forward.6} parent=5 // pred_check_branch
      %127 = sbr.rel (%p125) target = $region24
    $region23: #{cnn_critic_forward.6} parent=5 // pred_region
      // Predicated region
      $region25: #{cnn_critic_forward.6} parent=23 // pred_check
        %p128 = pneg %p29
      $region26: #{cnn_critic_forward.6} parent=23 // pred_check_branch
        %130 = sbr.rel (%p128) target = $region28
      $region27: #{cnn_critic_forward.6} parent=23 // pred_region
        %s131 = smul.u32 10, %s9
        %p132 = scmp.lt.s32.totalorder %s131, 19
        %s133 = scalar_select %p132, %s131, 19
        %s134 = smul.addr %s133, 4
        %s135 = smul.addr %s134, 8
        %s136 = scalar_lea.vmem %s0, %s135
        %s137 = smul.u32 10, %s9
      $region28: #{cnn_critic_forward.6} parent=23 // pred_fallthru
        _
    $region24: #{cnn_critic_forward.6} parent=5 // pred_fallthru
      _
    %p138 = scmp.le.s32.totalorder 1, %s9
    %p139 = scmp.lt.s32.totalorder %s9, 3
    %p140 = pnand %p138, %p139
    %p141 = pneg %p140
    // Predicated region
    $region29: #{cnn_critic_forward.6} parent=5 // pred_check
      _
    $region30: #{cnn_critic_forward.6} parent=5 // pred_check_branch
      %143 = sbr.rel (%p140) target = $region32
    $region31: #{cnn_critic_forward.6} parent=5 // pred_region
      %s144 = ssub.s32 %s9, 1
      %s145 = smul.u32 10, %s14
      %p146 = scmp.lt.s32.totalorder %s145, 19
      %s147 = scalar_select %p146, %s145, 19
      %s148 = smul.addr %s147, 4
      %s149 = smul.addr %s148, 8
      %s150 = scalar_lea.vmem %s0, %s149
      %p151 = pneg %p35
      %p152 = pneg %p32
      %p153 = pneg %p56
      %p154 = pneg %p53
      %p155 = pneg %p77
      %p156 = pneg %p74
      %p157 = pneg %p103
      %p158 = pneg %p100
      %s159 = smul.u32 10, %s14
      %p160 = scmp.lt.s32.totalorder %s159, 19
      %s161 = scalar_select %p160, %s159, 19
      %s162 = smul.addr %s161, 8
      %s163 = scalar_lea.vmem %s3, %s162
      %s164 = smul.u32 10, %s14
      %p165 = scmp.lt.s32.totalorder %s164, 19
      %s166 = scalar_select %p165, %s164, 19
      %s167 = smul.addr %s166, 4
      %s168 = smul.addr %s167, 8
      %s169 = scalar_lea.vmem %s0, %s168
      %s170 = smul.u32 10, %s14
      %s171 = smul.u32 10, %s14
      %p172 = scmp.lt.s32.totalorder %s171, 19
      %s173 = scalar_select %p172, %s171, 19
      %s174 = smul.addr %s173, 8
      %s175 = scalar_lea.vmem %s3, %s174
      %s176 = smul.u32 10, %s14
      %v177 = vld [vmem:[%s169] sm:$0xff]
      %v178 = vld [vmem:[%s169 + $0x8] sm:$0xff]
      %v179 = vld [vmem:[%s169 + $0x10] sm:$0xff]
      %v180 = vld [vmem:[%s169 + $0x18] sm:$0xff]
      %v181 = vld [vmem:[%s169 + $0x20] sm:$0xff]
      %v182 = vld [vmem:[%s169 + $0x28] sm:$0xff]
      %v183 = vld [vmem:[%s169 + $0x30] sm:$0xff]
      %v184 = vld [vmem:[%s169 + $0x38] sm:$0xff]
      %v185 = vld [vmem:[%s169 + $0x40] sm:$0xff]
      %v186 = vld [vmem:[%s169 + $0x48] sm:$0xff]
      %v187 = vld [vmem:[%s169 + $0x50] sm:$0xff]
      %v188 = vld [vmem:[%s169 + $0x58] sm:$0xff]
      %v189 = vld [vmem:[%s169 + $0x60] sm:$0xff]
      %v190 = vld [vmem:[%s169 + $0x68] sm:$0xff]
      %v191 = vld [vmem:[%s169 + $0x70] sm:$0xff]
      %v192 = vld [vmem:[%s169 + $0x78] sm:$0xff]
      %v193 = vld [vmem:[%s169 + $0x80] sm:$0xff]
      %v194 = vld [vmem:[%s169 + $0x88] sm:$0xff]
      %v195 = vld [vmem:[%s169 + $0x90] sm:$0xff]
      %v196 = vld [vmem:[%s169 + $0x98] sm:$0xff]
      %v197 = vld [vmem:[%s169 + $0xa0] sm:$0xff]
      %v198 = vld [vmem:[%s169 + $0xa8] sm:$0xff]
      %v199 = vld [vmem:[%s169 + $0xb0] sm:$0xff]
      %v200 = vld [vmem:[%s169 + $0xb8] sm:$0xff]
      %v201 = vld [vmem:[%s169 + $0xc0] sm:$0xff]
      %v202 = vld [vmem:[%s169 + $0xc8] sm:$0xff]
      %v203 = vld [vmem:[%s169 + $0xd0] sm:$0xff]
      %v204 = vld [vmem:[%s169 + $0xd8] sm:$0xff]
      %v205 = vld [vmem:[%s169 + $0xe0] sm:$0xff]
      %v206 = vld [vmem:[%s169 + $0xe8] sm:$0xff]
      %v207 = vld [vmem:[%s169 + $0xf0] sm:$0xff]
      %v208 = vld [vmem:[%s169 + $0xf8] sm:$0xff]
      %v209 = vld [vmem:[%s169 + $0x100] sm:$0xff]
      %v210 = vld [vmem:[%s169 + $0x108] sm:$0xff]
      %v211 = vld [vmem:[%s169 + $0x110] sm:$0xff]
      %v212 = vld [vmem:[%s169 + $0x118] sm:$0xff]
      %v213 = vld [vmem:[%s169 + $0x120] sm:$0xff]
      %v214 = vld [vmem:[%s169 + $0x128] sm:$0xff]
      %v215 = vld [vmem:[%s169 + $0x130] sm:$0xff]
      %v216 = vld [vmem:[%s169 + $0x138] sm:$0xff]
      %v217 = vld [vmem:[%s1] sm:$0xff]
      %v218 = vld [vmem:[%s1 + $0x8] sm:$0xff]
      %v219 = vld [vmem:[%s1 + $0x10] sm:$0xff]
      %v220 = vld [vmem:[%s1 + $0x18] sm:$0xff]
      %v221 = vld [vmem:[%s1 + $0x20] sm:$0xff]
      %v222 = vld [vmem:[%s1 + $0x28] sm:$0xff]
      %v223 = vld [vmem:[%s1 + $0x30] sm:$0xff]
      %v224 = vld [vmem:[%s1 + $0x38] sm:$0xff]
      %v225 = vld [vmem:[%s1 + $0x40] sm:$0xff]
      %v226 = vld [vmem:[%s1 + $0x48] sm:$0xff]
      %v227 = vld [vmem:[%s1 + $0x50] sm:$0xff]
      %v228 = vld [vmem:[%s1 + $0x58] sm:$0xff]
      %v229 = vld [vmem:[%s1 + $0x60] sm:$0xff]
      %v230 = vld [vmem:[%s1 + $0x68] sm:$0xff]
      %v231 = vld [vmem:[%s1 + $0x70] sm:$0xff]
      %v232 = vld [vmem:[%s1 + $0x78] sm:$0xff]
      %v233 = vld [vmem:[%s1 + $0x80] sm:$0xff]
      %v234 = vld [vmem:[%s1 + $0x88] sm:$0xff]
      %v235 = vld [vmem:[%s1 + $0x90] sm:$0xff]
      %v236 = vld [vmem:[%s1 + $0x98] sm:$0xff]
      %v237 = vld [vmem:[%s1 + $0xa0] sm:$0xff]
      %v238 = vld [vmem:[%s1 + $0xa8] sm:$0xff]
      %v239 = vld [vmem:[%s1 + $0xb0] sm:$0xff]
      %v240 = vld [vmem:[%s1 + $0xb8] sm:$0xff]
      %v241 = vld [vmem:[%s1 + $0xc0] sm:$0xff]
      %v242 = vld [vmem:[%s1 + $0xc8] sm:$0xff]
      %v243 = vld [vmem:[%s1 + $0xd0] sm:$0xff]
      %v244 = vld [vmem:[%s1 + $0xd8] sm:$0xff]
      %v245 = vld [vmem:[%s1 + $0xe0] sm:$0xff]
      %v246 = vld [vmem:[%s1 + $0xe8] sm:$0xff]
      %v247 = vld [vmem:[%s1 + $0xf0] sm:$0xff]
      %v248 = vld [vmem:[%s1 + $0xf8] sm:$0xff]
      %v249 = vld [vmem:[%s1 + $0x100] sm:$0xff]
      %v250 = vld [vmem:[%s1 + $0x108] sm:$0xff]
      %v251 = vld [vmem:[%s1 + $0x110] sm:$0xff]
      %v252 = vld [vmem:[%s1 + $0x118] sm:$0xff]
      %v253 = vld [vmem:[%s1 + $0x120] sm:$0xff]
      %v254 = vld [vmem:[%s1 + $0x128] sm:$0xff]
      %v255 = vld [vmem:[%s1 + $0x130] sm:$0xff]
      %v256 = vld [vmem:[%s1 + $0x138] sm:$0xff]
      %v257 = vld [vmem:[%s1 + $0x140] sm:$0xff]
      %v258 = vld [vmem:[%s1 + $0x148] sm:$0xff]
      %v259 = vld [vmem:[%s1 + $0x150] sm:$0xff]
      %v260 = vld [vmem:[%s1 + $0x158] sm:$0xff]
      %v261 = vld [vmem:[%s1 + $0x160] sm:$0xff]
      %v262 = vld [vmem:[%s1 + $0x168] sm:$0xff]
      %v263 = vld [vmem:[%s1 + $0x170] sm:$0xff]
      %v264 = vld [vmem:[%s1 + $0x178] sm:$0xff]
      %v265 = vld [vmem:[%s1 + $0x180] sm:$0xff]
      %v266 = vld [vmem:[%s1 + $0x188] sm:$0xff]
      %v267 = vld [vmem:[%s1 + $0x190] sm:$0xff]
      %v268 = vld [vmem:[%s1 + $0x198] sm:$0xff]
      %v269 = vld [vmem:[%s1 + $0x1a0] sm:$0xff]
      %v270 = vld [vmem:[%s1 + $0x1a8] sm:$0xff]
      %v271 = vld [vmem:[%s1 + $0x1b0] sm:$0xff]
      %v272 = vld [vmem:[%s1 + $0x1b8] sm:$0xff]
      %v273 = vld [vmem:[%s1 + $0x1c0] sm:$0xff]
      %v274 = vld [vmem:[%s1 + $0x1c8] sm:$0xff]
      %v275 = vld [vmem:[%s1 + $0x1d0] sm:$0xff]
      %v276 = vld [vmem:[%s1 + $0x1d8] sm:$0xff]
      %v277 = vld [vmem:[%s1 + $0x1e0] sm:$0xff]
      %v278 = vld [vmem:[%s1 + $0x1e8] sm:$0xff]
      %v279 = vld [vmem:[%s1 + $0x1f0] sm:$0xff]
      %v280 = vld [vmem:[%s1 + $0x1f8] sm:$0xff]
      %v281 = vld [vmem:[%s2] sm:$0x1]
      %v283 = vlaneseq
      %v284 = vshrl.u32 %v283, 7
      %v285 = vsub.s32 0, %v284
      %v286 = vrot.slane %v281, %v285
      %288 = vmatprep.subr.mxu0 0.0
      %289 = vmatpush1.msra.mxu0 %v232
      %290 = vmatprep.subr.mxu0 0.0
      %291 = vmatpush1.msra.mxu0 %v231
      %292 = vmatprep.subr.mxu0 0.0
      %293 = vmatpush1.msra.mxu0 %v230
      %294 = vmatprep.subr.mxu0 0.0
      %295 = vmatpush1.msra.mxu0 %v229
      %296 = vmatprep.subr.mxu0 0.0
      %297 = vmatpush1.msra.mxu0 %v228
      %298 = vmatprep.subr.mxu0 0.0
      %299 = vmatpush1.msra.mxu0 %v227
      %300 = vmatprep.subr.mxu0 0.0
      %301 = vmatpush1.msra.mxu0 %v226
      %302 = vmatprep.subr.mxu0 0.0
      %303 = vmatpush1.msra.mxu0 %v225
      %304 = vmatprep.subr.mxu0 0.0
      %305 = vmatpush1.msra.mxu0 %v224
      %306 = vmatprep.subr.mxu0 0.0
      %307 = vmatpush1.msra.mxu0 %v223
      %308 = vmatprep.subr.mxu0 0.0
      %309 = vmatpush1.msra.mxu0 %v222
      %310 = vmatprep.subr.mxu0 0.0
      %311 = vmatpush1.msra.mxu0 %v221
      %312 = vmatprep.subr.mxu0 0.0
      %313 = vmatpush1.msra.mxu0 %v220
      %314 = vmatprep.subr.mxu0 0.0
      %315 = vmatpush1.msra.mxu0 %v219
      %316 = vmatprep.subr.mxu0 0.0
      %317 = vmatpush1.msra.mxu0 %v218
      %318 = vmatprep.subr.mxu0 0.0
      %319 = vmatpush1.msra.mxu0 %v217
      %320 = vmatprep.subr.mxu0 0.0
      %321 = vmatpush2.msra.mxu0 %v248
      %322 = vmatprep.subr.mxu0 0.0
      %323 = vmatpush2.msra.mxu0 %v247
      %324 = vmatprep.subr.mxu0 0.0
      %325 = vmatpush2.msra.mxu0 %v246
      %326 = vmatprep.subr.mxu0 0.0
      %327 = vmatpush2.msra.mxu0 %v245
      %328 = vmatprep.subr.mxu0 0.0
      %329 = vmatpush2.msra.mxu0 %v244
      %330 = vmatprep.subr.mxu0 0.0
      %331 = vmatpush2.msra.mxu0 %v243
      %332 = vmatprep.subr.mxu0 0.0
      %333 = vmatpush2.msra.mxu0 %v242
      %334 = vmatprep.subr.mxu0 0.0
      %335 = vmatpush2.msra.mxu0 %v241
      %336 = vmatprep.subr.mxu0 0.0
      %337 = vmatpush2.msra.mxu0 %v240
      %338 = vmatprep.subr.mxu0 0.0
      %339 = vmatpush2.msra.mxu0 %v239
      %340 = vmatprep.subr.mxu0 0.0
      %341 = vmatpush2.msra.mxu0 %v238
      %342 = vmatprep.subr.mxu0 0.0
      %343 = vmatpush2.msra.mxu0 %v237
      %344 = vmatprep.subr.mxu0 0.0
      %345 = vmatpush2.msra.mxu0 %v236
      %346 = vmatprep.subr.mxu0 0.0
      %347 = vmatpush2.msra.mxu0 %v235
      %348 = vmatprep.subr.mxu0 0.0
      %349 = vmatpush2.msra.mxu0 %v234
      %350 = vmatprep.subr.mxu0 0.0
      %351 = vmatpush2.msra.mxu0 %v233
      %352 = vmatprep.mubr.f32.mxu0 %v178
      %353 = vmatmul.mubr.f32.gmra.mxu0 %v177
      %v354 = vpop.f32.mrf.mxu0
      %v355 = vadd.f32 %v286, %v354
      %v356 = vpop.f32.mrf.mxu0
      %357 = vmatprep.mubr.f32.mxu0 %v182
      %358 = vmatmul.mubr.f32.gmra.mxu0 %v181
      %v359 = vpop.f32.mrf.mxu0
      %v360 = vadd.f32 %v286, %v359
      %v361 = vpop.f32.mrf.mxu0
      %362 = vmatprep.mubr.f32.mxu0 %v186
      %363 = vmatmul.mubr.f32.gmra.mxu0 %v185
      %v364 = vpop.f32.mrf.mxu0
      %v365 = vadd.f32 %v286, %v364
      %v366 = vpop.f32.mrf.mxu0
      %367 = vmatprep.mubr.f32.mxu0 %v190
      %368 = vmatmul.mubr.f32.gmra.mxu0 %v189
      %v369 = vpop.f32.mrf.mxu0
      %v370 = vadd.f32 %v286, %v369
      %v371 = vpop.f32.mrf.mxu0
      %372 = vmatprep.mubr.f32.mxu0 %v194
      %373 = vmatmul.mubr.f32.gmra.mxu0 %v193
      %v374 = vpop.f32.mrf.mxu0
      %v375 = vadd.f32 %v286, %v374
      %v376 = vpop.f32.mrf.mxu0
      %377 = vmatprep.mubr.f32.mxu0 %v198
      %378 = vmatmul.mubr.f32.gmra.mxu0 %v197
      %v379 = vpop.f32.mrf.mxu0
      %v380 = vadd.f32 %v286, %v379
      %v381 = vpop.f32.mrf.mxu0
      %382 = vmatprep.mubr.f32.mxu0 %v202
      %383 = vmatmul.mubr.f32.gmra.mxu0 %v201
      %v384 = vpop.f32.mrf.mxu0
      %v385 = vadd.f32 %v286, %v384
      %v386 = vpop.f32.mrf.mxu0
      %387 = vmatprep.mubr.f32.mxu0 %v206
      %388 = vmatmul.mubr.f32.gmra.mxu0 %v205
      %v389 = vpop.f32.mrf.mxu0
      %v390 = vadd.f32 %v286, %v389
      %v391 = vpop.f32.mrf.mxu0
      %392 = vmatprep.mubr.f32.mxu0 %v210
      %393 = vmatmul.mubr.f32.gmra.mxu0 %v209
      %v394 = vpop.f32.mrf.mxu0
      %v395 = vadd.f32 %v286, %v394
      %v396 = vpop.f32.mrf.mxu0
      %397 = vmatprep.mubr.f32.mxu0 %v214
      %398 = vmatmul.mubr.f32.gmra.mxu0 %v213
      %v399 = vpop.f32.mrf.mxu0
      %v400 = vadd.f32 %v286, %v399
      %v401 = vpop.f32.mrf.mxu0
      %402 = vdwg.mxu0
      %403 = vmatprep.subr.mxu0 0.0
      %404 = vmatpush1.msra.mxu0 %v264
      %405 = vmatprep.subr.mxu0 0.0
      %406 = vmatpush1.msra.mxu0 %v263
      %407 = vmatprep.subr.mxu0 0.0
      %408 = vmatpush1.msra.mxu0 %v262
      %409 = vmatprep.subr.mxu0 0.0
      %410 = vmatpush1.msra.mxu0 %v261
      %411 = vmatprep.subr.mxu0 0.0
      %412 = vmatpush1.msra.mxu0 %v260
      %413 = vmatprep.subr.mxu0 0.0
      %414 = vmatpush1.msra.mxu0 %v259
      %415 = vmatprep.subr.mxu0 0.0
      %416 = vmatpush1.msra.mxu0 %v258
      %417 = vmatprep.subr.mxu0 0.0
      %418 = vmatpush1.msra.mxu0 %v257
      %419 = vmatprep.subr.mxu0 0.0
      %420 = vmatpush1.msra.mxu0 %v256
      %421 = vmatprep.subr.mxu0 0.0
      %422 = vmatpush1.msra.mxu0 %v255
      %423 = vmatprep.subr.mxu0 0.0
      %424 = vmatpush1.msra.mxu0 %v254
      %425 = vmatprep.subr.mxu0 0.0
      %426 = vmatpush1.msra.mxu0 %v253
      %427 = vmatprep.subr.mxu0 0.0
      %428 = vmatpush1.msra.mxu0 %v252
      %429 = vmatprep.subr.mxu0 0.0
      %430 = vmatpush1.msra.mxu0 %v251
      %431 = vmatprep.subr.mxu0 0.0
      %432 = vmatpush1.msra.mxu0 %v250
      %433 = vmatprep.subr.mxu0 0.0
      %434 = vmatpush1.msra.mxu0 %v249
      %435 = vmatprep.subr.mxu0 0.0
      %436 = vmatpush2.msra.mxu0 %v280
      %437 = vmatprep.subr.mxu0 0.0
      %438 = vmatpush2.msra.mxu0 %v279
      %439 = vmatprep.subr.mxu0 0.0
      %440 = vmatpush2.msra.mxu0 %v278
      %441 = vmatprep.subr.mxu0 0.0
      %442 = vmatpush2.msra.mxu0 %v277
      %443 = vmatprep.subr.mxu0 0.0
      %444 = vmatpush2.msra.mxu0 %v276
      %445 = vmatprep.subr.mxu0 0.0
      %446 = vmatpush2.msra.mxu0 %v275
      %447 = vmatprep.subr.mxu0 0.0
      %448 = vmatpush2.msra.mxu0 %v274
      %449 = vmatprep.subr.mxu0 0.0
      %450 = vmatpush2.msra.mxu0 %v273
      %451 = vmatprep.subr.mxu0 0.0
      %452 = vmatpush2.msra.mxu0 %v272
      %453 = vmatprep.subr.mxu0 0.0
      %454 = vmatpush2.msra.mxu0 %v271
      %455 = vmatprep.subr.mxu0 0.0
      %456 = vmatpush2.msra.mxu0 %v270
      %457 = vmatprep.subr.mxu0 0.0
      %458 = vmatpush2.msra.mxu0 %v269
      %459 = vmatprep.subr.mxu0 0.0
      %460 = vmatpush2.msra.mxu0 %v268
      %461 = vmatprep.subr.mxu0 0.0
      %462 = vmatpush2.msra.mxu0 %v267
      %463 = vmatprep.subr.mxu0 0.0
      %464 = vmatpush2.msra.mxu0 %v266
      %465 = vmatprep.subr.mxu0 0.0
      %466 = vmatpush2.msra.mxu0 %v265
      %467 = vmatprep.mubr.f32.mxu0 %v180
      %468 = vmatmul.mubr.f32.gmra.mxu0 %v179
      %v469 = vpop.f32.mrf.mxu0
      %v470 = vadd.f32 %v355, %v469
      %v471 = vpop.f32.mrf.mxu0
      %472 = vmatprep.mubr.f32.mxu0 %v184
      %473 = vmatmul.mubr.f32.gmra.mxu0 %v183
      %v474 = vpop.f32.mrf.mxu0
      %v475 = vadd.f32 %v360, %v474
      %v476 = vpop.f32.mrf.mxu0
      %477 = vmatprep.mubr.f32.mxu0 %v188
      %478 = vmatmul.mubr.f32.gmra.mxu0 %v187
      %v479 = vpop.f32.mrf.mxu0
      %v480 = vadd.f32 %v365, %v479
      %v481 = vpop.f32.mrf.mxu0
      %482 = vmatprep.mubr.f32.mxu0 %v192
      %483 = vmatmul.mubr.f32.gmra.mxu0 %v191
      %v484 = vpop.f32.mrf.mxu0
      %v485 = vadd.f32 %v370, %v484
      %v486 = vpop.f32.mrf.mxu0
      %487 = vmatprep.mubr.f32.mxu0 %v196
      %488 = vmatmul.mubr.f32.gmra.mxu0 %v195
      %v489 = vpop.f32.mrf.mxu0
      %v490 = vadd.f32 %v375, %v489
      %v491 = vpop.f32.mrf.mxu0
      %492 = vmatprep.mubr.f32.mxu0 %v200
      %493 = vmatmul.mubr.f32.gmra.mxu0 %v199
      %v494 = vpop.f32.mrf.mxu0
      %v495 = vadd.f32 %v380, %v494
      %v496 = vpop.f32.mrf.mxu0
      %497 = vmatprep.mubr.f32.mxu0 %v204
      %498 = vmatmul.mubr.f32.gmra.mxu0 %v203
      %v499 = vpop.f32.mrf.mxu0
      %v500 = vadd.f32 %v385, %v499
      %v501 = vpop.f32.mrf.mxu0
      %502 = vmatprep.mubr.f32.mxu0 %v208
      %503 = vmatmul.mubr.f32.gmra.mxu0 %v207
      %v504 = vpop.f32.mrf.mxu0
      %v505 = vadd.f32 %v390, %v504
      %v506 = vpop.f32.mrf.mxu0
      %507 = vmatprep.mubr.f32.mxu0 %v212
      %508 = vmatmul.mubr.f32.gmra.mxu0 %v211
      %v509 = vpop.f32.mrf.mxu0
      %v510 = vadd.f32 %v395, %v509
      %v511 = vpop.f32.mrf.mxu0
      %512 = vmatprep.mubr.f32.mxu0 %v216
      %513 = vmatmul.mubr.f32.gmra.mxu0 %v215
      %v514 = vpop.f32.mrf.mxu0
      %v515 = vadd.f32 %v400, %v514
      %v516 = vpop.f32.mrf.mxu0
      %517 = vdwg.mxu0
      %v518 = vmax.f32 %v470, 0.0
      %v519 = vmax.f32 %v475, 0.0
      %v520 = vmax.f32 %v480, 0.0
      %v521 = vmax.f32 %v485, 0.0
      %v522 = vmax.f32 %v490, 0.0
      %v523 = vmax.f32 %v495, 0.0
      %v524 = vmax.f32 %v500, 0.0
      %v525 = vmax.f32 %v505, 0.0
      %v526 = vmax.f32 %v510, 0.0
      %v527 = vmax.f32 %v515, 0.0
      %vm528 = vcmask 523264
      %529 = vst.msk [vmem:[%s175] sm:$0xff] %vm528, %v518
      %530 = vst.msk [vmem:[%s175 + $0x8] sm:$0xff] %vm528, %v519
      %531 = vst.msk [vmem:[%s175 + $0x10] sm:$0xff] %vm528, %v520
      %532 = vst.msk [vmem:[%s175 + $0x18] sm:$0xff] %vm528, %v521
      %533 = vst.msk [vmem:[%s175 + $0x20] sm:$0xff] %vm528, %v522
      %534 = vst.msk [vmem:[%s175 + $0x28] sm:$0xff] %vm528, %v523
      %535 = vst.msk [vmem:[%s175 + $0x30] sm:$0xff] %vm528, %v524
      %536 = vst.msk [vmem:[%s175 + $0x38] sm:$0xff] %vm528, %v525
      %537 = vst.msk [vmem:[%s175 + $0x40] sm:$0xff] %vm528, %v526
      %538 = vst.msk [vmem:[%s175 + $0x48] sm:$0xff] %vm528, %v527
      %s539 = smul.u32 10, %s14
      %p540 = scmp.lt.s32.totalorder %s539, 19
      %s541 = scalar_select %p540, %s539, 19
      %s542 = smul.addr %s541, 8
      %s543 = scalar_lea.vmem %s3, %s542
      // Predicated region
      $region33: #{cnn_critic_forward.6} parent=31 // pred_check
        %p544 = pneg %p100
      $region34: #{cnn_critic_forward.6} parent=31 // pred_check_branch
        %546 = sbr.rel (%p544) target = $region36
      $region35: #{cnn_critic_forward.6} parent=31 // pred_region
        %s547 = smul.u32 10, %s14
      $region36: #{cnn_critic_forward.6} parent=31 // pred_fallthru
        _
    $region32: #{cnn_critic_forward.6} parent=5 // pred_fallthru
      _
    %p548 = scmp.le.s32.totalorder 2, %s9
    // Predicated region
    $region37: #{cnn_critic_forward.6} parent=5 // pred_check
      %p549 = pneg %p548
    $region38: #{cnn_critic_forward.6} parent=5 // pred_check_branch
      %551 = sbr.rel (%p549) target = $region40
    $region39: #{cnn_critic_forward.6} parent=5 // pred_region
      %s552 = ssub.s32 %s9, 2
      // Predicated region
      $region41: #{cnn_critic_forward.6} parent=39 // pred_check
        %p553 = pneg %p106
      $region42: #{cnn_critic_forward.6} parent=39 // pred_check_branch
        %555 = sbr.rel (%p553) target = $region44
      $region43: #{cnn_critic_forward.6} parent=39 // pred_region
        %s556 = smul.u32 10, %s15
        %p557 = scmp.lt.s32.totalorder %s556, 19
        %s558 = scalar_select %p557, %s556, 19
        %s559 = smul.addr %s558, 8
        %s560 = scalar_lea.vmem %s3, %s559
      $region44: #{cnn_critic_forward.6} parent=39 // pred_fallthru
        _
    $region40: #{cnn_critic_forward.6} parent=5 // pred_fallthru
      _
  $region6: #{cnn_critic_forward.6} parent=0 // loop_footer
    %s13 = sadd.s32 1, %s9
  $region7: #{cnn_critic_forward.6} parent=0 // loop_footer_branch
    %8 = sbr.rel target = $region3
  $region8: #{cnn_critic_forward.6} parent=0 // loop_exit
    _

// kernel: cnn_critic_forward.7
$region0: #{cnn_critic_forward.7}
  #allocation0 [shape = 'u32[]', space=smem, size = 0x4, offset = 0x4, fixed_abs, tag = 'smem constant byte address 0x4 - core index']
  #allocation1 [shape = 'u32[144,128]{1,0:T(1,128)}', space=vmem, size = 0x12000, scoped, tag = 'internal scratch']
  #allocation2 [shape = 'f32[1,1]{1,0:T(1,128)S(1)}', space=vmem, size = 0x200, scoped, tag = 'scoped memory for cnn_critic_forward.7']
  %s0 = inlined_call_operand.vmem [shape: f32[4,2,6,576], index: 0, kind: input, shape index: {}]
  %s1 = inlined_call_operand.vmem [shape: f32[576,64], index: 1, kind: input, shape index: {}]
  %s2 = inlined_call_operand.vmem [shape: f32[1,64], index: 2, kind: input, shape index: {}]
  %s3 = inlined_call_operand.vmem [shape: f32[6,64,128], index: 3, kind: input, shape index: {}]
  %s4 = inlined_call_operand.vmem [shape: f32[1,128], index: 4, kind: input, shape index: {}]
  %s5 = inlined_call_operand.vmem [shape: f32[128,128], index: 5, kind: input, shape index: {}]
  %s6 = inlined_call_operand.vmem [shape: f32[1,128], index: 6, kind: input, shape index: {}]
  %s7 = inlined_call_operand.vmem [shape: f32[128,1], index: 7, kind: input, shape index: {}]
  %s8 = inlined_call_operand.<no memory space> [shape: f32[1,1], index: 8, kind: input, shape index: {}]
  %s9 = inlined_call_operand.vmem [shape: f32[2,1,1], index: 9, kind: output, shape index: {}]
  %s10 = sld [smem:[#allocation0]]
  $region92: #{cnn_critic_forward.7} parent=0
    _
  %s12 = ssub.s32 1, %s10
  %s13 = scalar_select 0, %s12, %s10
  %v14 = vstv %s8
  %15 = vst [vmem:[#allocation2] sm:$0x1] %v14
  $region1: #{cnn_critic_forward.7} parent=0
    #allocation3 [shape = 'u8[163840]{0}', space=vmem, size = 0x28000, scoped, tag = 'input window, operand 0']
    loop: start=0, step=1, limit=4
    $region2: #{cnn_critic_forward.7} parent=1 // loop_pre_header
      _
    $region3: #{cnn_critic_forward.7} parent=1 // loop_header
      %s17 = sphi 0, %s21
      %p18 = scmp.ge.s32.totalorder %s17, 4
      %s27 = sphi 0, %s29
      %s30 = sphi 0, %s27
      %s31 = sphi 0, %s30
      %s47 = sphi 0, %s31
      %s51 = sphi 0, %s51
      %s53 = sphi 0, %s51
      %s54 = sphi 0, %s53
      %s68 = sphi 0, %s54
      %s72 = sphi 0, %s72
      %s74 = sphi 0, %s72
      %s75 = sphi 0, %s74
      %s89 = sphi 0, %s75
      %s93 = sphi 0, %s93
      %s95 = sphi 0, %s93
      %s96 = sphi 0, %s95
      %s110 = sphi 0, %s96
      %s114 = sphi 0, %s114
      %s116 = sphi 0, %s114
      %s117 = sphi 0, %s116
      %s131 = sphi 0, %s117
      %s135 = sphi 0, %s135
      %s137 = sphi 0, %s135
      %s138 = sphi 0, %s137
      %s152 = sphi 0, %s138
      %s156 = sphi 0, %s156
      %s158 = sphi 0, %s156
      %s159 = sphi 0, %s158
      %s173 = sphi 0, %s159
      %s177 = sphi 0, %s177
      %s179 = sphi 0, %s177
      %s180 = sphi 0, %s179
      %s194 = sphi 0, %s180
      %s198 = sphi 0, %s198
      %s200 = sphi 0, %s198
      %s201 = sphi 0, %s200
      %s215 = sphi 0, %s201
      %s221 = sphi 0, %s223
      %s224 = sphi 0, %s221
      %s225 = sphi 0, %s224
      %s241 = sphi 0, %s225
    $region4: #{cnn_critic_forward.7} parent=1 // loop_header_branch
      %20 = sbr.rel (%p18) target = $region8
    $region5: #{cnn_critic_forward.7} parent=1 // loop_body
      %s22 = ssub.s32 %s17, 1
      %s23 = ssub.s32 %s17, 2
      %s24 = sadd.s32 %s17, 1
      %s25 = ssub.s32 %s17, %s24
      %p26 = scmp.eq.s32.totalorder %s25, 0
      %s28 = sadd.s32 %s27, 1
      %s29 = scalar_select %p26, %s27, %s28
      %p32 = pneg %p26
      %p33 = scmp.eq.s32.totalorder %s17, 1
      %p34 = por %p32, %p33
      %p35 = scmp.ne.s32.totalorder %s27, %s30
      %p36 = scmp.eq.s32.totalorder %s17, 0
      %p37 = por %p35, %p36
      %p38 = scmp.ne.s32.totalorder %s27, %s30
      %p39 = scmp.eq.s32.totalorder %s22, 1
      %p40 = por %p38, %p39
      %p41 = scmp.ne.s32.totalorder %s30, %s31
      %p42 = scmp.eq.s32.totalorder %s22, 0
      %p43 = por %p41, %p42
      %p44 = scmp.ne.s32.totalorder %s30, %s31
      %p45 = scmp.eq.s32.totalorder %s23, 1
      %p46 = por %p44, %p45
      %p48 = scmp.ne.s32.totalorder %s31, %s47
      %p49 = scmp.eq.s32.totalorder %s23, 0
      %p50 = por %p48, %p49
      %s52 = sadd.s32 %s51, 1
      %p55 = scmp.eq.s32.totalorder %s17, 1
      %p56 = scmp.ne.s32.totalorder %s51, %s53
      %p57 = scmp.eq.s32.totalorder %s17, 0
      %p58 = por %p56, %p57
      %p59 = scmp.ne.s32.totalorder %s51, %s53
      %p60 = scmp.eq.s32.totalorder %s22, 1
      %p61 = por %p59, %p60
      %p62 = scmp.ne.s32.totalorder %s53, %s54
      %p63 = scmp.eq.s32.totalorder %s22, 0
      %p64 = por %p62, %p63
      %p65 = scmp.ne.s32.totalorder %s53, %s54
      %p66 = scmp.eq.s32.totalorder %s23, 1
      %p67 = por %p65, %p66
      %p69 = scmp.ne.s32.totalorder %s54, %s68
      %p70 = scmp.eq.s32.totalorder %s23, 0
      %p71 = por %p69, %p70
      %s73 = sadd.s32 %s72, 1
      %p76 = scmp.eq.s32.totalorder %s17, 1
      %p77 = scmp.ne.s32.totalorder %s72, %s74
      %p78 = scmp.eq.s32.totalorder %s17, 0
      %p79 = por %p77, %p78
      %p80 = scmp.ne.s32.totalorder %s72, %s74
      %p81 = scmp.eq.s32.totalorder %s22, 1
      %p82 = por %p80, %p81
      %p83 = scmp.ne.s32.totalorder %s74, %s75
      %p84 = scmp.eq.s32.totalorder %s22, 0
      %p85 = por %p83, %p84
      %p86 = scmp.ne.s32.totalorder %s74, %s75
      %p87 = scmp.eq.s32.totalorder %s23, 1
      %p88 = por %p86, %p87
      %p90 = scmp.ne.s32.totalorder %s75, %s89
      %p91 = scmp.eq.s32.totalorder %s23, 0
      %p92 = por %p90, %p91
      %s94 = sadd.s32 %s93, 1
      %p97 = scmp.eq.s32.totalorder %s17, 1
      %p98 = scmp.ne.s32.totalorder %s93, %s95
      %p99 = scmp.eq.s32.totalorder %s17, 0
      %p100 = por %p98, %p99
      %p101 = scmp.ne.s32.totalorder %s93, %s95
      %p102 = scmp.eq.s32.totalorder %s22, 1
      %p103 = por %p101, %p102
      %p104 = scmp.ne.s32.totalorder %s95, %s96
      %p105 = scmp.eq.s32.totalorder %s22, 0
      %p106 = por %p104, %p105
      %p107 = scmp.ne.s32.totalorder %s95, %s96
      %p108 = scmp.eq.s32.totalorder %s23, 1
      %p109 = por %p107, %p108
      %p111 = scmp.ne.s32.totalorder %s96, %s110
      %p112 = scmp.eq.s32.totalorder %s23, 0
      %p113 = por %p111, %p112
      %s115 = sadd.s32 %s114, 1
      %p118 = scmp.eq.s32.totalorder %s17, 1
      %p119 = scmp.ne.s32.totalorder %s114, %s116
      %p120 = scmp.eq.s32.totalorder %s17, 0
      %p121 = por %p119, %p120
      %p122 = scmp.ne.s32.totalorder %s114, %s116
      %p123 = scmp.eq.s32.totalorder %s22, 1
      %p124 = por %p122, %p123
      %p125 = scmp.ne.s32.totalorder %s116, %s117
      %p126 = scmp.eq.s32.totalorder %s22, 0
      %p127 = por %p125, %p126
      %p128 = scmp.ne.s32.totalorder %s116, %s117
      %p129 = scmp.eq.s32.totalorder %s23, 1
      %p130 = por %p128, %p129
      %p132 = scmp.ne.s32.totalorder %s117, %s131
      %p133 = scmp.eq.s32.totalorder %s23, 0
      %p134 = por %p132, %p133
      %s136 = sadd.s32 %s135, 1
      %p139 = scmp.eq.s32.totalorder %s17, 1
      %p140 = scmp.ne.s32.totalorder %s135, %s137
      %p141 = scmp.eq.s32.totalorder %s17, 0
      %p142 = por %p140, %p141
      %p143 = scmp.ne.s32.totalorder %s135, %s137
      %p144 = scmp.eq.s32.totalorder %s22, 1
      %p145 = por %p143, %p144
      %p146 = scmp.ne.s32.totalorder %s137, %s138
      %p147 = scmp.eq.s32.totalorder %s22, 0
      %p148 = por %p146, %p147
      %p149 = scmp.ne.s32.totalorder %s137, %s138
      %p150 = scmp.eq.s32.totalorder %s23, 1
      %p151 = por %p149, %p150
      %p153 = scmp.ne.s32.totalorder %s138, %s152
      %p154 = scmp.eq.s32.totalorder %s23, 0
      %p155 = por %p153, %p154
      %s157 = sadd.s32 %s156, 1
      %p160 = scmp.eq.s32.totalorder %s17, 1
      %p161 = scmp.ne.s32.totalorder %s156, %s158
      %p162 = scmp.eq.s32.totalorder %s17, 0
      %p163 = por %p161, %p162
      %p164 = scmp.ne.s32.totalorder %s156, %s158
      %p165 = scmp.eq.s32.totalorder %s22, 1
      %p166 = por %p164, %p165
      %p167 = scmp.ne.s32.totalorder %s158, %s159
      %p168 = scmp.eq.s32.totalorder %s22, 0
      %p169 = por %p167, %p168
      %p170 = scmp.ne.s32.totalorder %s158, %s159
      %p171 = scmp.eq.s32.totalorder %s23, 1
      %p172 = por %p170, %p171
      %p174 = scmp.ne.s32.totalorder %s159, %s173
      %p175 = scmp.eq.s32.totalorder %s23, 0
      %p176 = por %p174, %p175
      %s178 = sadd.s32 %s177, 1
      %p181 = scmp.eq.s32.totalorder %s17, 1
      %p182 = scmp.ne.s32.totalorder %s177, %s179
      %p183 = scmp.eq.s32.totalorder %s17, 0
      %p184 = por %p182, %p183
      %p185 = scmp.ne.s32.totalorder %s177, %s179
      %p186 = scmp.eq.s32.totalorder %s22, 1
      %p187 = por %p185, %p186
      %p188 = scmp.ne.s32.totalorder %s179, %s180
      %p189 = scmp.eq.s32.totalorder %s22, 0
      %p190 = por %p188, %p189
      %p191 = scmp.ne.s32.totalorder %s179, %s180
      %p192 = scmp.eq.s32.totalorder %s23, 1
      %p193 = por %p191, %p192
      %p195 = scmp.ne.s32.totalorder %s180, %s194
      %p196 = scmp.eq.s32.totalorder %s23, 0
      %p197 = por %p195, %p196
      %s199 = sadd.s32 %s198, 1
      %p202 = scmp.eq.s32.totalorder %s17, 1
      %p203 = scmp.ne.s32.totalorder %s198, %s200
      %p204 = scmp.eq.s32.totalorder %s17, 0
      %p205 = por %p203, %p204
      %p206 = scmp.ne.s32.totalorder %s198, %s200
      %p207 = scmp.eq.s32.totalorder %s22, 1
      %p208 = por %p206, %p207
      %p209 = scmp.ne.s32.totalorder %s200, %s201
      %p210 = scmp.eq.s32.totalorder %s22, 0
      %p211 = por %p209, %p210
      %p212 = scmp.ne.s32.totalorder %s200, %s201
      %p213 = scmp.eq.s32.totalorder %s23, 1
      %p214 = por %p212, %p213
      %p216 = scmp.ne.s32.totalorder %s201, %s215
      %p217 = scmp.eq.s32.totalorder %s23, 0
      %p218 = por %p216, %p217
      %s219 = ssub.s32 %s17, %s24
      %p220 = scmp.eq.s32.totalorder %s219, 0
      %s222 = sadd.s32 %s221, 1
      %s223 = scalar_select %p220, %s221, %s222
      %p226 = pneg %p220
      %p227 = scmp.eq.s32.totalorder %s17, 1
      %p228 = por %p226, %p227
      %p229 = scmp.ne.s32.totalorder %s221, %s224
      %p230 = scmp.eq.s32.totalorder %s17, 0
      %p231 = por %p229, %p230
      %p232 = scmp.ne.s32.totalorder %s221, %s224
      %p233 = scmp.eq.s32.totalorder %s22, 1
      %p234 = por %p232, %p233
      %p235 = scmp.ne.s32.totalorder %s224, %s225
      %p236 = scmp.eq.s32.totalorder %s22, 0
      %p237 = por %p235, %p236
      %p238 = scmp.ne.s32.totalorder %s224, %s225
      %p239 = scmp.eq.s32.totalorder %s23, 1
      %p240 = por %p238, %p239
      %p242 = scmp.ne.s32.totalorder %s225, %s241
      %p243 = scmp.eq.s32.totalorder %s23, 0
      %p244 = por %p242, %p243
      %p245 = scmp.le.s32.totalorder 1, %s17
      %p246 = scmp.lt.s32.totalorder %s17, 3
      %p247 = pnand %p245, %p246
      %p248 = pneg %p247
      // Predicated region
      $region9: #{cnn_critic_forward.7} parent=5 // pred_check
        _
      $region10: #{cnn_critic_forward.7} parent=5 // pred_check_branch
        %250 = sbr.rel (%p247) target = $region12
      $region11: #{cnn_critic_forward.7} parent=5 // pred_region
        %s251 = ssub.s32 %s17, 1
        // Predicated region
        $region13: #{cnn_critic_forward.7} parent=11 // pred_check
          %p252 = pneg %p64
        $region14: #{cnn_critic_forward.7} parent=11 // pred_check_branch
          %254 = sbr.rel (%p252) target = $region16
        $region15: #{cnn_critic_forward.7} parent=11 // pred_region
          _
        $region16: #{cnn_critic_forward.7} parent=11 // pred_fallthru
          _
        // Predicated region
        $region17: #{cnn_critic_forward.7} parent=11 // pred_check
          %p255 = pneg %p85
        $region18: #{cnn_critic_forward.7} parent=11 // pred_check_branch
          %257 = sbr.rel (%p255) target = $region20
        $region19: #{cnn_critic_forward.7} parent=11 // pred_region
          _
        $region20: #{cnn_critic_forward.7} parent=11 // pred_fallthru
          _
        // Predicated region
        $region21: #{cnn_critic_forward.7} parent=11 // pred_check
          %p258 = pneg %p106
        $region22: #{cnn_critic_forward.7} parent=11 // pred_check_branch
          %260 = sbr.rel (%p258) target = $region24
        $region23: #{cnn_critic_forward.7} parent=11 // pred_region
          _
        $region24: #{cnn_critic_forward.7} parent=11 // pred_fallthru
          _
        // Predicated region
        $region25: #{cnn_critic_forward.7} parent=11 // pred_check
          %p261 = pneg %p127
        $region26: #{cnn_critic_forward.7} parent=11 // pred_check_branch
          %263 = sbr.rel (%p261) target = $region28
        $region27: #{cnn_critic_forward.7} parent=11 // pred_region
          _
        $region28: #{cnn_critic_forward.7} parent=11 // pred_fallthru
          _
        // Predicated region
        $region29: #{cnn_critic_forward.7} parent=11 // pred_check
          %p264 = pneg %p148
        $region30: #{cnn_critic_forward.7} parent=11 // pred_check_branch
          %266 = sbr.rel (%p264) target = $region32
        $region31: #{cnn_critic_forward.7} parent=11 // pred_region
          _
        $region32: #{cnn_critic_forward.7} parent=11 // pred_fallthru
          _
        // Predicated region
        $region33: #{cnn_critic_forward.7} parent=11 // pred_check
          %p267 = pneg %p169
        $region34: #{cnn_critic_forward.7} parent=11 // pred_check_branch
          %269 = sbr.rel (%p267) target = $region36
        $region35: #{cnn_critic_forward.7} parent=11 // pred_region
          _
        $region36: #{cnn_critic_forward.7} parent=11 // pred_fallthru
          _
        // Predicated region
        $region37: #{cnn_critic_forward.7} parent=11 // pred_check
          %p270 = pneg %p190
        $region38: #{cnn_critic_forward.7} parent=11 // pred_check_branch
          %272 = sbr.rel (%p270) target = $region40
        $region39: #{cnn_critic_forward.7} parent=11 // pred_region
          _
        $region40: #{cnn_critic_forward.7} parent=11 // pred_fallthru
          _
        // Predicated region
        $region41: #{cnn_critic_forward.7} parent=11 // pred_check
          %p273 = pneg %p211
        $region42: #{cnn_critic_forward.7} parent=11 // pred_check_branch
          %275 = sbr.rel (%p273) target = $region44
        $region43: #{cnn_critic_forward.7} parent=11 // pred_region
          _
        $region44: #{cnn_critic_forward.7} parent=11 // pred_fallthru
          _
      $region12: #{cnn_critic_forward.7} parent=5 // pred_fallthru
        _
      %p276 = scmp.lt.s32.totalorder %s17, 2
      // Predicated region
      $region45: #{cnn_critic_forward.7} parent=5 // pred_check
        %p277 = pneg %p276
      $region46: #{cnn_critic_forward.7} parent=5 // pred_check_branch
        %279 = sbr.rel (%p277) target = $region48
      $region47: #{cnn_critic_forward.7} parent=5 // pred_region
        // Predicated region
        $region49: #{cnn_critic_forward.7} parent=47 // pred_check
          %p280 = pneg %p37
        $region50: #{cnn_critic_forward.7} parent=47 // pred_check_branch
          %282 = sbr.rel (%p280) target = $region52
        $region51: #{cnn_critic_forward.7} parent=47 // pred_region
          %s283 = sand.u32 %s27, 1
          %s284 = sand.u32 %s27, 1
          %s285 = smul.addr %s284, 160
          %s286 = scalar_lea.vmem [#allocation3], %s285
          %s287 = smul.addr %s17, 5
          %s288 = smul.addr %s287, 8
          %s289 = scalar_lea.vmem %s0, %s288
          // Predicated region
          $region53: #{cnn_critic_forward.7} parent=51 // pred_check
            _
          $region54: #{cnn_critic_forward.7} parent=51 // pred_check_branch
            %291 = sbr.rel (0) target = $region56
          $region55: #{cnn_critic_forward.7} parent=51 // pred_region
            // Predicated region
            $region57: #{cnn_critic_forward.7} parent=55 // pred_check
              _
            $region58: #{cnn_critic_forward.7} parent=55 // pred_check_branch
              %293 = sbr.rel (0) target = $region60
            $region59: #{cnn_critic_forward.7} parent=55 // pred_region
              loop: start=0, step=1, limit=1
              $region61: #{cnn_critic_forward.7} parent=59 // loop_pre_header
                _
              $region62: #{cnn_critic_forward.7} parent=59 // loop_header
                %s295 = sphi 0, %s299
                %p296 = scmp.ge.s32.totalorder %s295, 1
                %s300 = sphi %s289, %s289
                %s301 = sphi %s286, %s286
              $region63: #{cnn_critic_forward.7} parent=59 // loop_header_branch
                %298 = sbr.rel (%p296) target = $region67
              $region64: #{cnn_critic_forward.7} parent=59 // loop_body
                %v302 = vld [vmem:[%s300] sm:$0xff]
                %303 = vst [vmem:[%s301] sm:$0xff] %v302
                %v304 = vld [vmem:[%s300 + $0x8] sm:$0xff]
                %305 = vst [vmem:[%s301 + $0x8] sm:$0xff] %v304
                %v306 = vld [vmem:[%s300 + $0x10] sm:$0xff]
                %307 = vst [vmem:[%s301 + $0x10] sm:$0xff] %v306
                %v308 = vld [vmem:[%s300 + $0x18] sm:$0xff]
                %309 = vst [vmem:[%s301 + $0x18] sm:$0xff] %v308
                %v310 = vld [vmem:[%s300 + $0x20] sm:$0xff]
                %311 = vst [vmem:[%s301 + $0x20] sm:$0xff] %v310
                %v312 = vld [vmem:[%s300 + $0x50] sm:$0xff]
                %313 = vst [vmem:[%s301 + $0x28] sm:$0xff] %v312
                %v314 = vld [vmem:[%s300 + $0x58] sm:$0xff]
                %315 = vst [vmem:[%s301 + $0x30] sm:$0xff] %v314
                %v316 = vld [vmem:[%s300 + $0x60] sm:$0xff]
                %317 = vst [vmem:[%s301 + $0x38] sm:$0xff] %v316
                %v318 = vld [vmem:[%s300 + $0x68] sm:$0xff]
                %319 = vst [vmem:[%s301 + $0x40] sm:$0xff] %v318
                %v320 = vld [vmem:[%s300 + $0x70] sm:$0xff]
                %321 = vst [vmem:[%s301 + $0x48] sm:$0xff] %v320
                %v322 = vld [vmem:[%s300 + $0xa0] sm:$0xff]
                %323 = vst [vmem:[%s301 + $0x50] sm:$0xff] %v322
                %v324 = vld [vmem:[%s300 + $0xa8] sm:$0xff]
                %325 = vst [vmem:[%s301 + $0x58] sm:$0xff] %v324
                %v326 = vld [vmem:[%s300 + $0xb0] sm:$0xff]
                %327 = vst [vmem:[%s301 + $0x60] sm:$0xff] %v326
                %v328 = vld [vmem:[%s300 + $0xb8] sm:$0xff]
                %329 = vst [vmem:[%s301 + $0x68] sm:$0xff] %v328
                %v330 = vld [vmem:[%s300 + $0xc0] sm:$0xff]
                %331 = vst [vmem:[%s301 + $0x70] sm:$0xff] %v330
                %v332 = vld [vmem:[%s300 + $0xf0] sm:$0xff]
                %333 = vst [vmem:[%s301 + $0x78] sm:$0xff] %v332
                %v334 = vld [vmem:[%s300 + $0xf8] sm:$0xff]
                %335 = vst [vmem:[%s301 + $0x80] sm:$0xff] %v334
                %v336 = vld [vmem:[%s300 + $0x100] sm:$0xff]
                %337 = vst [vmem:[%s301 + $0x88] sm:$0xff] %v336
                %v338 = vld [vmem:[%s300 + $0x108] sm:$0xff]
                %339 = vst [vmem:[%s301 + $0x90] sm:$0xff] %v338
                %v340 = vld [vmem:[%s300 + $0x110] sm:$0xff]
                %341 = vst [vmem:[%s301 + $0x98] sm:$0xff] %v340
              $region65: #{cnn_critic_forward.7} parent=59 // loop_footer
                %s299 = sadd.s32 1, %s295
              $region66: #{cnn_critic_forward.7} parent=59 // loop_footer_branch
                %294 = sbr.rel target = $region62
              $region67: #{cnn_critic_forward.7} parent=59 // loop_exit
                _
            $region60: #{cnn_critic_forward.7} parent=55 // pred_fallthru
              _
            // Predicated region
            $region68: #{cnn_critic_forward.7} parent=55 // pred_check
              _
            $region69: #{cnn_critic_forward.7} parent=55 // pred_check_branch
              %343 = sbr.rel target = $region71
            $region70: #{cnn_critic_forward.7} parent=55 // pred_region
              _
            $region71: #{cnn_critic_forward.7} parent=55 // pred_fallthru
              _
          $region56: #{cnn_critic_forward.7} parent=51 // pred_fallthru
            _
          %344 = vnop
        $region52: #{cnn_critic_forward.7} parent=47 // pred_fallthru
          _
      $region48: #{cnn_critic_forward.7} parent=5 // pred_fallthru
        _
      %p345 = scmp.le.s32.totalorder 1, %s17
      %p346 = scmp.lt.s32.totalorder %s17, 3
      %p347 = pnand %p345, %p346
      %p348 = pneg %p347
      // Predicated region
      $region72: #{cnn_critic_forward.7} parent=5 // pred_check
        _
      $region73: #{cnn_critic_forward.7} parent=5 // pred_check_branch
        %350 = sbr.rel (%p347) target = $region75
      $region74: #{cnn_critic_forward.7} parent=5 // pred_region
        %s351 = ssub.s32 %s17, 1
        %s352 = sand.u32 %s30, 1
        %s353 = sand.u32 %s30, 1
        %s354 = smul.addr %s353, 160
        %s355 = scalar_lea.vmem [#allocation3], %s354
        // Predicated region
        $region76: #{cnn_critic_forward.7} parent=74 // pred_check
          %p356 = pneg %p43
        $region77: #{cnn_critic_forward.7} parent=74 // pred_check_branch
          %358 = sbr.rel (%p356) target = $region79
        $region78: #{cnn_critic_forward.7} parent=74 // pred_region
          _
        $region79: #{cnn_critic_forward.7} parent=74 // pred_fallthru
          _
        %s359 = sand.u32 %s30, 1
        %s360 = sand.u32 %s30, 1
        %s361 = smul.addr %s360, 160
        %s362 = scalar_lea.vmem [#allocation3], %s361
        %p363 = pneg %p43
        %p364 = pneg %p40
        %p365 = pneg %p64
        %p366 = pneg %p61
        %p367 = pneg %p85
        %p368 = pneg %p82
        %p369 = pneg %p106
        %p370 = pneg %p103
        %p371 = pneg %p127
        %p372 = pneg %p124
        %p373 = pneg %p148
        %p374 = pneg %p145
        %p375 = pneg %p169
        %p376 = pneg %p166
        %p377 = pneg %p190
        %p378 = pneg %p187
        %p379 = pneg %p211
        %p380 = pneg %p208
        %p381 = pneg %p237
        %p382 = pneg %p234
        %p383 = scmp.lt.s32.totalorder %s22, 1
        %s384 = scalar_select %p383, %s22, 1
        %s385 = scalar_lea.vmem %s9, %s384
        %p386 = scmp.lt.s32.totalorder %s22, 1
        %s387 = scalar_select %p386, %s22, 1
        %s388 = scalar_lea.vmem %s9, %s387
        %v389 = vld [vmem:[%s355] sm:$0x3f]
        %v390 = vld [vmem:[%s355 + $0x8] sm:$0x3f]
        %v391 = vld [vmem:[%s355 + $0x10] sm:$0x3f]
        %v392 = vld [vmem:[%s355 + $0x18] sm:$0x3f]
        %v393 = vld [vmem:[%s355 + $0x20] sm:$0x3f]
        %s394 = scalar_lea.vmem %s355, 40 [#allocation3]
        %v395 = vld [vmem:[%s394] sm:$0x3f]
        %v396 = vld [vmem:[%s394 + $0x8] sm:$0x3f]
        %v397 = vld [vmem:[%s394 + $0x10] sm:$0x3f]
        %v398 = vld [vmem:[%s394 + $0x18] sm:$0x3f]
        %v399 = vld [vmem:[%s394 + $0x20] sm:$0x3f]
        %v400 = vmax.f32 %v389, %v395
        %v401 = vmax.f32 %v390, %v396
        %v402 = vmax.f32 %v391, %v397
        %v403 = vmax.f32 %v392, %v398
        %v404 = vmax.f32 %v393, %v399
        %s405 = scalar_lea.vmem %s355, 80 [#allocation3]
        %v406 = vld [vmem:[%s405] sm:$0x3f]
        %v407 = vld [vmem:[%s405 + $0x8] sm:$0x3f]
        %v408 = vld [vmem:[%s405 + $0x10] sm:$0x3f]
        %v409 = vld [vmem:[%s405 + $0x18] sm:$0x3f]
        %v410 = vld [vmem:[%s405 + $0x20] sm:$0x3f]
        %s411 = scalar_lea.vmem %s355, 120 [#allocation3]
        %v412 = vld [vmem:[%s411] sm:$0x3f]
        %v413 = vld [vmem:[%s411 + $0x8] sm:$0x3f]
        %v414 = vld [vmem:[%s411 + $0x10] sm:$0x3f]
        %v415 = vld [vmem:[%s411 + $0x18] sm:$0x3f]
        %v416 = vld [vmem:[%s411 + $0x20] sm:$0x3f]
        %v417 = vmax.f32 %v406, %v412
        %v418 = vmax.f32 %v407, %v413
        %v419 = vmax.f32 %v408, %v414
        %v420 = vmax.f32 %v409, %v415
        %v421 = vmax.f32 %v410, %v416
        %v422 = vmax.f32 %v400, %v417
        %v423 = vmax.f32 %v401, %v418
        %v424 = vmax.f32 %v402, %v419
        %v425 = vmax.f32 %v403, %v420
        %v426 = vmax.f32 %v404, %v421
        %v427 = vld [vmem:[%s1] sm:$0xff]
        %v428 = vld [vmem:[%s1 + $0x8] sm:$0xff]
        %v429 = vld [vmem:[%s1 + $0x10] sm:$0xff]
        %v430 = vld [vmem:[%s1 + $0x18] sm:$0xff]
        %v431 = vld [vmem:[%s1 + $0x20] sm:$0xff]
        %v432 = vld [vmem:[%s1 + $0x28] sm:$0xff]
        %v433 = vld [vmem:[%s1 + $0x30] sm:$0xff]
        %v434 = vld [vmem:[%s1 + $0x38] sm:$0xff]
        %v435 = vld [vmem:[%s1 + $0x40] sm:$0xff]
        %v436 = vld [vmem:[%s1 + $0x48] sm:$0xff]
        %v437 = vld [vmem:[%s1 + $0x50] sm:$0xff]
        %v438 = vld [vmem:[%s1 + $0x58] sm:$0xff]
        %v439 = vld [vmem:[%s1 + $0x60] sm:$0xff]
        %v440 = vld [vmem:[%s1 + $0x68] sm:$0xff]
        %v441 = vld [vmem:[%s1 + $0x70] sm:$0xff]
        %v442 = vld [vmem:[%s1 + $0x78] sm:$0xff]
        %v443 = vld [vmem:[%s1 + $0x80] sm:$0xff]
        %v444 = vld [vmem:[%s1 + $0x88] sm:$0xff]
        %v445 = vld [vmem:[%s1 + $0x90] sm:$0xff]
        %v446 = vld [vmem:[%s1 + $0x98] sm:$0xff]
        %v447 = vld [vmem:[%s1 + $0xa0] sm:$0xff]
        %v448 = vld [vmem:[%s1 + $0xa8] sm:$0xff]
        %v449 = vld [vmem:[%s1 + $0xb0] sm:$0xff]
        %v450 = vld [vmem:[%s1 + $0xb8] sm:$0xff]
        %v451 = vld [vmem:[%s1 + $0xc0] sm:$0xff]
        %v452 = vld [vmem:[%s1 + $0xc8] sm:$0xff]
        %v453 = vld [vmem:[%s1 + $0xd0] sm:$0xff]
        %v454 = vld [vmem:[%s1 + $0xd8] sm:$0xff]
        %v455 = vld [vmem:[%s1 + $0xe0] sm:$0xff]
        %v456 = vld [vmem:[%s1 + $0xe8] sm:$0xff]
        %v457 = vld [vmem:[%s1 + $0xf0] sm:$0xff]
        %v458 = vld [vmem:[%s1 + $0xf8] sm:$0xff]
        %v459 = vld [vmem:[%s1 + $0x100] sm:$0xff]
        %v460 = vld [vmem:[%s1 + $0x108] sm:$0xff]
        %v461 = vld [vmem:[%s1 + $0x110] sm:$0xff]
        %v462 = vld [vmem:[%s1 + $0x118] sm:$0xff]
        %v463 = vld [vmem:[%s1 + $0x120] sm:$0xff]
        %v464 = vld [vmem:[%s1 + $0x128] sm:$0xff]
        %v465 = vld [vmem:[%s1 + $0x130] sm:$0xff]
        %v466 = vld [vmem:[%s1 + $0x138] sm:$0xff]
        %v467 = vld [vmem:[%s1 + $0x140] sm:$0xff]
        %v468 = vld [vmem:[%s1 + $0x148] sm:$0xff]
        %v469 = vld [vmem:[%s1 + $0x150] sm:$0xff]
        %v470 = vld [vmem:[%s1 + $0x158] sm:$0xff]
        %v471 = vld [vmem:[%s1 + $0x160] sm:$0xff]
        %v472 = vld [vmem:[%s1 + $0x168] sm:$0xff]
        %v473 = vld [vmem:[%s1 + $0x170] sm:$0xff]
        %v474 = vld [vmem:[%s1 + $0x178] sm:$0xff]
        %v475 = vld [vmem:[%s1 + $0x180] sm:$0xff]
        %v476 = vld [vmem:[%s1 + $0x188] sm:$0xff]
        %v477 = vld [vmem:[%s1 + $0x190] sm:$0xff]
        %v478 = vld [vmem:[%s1 + $0x198] sm:$0xff]
        %v479 = vld [vmem:[%s1 + $0x1a0] sm:$0xff]
        %v480 = vld [vmem:[%s1 + $0x1a8] sm:$0xff]
        %v481 = vld [vmem:[%s1 + $0x1b0] sm:$0xff]
        %v482 = vld [vmem:[%s1 + $0x1b8] sm:$0xff]
        %v483 = vld [vmem:[%s1 + $0x1c0] sm:$0xff]
        %v484 = vld [vmem:[%s1 + $0x1c8] sm:$0xff]
        %v485 = vld [vmem:[%s1 + $0x1d0] sm:$0xff]
        %v486 = vld [vmem:[%s1 + $0x1d8] sm:$0xff]
        %v487 = vld [vmem:[%s1 + $0x1e0] sm:$0xff]
        %v488 = vld [vmem:[%s1 + $0x1e8] sm:$0xff]
        %v489 = vld [vmem:[%s1 + $0x1f0] sm:$0xff]
        %v490 = vld [vmem:[%s1 + $0x1f8] sm:$0xff]
        %v491 = vld [vmem:[%s1 + $0x200] sm:$0xff]
        %v492 = vld [vmem:[%s1 + $0x208] sm:$0xff]
        %v493 = vld [vmem:[%s1 + $0x210] sm:$0xff]
        %v494 = vld [vmem:[%s1 + $0x218] sm:$0xff]
        %v495 = vld [vmem:[%s1 + $0x220] sm:$0xff]
        %v496 = vld [vmem:[%s1 + $0x228] sm:$0xff]
        %v497 = vld [vmem:[%s1 + $0x230] sm:$0xff]
        %v498 = vld [vmem:[%s1 + $0x238] sm:$0xff]
        %v499 = vld [vmem:[%s2] sm:$0x1]
        %v501 = vlaneseq
        %v502 = vshrl.u32 %v501, 7
        %v503 = vsub.s32 0, %v502
        %v504 = vrot.slane %v499, %v503
        %vm506 = vcmask 523264
        %v508 = vsel %vm506, %v426, 0
        %510 = vmatprep.subr.mxu0 0.0
        %511 = vmatpush1.msra.mxu0 %v442
        %512 = vmatprep.subr.mxu0 0.0
        %513 = vmatpush1.msra.mxu0 %v441
        %514 = vmatprep.subr.mxu0 0.0
        %515 = vmatpush1.msra.mxu0 %v440
        %516 = vmatprep.subr.mxu0 0.0
        %517 = vmatpush1.msra.mxu0 %v439
        %518 = vmatprep.subr.mxu0 0.0
        %519 = vmatpush1.msra.mxu0 %v438
        %520 = vmatprep.subr.mxu0 0.0
        %521 = vmatpush1.msra.mxu0 %v437
        %522 = vmatprep.subr.mxu0 0.0
        %523 = vmatpush1.msra.mxu0 %v436
        %524 = vmatprep.subr.mxu0 0.0
        %525 = vmatpush1.msra.mxu0 %v435
        %526 = vmatprep.subr.mxu0 0.0
        %527 = vmatpush1.msra.mxu0 %v434
        %528 = vmatprep.subr.mxu0 0.0
        %529 = vmatpush1.msra.mxu0 %v433
        %530 = vmatprep.subr.mxu0 0.0
        %531 = vmatpush1.msra.mxu0 %v432
        %532 = vmatprep.subr.mxu0 0.0
        %533 = vmatpush1.msra.mxu0 %v431
        %534 = vmatprep.subr.mxu0 0.0
        %535 = vmatpush1.msra.mxu0 %v430
        %536 = vmatprep.subr.mxu0 0.0
        %537 = vmatpush1.msra.mxu0 %v429
        %538 = vmatprep.subr.mxu0 0.0
        %539 = vmatpush1.msra.mxu0 %v428
        %540 = vmatprep.subr.mxu0 0.0
        %541 = vmatpush1.msra.mxu0 %v427
        %542 = vmatprep.subr.mxu0 0.0
        %543 = vmatpush2.msra.mxu0 %v458
        %544 = vmatprep.subr.mxu0 0.0
        %545 = vmatpush2.msra.mxu0 %v457
        %546 = vmatprep.subr.mxu0 0.0
        %547 = vmatpush2.msra.mxu0 %v456
        %548 = vmatprep.subr.mxu0 0.0
        %549 = vmatpush2.msra.mxu0 %v455
        %550 = vmatprep.subr.mxu0 0.0
        %551 = vmatpush2.msra.mxu0 %v454
        %552 = vmatprep.subr.mxu0 0.0
        %553 = vmatpush2.msra.mxu0 %v453
        %554 = vmatprep.subr.mxu0 0.0
        %555 = vmatpush2.msra.mxu0 %v452
        %556 = vmatprep.subr.mxu0 0.0
        %557 = vmatpush2.msra.mxu0 %v451
        %558 = vmatprep.subr.mxu0 0.0
        %559 = vmatpush2.msra.mxu0 %v450
        %560 = vmatprep.subr.mxu0 0.0
        %561 = vmatpush2.msra.mxu0 %v449
        %562 = vmatprep.subr.mxu0 0.0
        %563 = vmatpush2.msra.mxu0 %v448
        %564 = vmatprep.subr.mxu0 0.0
        %565 = vmatpush2.msra.mxu0 %v447
        %566 = vmatprep.subr.mxu0 0.0
        %567 = vmatpush2.msra.mxu0 %v446
        %568 = vmatprep.subr.mxu0 0.0
        %569 = vmatpush2.msra.mxu0 %v445
        %570 = vmatprep.subr.mxu0 0.0
        %571 = vmatpush2.msra.mxu0 %v444
        %572 = vmatprep.subr.mxu0 0.0
        %573 = vmatpush2.msra.mxu0 %v443
        %574 = vmatprep.mubr.f32.mxu0 %v423
        %575 = vmatmul.mubr.f32.gmra.mxu0 %v422
        %v576 = vpop.f32.mrf.mxu0
        %v577 = vadd.f32 %v504, %v576
        %v578 = vpop.f32.mrf.mxu0
        %579 = vdwg.mxu0
        %580 = vmatprep.subr.mxu0 0.0
        %581 = vmatpush1.msra.mxu0 %v474
        %582 = vmatprep.subr.mxu0 0.0
        %583 = vmatpush1.msra.mxu0 %v473
        %584 = vmatprep.subr.mxu0 0.0
        %585 = vmatpush1.msra.mxu0 %v472
        %586 = vmatprep.subr.mxu0 0.0
        %587 = vmatpush1.msra.mxu0 %v471
        %588 = vmatprep.subr.mxu0 0.0
        %589 = vmatpush1.msra.mxu0 %v470
        %590 = vmatprep.subr.mxu0 0.0
        %591 = vmatpush1.msra.mxu0 %v469
        %592 = vmatprep.subr.mxu0 0.0
        %593 = vmatpush1.msra.mxu0 %v468
        %594 = vmatprep.subr.mxu0 0.0
        %595 = vmatpush1.msra.mxu0 %v467
        %596 = vmatprep.subr.mxu0 0.0
        %597 = vmatpush1.msra.mxu0 %v466
        %598 = vmatprep.subr.mxu0 0.0
        %599 = vmatpush1.msra.mxu0 %v465
        %600 = vmatprep.subr.mxu0 0.0
        %601 = vmatpush1.msra.mxu0 %v464
        %602 = vmatprep.subr.mxu0 0.0
        %603 = vmatpush1.msra.mxu0 %v463
        %604 = vmatprep.subr.mxu0 0.0
        %605 = vmatpush1.msra.mxu0 %v462
        %606 = vmatprep.subr.mxu0 0.0
        %607 = vmatpush1.msra.mxu0 %v461
        %608 = vmatprep.subr.mxu0 0.0
        %609 = vmatpush1.msra.mxu0 %v460
        %610 = vmatprep.subr.mxu0 0.0
        %611 = vmatpush1.msra.mxu0 %v459
        %612 = vmatprep.subr.mxu0 0.0
        %613 = vmatpush2.msra.mxu0 %v490
        %614 = vmatprep.subr.mxu0 0.0
        %615 = vmatpush2.msra.mxu0 %v489
        %616 = vmatprep.subr.mxu0 0.0
        %617 = vmatpush2.msra.mxu0 %v488
        %618 = vmatprep.subr.mxu0 0.0
        %619 = vmatpush2.msra.mxu0 %v487
        %620 = vmatprep.subr.mxu0 0.0
        %621 = vmatpush2.msra.mxu0 %v486
        %622 = vmatprep.subr.mxu0 0.0
        %623 = vmatpush2.msra.mxu0 %v485
        %624 = vmatprep.subr.mxu0 0.0
        %625 = vmatpush2.msra.mxu0 %v484
        %626 = vmatprep.subr.mxu0 0.0
        %627 = vmatpush2.msra.mxu0 %v483
        %628 = vmatprep.subr.mxu0 0.0
        %629 = vmatpush2.msra.mxu0 %v482
        %630 = vmatprep.subr.mxu0 0.0
        %631 = vmatpush2.msra.mxu0 %v481
        %632 = vmatprep.subr.mxu0 0.0
        %633 = vmatpush2.msra.mxu0 %v480
        %634 = vmatprep.subr.mxu0 0.0
        %635 = vmatpush2.msra.mxu0 %v479
        %636 = vmatprep.subr.mxu0 0.0
        %637 = vmatpush2.msra.mxu0 %v478
        %638 = vmatprep.subr.mxu0 0.0
        %639 = vmatpush2.msra.mxu0 %v477
        %640 = vmatprep.subr.mxu0 0.0
        %641 = vmatpush2.msra.mxu0 %v476
        %642 = vmatprep.subr.mxu0 0.0
        %643 = vmatpush2.msra.mxu0 %v475
        %644 = vmatprep.mubr.f32.mxu0 %v425
        %645 = vmatmul.mubr.f32.gmra.mxu0 %v424
        %v646 = vpop.f32.mrf.mxu0
        %v647 = vadd.f32 %v577, %v646
        %v648 = vpop.f32.mrf.mxu0
        %649 = vdwg.mxu0
        %650 = vmatprep.subr.mxu0 0.0
        %651 = vmatpush1.msra.mxu0 0.0
        %652 = vmatprep.subr.mxu0 0.0
        %653 = vmatpush1.msra.mxu0 0.0
        %654 = vmatprep.subr.mxu0 0.0
        %655 = vmatpush1.msra.mxu0 0.0
        %656 = vmatprep.subr.mxu0 0.0
        %657 = vmatpush1.msra.mxu0 0.0
        %658 = vmatprep.subr.mxu0 0.0
        %659 = vmatpush1.msra.mxu0 0.0
        %660 = vmatprep.subr.mxu0 0.0
        %661 = vmatpush1.msra.mxu0 0.0
        %662 = vmatprep.subr.mxu0 0.0
        %663 = vmatpush1.msra.mxu0 0.0
        %664 = vmatprep.subr.mxu0 0.0
        %665 = vmatpush1.msra.mxu0 0.0
        %666 = vmatprep.subr.mxu0 0.0
        %667 = vmatpush1.msra.mxu0 %v498
        %668 = vmatprep.subr.mxu0 0.0
        %669 = vmatpush1.msra.mxu0 %v497
        %670 = vmatprep.subr.mxu0 0.0
        %671 = vmatpush1.msra.mxu0 %v496
        %672 = vmatprep.subr.mxu0 0.0
        %673 = vmatpush1.msra.mxu0 %v495
        %674 = vmatprep.subr.mxu0 0.0
        %675 = vmatpush1.msra.mxu0 %v494
        %676 = vmatprep.subr.mxu0 0.0
        %677 = vmatpush1.msra.mxu0 %v493
        %678 = vmatprep.subr.mxu0 0.0
        %679 = vmatpush1.msra.mxu0 %v492
        %680 = vmatprep.subr.mxu0 0.0
        %681 = vmatpush1.msra.mxu0 %v491
        %682 = vmatprep.subr.mxu0 0.0
        %683 = vmatpush2.msra.mxu0 0.0
        %684 = vmatprep.subr.mxu0 0.0
        %685 = vmatpush2.msra.mxu0 0.0
        %686 = vmatprep.subr.mxu0 0.0
        %687 = vmatpush2.msra.mxu0 0.0
        %688 = vmatprep.subr.mxu0 0.0
        %689 = vmatpush2.msra.mxu0 0.0
        %690 = vmatprep.subr.mxu0 0.0
        %691 = vmatpush2.msra.mxu0 0.0
        %692 = vmatprep.subr.mxu0 0.0
        %693 = vmatpush2.msra.mxu0 0.0
        %694 = vmatprep.subr.mxu0 0.0
        %695 = vmatpush2.msra.mxu0 0.0
        %696 = vmatprep.subr.mxu0 0.0
        %697 = vmatpush2.msra.mxu0 0.0
        %698 = vmatprep.subr.mxu0 0.0
        %699 = vmatpush2.msra.mxu0 0.0
        %700 = vmatprep.subr.mxu0 0.0
        %701 = vmatpush2.msra.mxu0 0.0
        %702 = vmatprep.subr.mxu0 0.0
        %703 = vmatpush2.msra.mxu0 0.0
        %704 = vmatprep.subr.mxu0 0.0
        %705 = vmatpush2.msra.mxu0 0.0
        %706 = vmatprep.subr.mxu0 0.0
        %707 = vmatpush2.msra.mxu0 0.0
        %708 = vmatprep.subr.mxu0 0.0
        %709 = vmatpush2.msra.mxu0 0.0
        %710 = vmatprep.subr.mxu0 0.0
        %711 = vmatpush2.msra.mxu0 0.0
        %712 = vmatprep.subr.mxu0 0.0
        %713 = vmatpush2.msra.mxu0 0.0
        %714 = vmatprep.mubr.f32.mxu0 0.0
        %715 = vmatmul.mubr.f32.gmra.mxu0 %v508
        %v716 = vpop.f32.mrf.mxu0
        %v717 = vadd.f32 %v647, %v716
        %v718 = vpop.f32.mrf.mxu0
        %719 = vdwg.mxu0
        %v720 = vmax.f32 %v717, 0.0
        %v721 = vld [vmem:[%s4] sm:$0x1]
        %v722 = vld [vmem:[%s3] sm:$0xff]
        %v723 = vld [vmem:[%s3 + $0x8] sm:$0xff]
        %v724 = vld [vmem:[%s3 + $0x10] sm:$0xff]
        %v725 = vld [vmem:[%s3 + $0x18] sm:$0xff]
        %v726 = vld [vmem:[%s3 + $0x20] sm:$0xff]
        %v727 = vld [vmem:[%s3 + $0x28] sm:$0xff]
        %v728 = vld [vmem:[%s3 + $0x30] sm:$0xff]
        %v729 = vld [vmem:[%s3 + $0x38] sm:$0xff]
        %v731 = vsel %vm506, %v720, 0
        %733 = vmatprep.subr.mxu0 0.0
        %734 = vmatpush1.msra.mxu0 0.0
        %735 = vmatprep.subr.mxu0 0.0
        %736 = vmatpush1.msra.mxu0 0.0
        %737 = vmatprep.subr.mxu0 0.0
        %738 = vmatpush1.msra.mxu0 0.0
        %739 = vmatprep.subr.mxu0 0.0
        %740 = vmatpush1.msra.mxu0 0.0
        %741 = vmatprep.subr.mxu0 0.0
        %742 = vmatpush1.msra.mxu0 0.0
        %743 = vmatprep.subr.mxu0 0.0
        %744 = vmatpush1.msra.mxu0 0.0
        %745 = vmatprep.subr.mxu0 0.0
        %746 = vmatpush1.msra.mxu0 0.0
        %747 = vmatprep.subr.mxu0 0.0
        %748 = vmatpush1.msra.mxu0 0.0
        %749 = vmatprep.subr.mxu0 0.0
        %750 = vmatpush1.msra.mxu0 %v729
        %751 = vmatprep.subr.mxu0 0.0
        %752 = vmatpush1.msra.mxu0 %v728
        %753 = vmatprep.subr.mxu0 0.0
        %754 = vmatpush1.msra.mxu0 %v727
        %755 = vmatprep.subr.mxu0 0.0
        %756 = vmatpush1.msra.mxu0 %v726
        %757 = vmatprep.subr.mxu0 0.0
        %758 = vmatpush1.msra.mxu0 %v725
        %759 = vmatprep.subr.mxu0 0.0
        %760 = vmatpush1.msra.mxu0 %v724
        %761 = vmatprep.subr.mxu0 0.0
        %762 = vmatpush1.msra.mxu0 %v723
        %763 = vmatprep.subr.mxu0 0.0
        %764 = vmatpush1.msra.mxu0 %v722
        %765 = vmatprep.subr.mxu0 0.0
        %766 = vmatpush2.msra.mxu0 0.0
        %767 = vmatprep.subr.mxu0 0.0
        %768 = vmatpush2.msra.mxu0 0.0
        %769 = vmatprep.subr.mxu0 0.0
        %770 = vmatpush2.msra.mxu0 0.0
        %771 = vmatprep.subr.mxu0 0.0
        %772 = vmatpush2.msra.mxu0 0.0
        %773 = vmatprep.subr.mxu0 0.0
        %774 = vmatpush2.msra.mxu0 0.0
        %775 = vmatprep.subr.mxu0 0.0
        %776 = vmatpush2.msra.mxu0 0.0
        %777 = vmatprep.subr.mxu0 0.0
        %778 = vmatpush2.msra.mxu0 0.0
        %779 = vmatprep.subr.mxu0 0.0
        %780 = vmatpush2.msra.mxu0 0.0
        %781 = vmatprep.subr.mxu0 0.0
        %782 = vmatpush2.msra.mxu0 0.0
        %783 = vmatprep.subr.mxu0 0.0
        %784 = vmatpush2.msra.mxu0 0.0
        %785 = vmatprep.subr.mxu0 0.0
        %786 = vmatpush2.msra.mxu0 0.0
        %787 = vmatprep.subr.mxu0 0.0
        %788 = vmatpush2.msra.mxu0 0.0
        %789 = vmatprep.subr.mxu0 0.0
        %790 = vmatpush2.msra.mxu0 0.0
        %791 = vmatprep.subr.mxu0 0.0
        %792 = vmatpush2.msra.mxu0 0.0
        %793 = vmatprep.subr.mxu0 0.0
        %794 = vmatpush2.msra.mxu0 0.0
        %795 = vmatprep.subr.mxu0 0.0
        %796 = vmatpush2.msra.mxu0 0.0
        %797 = vmatprep.mubr.f32.mxu0 0.0
        %798 = vmatmul.mubr.f32.gmra.mxu0 %v731
        %v799 = vpop.f32.mrf.mxu0
        %v800 = vadd.f32 0.0, %v799
        %v801 = vpop.f32.mrf.mxu0
        %802 = vdwg.mxu0
        %v803 = vadd.f32 %v721, %v800
        %s804 = scalar_lea.vmem %s3, 64
        %v805 = vld [vmem:[%s804] sm:$0xff]
        %v806 = vld [vmem:[%s804 + $0x8] sm:$0xff]
        %v807 = vld [vmem:[%s804 + $0x10] sm:$0xff]
        %v808 = vld [vmem:[%s804 + $0x18] sm:$0xff]
        %v809 = vld [vmem:[%s804 + $0x20] sm:$0xff]
        %v810 = vld [vmem:[%s804 + $0x28] sm:$0xff]
        %v811 = vld [vmem:[%s804 + $0x30] sm:$0xff]
        %v812 = vld [vmem:[%s804 + $0x38] sm:$0xff]
        %v813 = vrot.slane %v720, 1
        %v814 = vsel %vm506, %v813, 0
        %816 = vmatprep.subr.mxu0 0.0
        %817 = vmatpush1.msra.mxu0 0.0
        %818 = vmatprep.subr.mxu0 0.0
        %819 = vmatpush1.msra.mxu0 0.0
        %820 = vmatprep.subr.mxu0 0.0
        %821 = vmatpush1.msra.mxu0 0.0
        %822 = vmatprep.subr.mxu0 0.0
        %823 = vmatpush1.msra.mxu0 0.0
        %824 = vmatprep.subr.mxu0 0.0
        %825 = vmatpush1.msra.mxu0 0.0
        %826 = vmatprep.subr.mxu0 0.0
        %827 = vmatpush1.msra.mxu0 0.0
        %828 = vmatprep.subr.mxu0 0.0
        %829 = vmatpush1.msra.mxu0 0.0
        %830 = vmatprep.subr.mxu0 0.0
        %831 = vmatpush1.msra.mxu0 0.0
        %832 = vmatprep.subr.mxu0 0.0
        %833 = vmatpush1.msra.mxu0 %v812
        %834 = vmatprep.subr.mxu0 0.0
        %835 = vmatpush1.msra.mxu0 %v811
        %836 = vmatprep.subr.mxu0 0.0
        %837 = vmatpush1.msra.mxu0 %v810
        %838 = vmatprep.subr.mxu0 0.0
        %839 = vmatpush1.msra.mxu0 %v809
        %840 = vmatprep.subr.mxu0 0.0
        %841 = vmatpush1.msra.mxu0 %v808
        %842 = vmatprep.subr.mxu0 0.0
        %843 = vmatpush1.msra.mxu0 %v807
        %844 = vmatprep.subr.mxu0 0.0
        %845 = vmatpush1.msra.mxu0 %v806
        %846 = vmatprep.subr.mxu0 0.0
        %847 = vmatpush1.msra.mxu0 %v805
        %848 = vmatprep.subr.mxu0 0.0
        %849 = vmatpush2.msra.mxu0 0.0
        %850 = vmatprep.subr.mxu0 0.0
        %851 = vmatpush2.msra.mxu0 0.0
        %852 = vmatprep.subr.mxu0 0.0
        %853 = vmatpush2.msra.mxu0 0.0
        %854 = vmatprep.subr.mxu0 0.0
        %855 = vmatpush2.msra.mxu0 0.0
        %856 = vmatprep.subr.mxu0 0.0
        %857 = vmatpush2.msra.mxu0 0.0
        %858 = vmatprep.subr.mxu0 0.0
        %859 = vmatpush2.msra.mxu0 0.0
        %860 = vmatprep.subr.mxu0 0.0
        %861 = vmatpush2.msra.mxu0 0.0
        %862 = vmatprep.subr.mxu0 0.0
        %863 = vmatpush2.msra.mxu0 0.0
        %864 = vmatprep.subr.mxu0 0.0
        %865 = vmatpush2.msra.mxu0 0.0
        %866 = vmatprep.subr.mxu0 0.0
        %867 = vmatpush2.msra.mxu0 0.0
        %868 = vmatprep.subr.mxu0 0.0
        %869 = vmatpush2.msra.mxu0 0.0
        %870 = vmatprep.subr.mxu0 0.0
        %871 = vmatpush2.msra.mxu0 0.0
        %872 = vmatprep.subr.mxu0 0.0
        %873 = vmatpush2.msra.mxu0 0.0
        %874 = vmatprep.subr.mxu0 0.0
        %875 = vmatpush2.msra.mxu0 0.0
        %876 = vmatprep.subr.mxu0 0.0
        %877 = vmatpush2.msra.mxu0 0.0
        %878 = vmatprep.subr.mxu0 0.0
        %879 = vmatpush2.msra.mxu0 0.0
        %880 = vmatprep.mubr.f32.mxu0 0.0
        %881 = vmatmul.mubr.f32.gmra.mxu0 %v814
        %v882 = vpop.f32.mrf.mxu0
        %v883 = vadd.f32 0.0, %v882
        %v884 = vpop.f32.mrf.mxu0
        %885 = vdwg.mxu0
        %v886 = vadd.f32 %v803, %v883
        %s887 = scalar_lea.vmem %s3, 128
        %v888 = vld [vmem:[%s887] sm:$0xff]
        %v889 = vld [vmem:[%s887 + $0x8] sm:$0xff]
        %v890 = vld [vmem:[%s887 + $0x10] sm:$0xff]
        %v891 = vld [vmem:[%s887 + $0x18] sm:$0xff]
        %v892 = vld [vmem:[%s887 + $0x20] sm:$0xff]
        %v893 = vld [vmem:[%s887 + $0x28] sm:$0xff]
        %v894 = vld [vmem:[%s887 + $0x30] sm:$0xff]
        %v895 = vld [vmem:[%s887 + $0x38] sm:$0xff]
        %v896 = vrot.slane %v720, 2
        %v897 = vsel %vm506, %v896, 0
        %899 = vmatprep.subr.mxu0 0.0
        %900 = vmatpush1.msra.mxu0 0.0
        %901 = vmatprep.subr.mxu0 0.0
        %902 = vmatpush1.msra.mxu0 0.0
        %903 = vmatprep.subr.mxu0 0.0
        %904 = vmatpush1.msra.mxu0 0.0
        %905 = vmatprep.subr.mxu0 0.0
        %906 = vmatpush1.msra.mxu0 0.0
        %907 = vmatprep.subr.mxu0 0.0
        %908 = vmatpush1.msra.mxu0 0.0
        %909 = vmatprep.subr.mxu0 0.0
        %910 = vmatpush1.msra.mxu0 0.0
        %911 = vmatprep.subr.mxu0 0.0
        %912 = vmatpush1.msra.mxu0 0.0
        %913 = vmatprep.subr.mxu0 0.0
        %914 = vmatpush1.msra.mxu0 0.0
        %915 = vmatprep.subr.mxu0 0.0
        %916 = vmatpush1.msra.mxu0 %v895
        %917 = vmatprep.subr.mxu0 0.0
        %918 = vmatpush1.msra.mxu0 %v894
        %919 = vmatprep.subr.mxu0 0.0
        %920 = vmatpush1.msra.mxu0 %v893
        %921 = vmatprep.subr.mxu0 0.0
        %922 = vmatpush1.msra.mxu0 %v892
        %923 = vmatprep.subr.mxu0 0.0
        %924 = vmatpush1.msra.mxu0 %v891
        %925 = vmatprep.subr.mxu0 0.0
        %926 = vmatpush1.msra.mxu0 %v890
        %927 = vmatprep.subr.mxu0 0.0
        %928 = vmatpush1.msra.mxu0 %v889
        %929 = vmatprep.subr.mxu0 0.0
        %930 = vmatpush1.msra.mxu0 %v888
        %931 = vmatprep.subr.mxu0 0.0
        %932 = vmatpush2.msra.mxu0 0.0
        %933 = vmatprep.subr.mxu0 0.0
        %934 = vmatpush2.msra.mxu0 0.0
        %935 = vmatprep.subr.mxu0 0.0
        %936 = vmatpush2.msra.mxu0 0.0
        %937 = vmatprep.subr.mxu0 0.0
        %938 = vmatpush2.msra.mxu0 0.0
        %939 = vmatprep.subr.mxu0 0.0
        %940 = vmatpush2.msra.mxu0 0.0
        %941 = vmatprep.subr.mxu0 0.0
        %942 = vmatpush2.msra.mxu0 0.0
        %943 = vmatprep.subr.mxu0 0.0
        %944 = vmatpush2.msra.mxu0 0.0
        %945 = vmatprep.subr.mxu0 0.0
        %946 = vmatpush2.msra.mxu0 0.0
        %947 = vmatprep.subr.mxu0 0.0
        %948 = vmatpush2.msra.mxu0 0.0
        %949 = vmatprep.subr.mxu0 0.0
        %950 = vmatpush2.msra.mxu0 0.0
        %951 = vmatprep.subr.mxu0 0.0
        %952 = vmatpush2.msra.mxu0 0.0
        %953 = vmatprep.subr.mxu0 0.0
        %954 = vmatpush2.msra.mxu0 0.0
        %955 = vmatprep.subr.mxu0 0.0
        %956 = vmatpush2.msra.mxu0 0.0
        %957 = vmatprep.subr.mxu0 0.0
        %958 = vmatpush2.msra.mxu0 0.0
        %959 = vmatprep.subr.mxu0 0.0
        %960 = vmatpush2.msra.mxu0 0.0
        %961 = vmatprep.subr.mxu0 0.0
        %962 = vmatpush2.msra.mxu0 0.0
        %963 = vmatprep.mubr.f32.mxu0 0.0
        %964 = vmatmul.mubr.f32.gmra.mxu0 %v897
        %v965 = vpop.f32.mrf.mxu0
        %v966 = vadd.f32 0.0, %v965
        %v967 = vpop.f32.mrf.mxu0
        %968 = vdwg.mxu0
        %v969 = vadd.f32 %v886, %v966
        %s970 = scalar_lea.vmem %s3, 192
        %v971 = vld [vmem:[%s970] sm:$0xff]
        %v972 = vld [vmem:[%s970 + $0x8] sm:$0xff]
        %v973 = vld [vmem:[%s970 + $0x10] sm:$0xff]
        %v974 = vld [vmem:[%s970 + $0x18] sm:$0xff]
        %v975 = vld [vmem:[%s970 + $0x20] sm:$0xff]
        %v976 = vld [vmem:[%s970 + $0x28] sm:$0xff]
        %v977 = vld [vmem:[%s970 + $0x30] sm:$0xff]
        %v978 = vld [vmem:[%s970 + $0x38] sm:$0xff]
        %v979 = vrot.slane %v720, 3
        %v980 = vsel %vm506, %v979, 0
        %982 = vmatprep.subr.mxu0 0.0
        %983 = vmatpush1.msra.mxu0 0.0
        %984 = vmatprep.subr.mxu0 0.0
        %985 = vmatpush1.msra.mxu0 0.0
        %986 = vmatprep.subr.mxu0 0.0
        %987 = vmatpush1.msra.mxu0 0.0
        %988 = vmatprep.subr.mxu0 0.0
        %989 = vmatpush1.msra.mxu0 0.0
        %990 = vmatprep.subr.mxu0 0.0
        %991 = vmatpush1.msra.mxu0 0.0
        %992 = vmatprep.subr.mxu0 0.0
        %993 = vmatpush1.msra.mxu0 0.0
        %994 = vmatprep.subr.mxu0 0.0
        %995 = vmatpush1.msra.mxu0 0.0
        %996 = vmatprep.subr.mxu0 0.0
        %997 = vmatpush1.msra.mxu0 0.0
        %998 = vmatprep.subr.mxu0 0.0
        %999 = vmatpush1.msra.mxu0 %v978
        %1000 = vmatprep.subr.mxu0 0.0
        %1001 = vmatpush1.msra.mxu0 %v977
        %1002 = vmatprep.subr.mxu0 0.0
        %1003 = vmatpush1.msra.mxu0 %v976
        %1004 = vmatprep.subr.mxu0 0.0
        %1005 = vmatpush1.msra.mxu0 %v975
        %1006 = vmatprep.subr.mxu0 0.0
        %1007 = vmatpush1.msra.mxu0 %v974
        %1008 = vmatprep.subr.mxu0 0.0
        %1009 = vmatpush1.msra.mxu0 %v973
        %1010 = vmatprep.subr.mxu0 0.0
        %1011 = vmatpush1.msra.mxu0 %v972
        %1012 = vmatprep.subr.mxu0 0.0
        %1013 = vmatpush1.msra.mxu0 %v971
        %1014 = vmatprep.subr.mxu0 0.0
        %1015 = vmatpush2.msra.mxu0 0.0
        %1016 = vmatprep.subr.mxu0 0.0
        %1017 = vmatpush2.msra.mxu0 0.0
        %1018 = vmatprep.subr.mxu0 0.0
        %1019 = vmatpush2.msra.mxu0 0.0
        %1020 = vmatprep.subr.mxu0 0.0
        %1021 = vmatpush2.msra.mxu0 0.0
        %1022 = vmatprep.subr.mxu0 0.0
        %1023 = vmatpush2.msra.mxu0 0.0
        %1024 = vmatprep.subr.mxu0 0.0
        %1025 = vmatpush2.msra.mxu0 0.0
        %1026 = vmatprep.subr.mxu0 0.0
        %1027 = vmatpush2.msra.mxu0 0.0
        %1028 = vmatprep.subr.mxu0 0.0
        %1029 = vmatpush2.msra.mxu0 0.0
        %1030 = vmatprep.subr.mxu0 0.0
        %1031 = vmatpush2.msra.mxu0 0.0
        %1032 = vmatprep.subr.mxu0 0.0
        %1033 = vmatpush2.msra.mxu0 0.0
        %1034 = vmatprep.subr.mxu0 0.0
        %1035 = vmatpush2.msra.mxu0 0.0
        %1036 = vmatprep.subr.mxu0 0.0
        %1037 = vmatpush2.msra.mxu0 0.0
        %1038 = vmatprep.subr.mxu0 0.0
        %1039 = vmatpush2.msra.mxu0 0.0
        %1040 = vmatprep.subr.mxu0 0.0
        %1041 = vmatpush2.msra.mxu0 0.0
        %1042 = vmatprep.subr.mxu0 0.0
        %1043 = vmatpush2.msra.mxu0 0.0
        %1044 = vmatprep.subr.mxu0 0.0
        %1045 = vmatpush2.msra.mxu0 0.0
        %1046 = vmatprep.mubr.f32.mxu0 0.0
        %1047 = vmatmul.mubr.f32.gmra.mxu0 %v980
        %v1048 = vpop.f32.mrf.mxu0
        %v1049 = vadd.f32 0.0, %v1048
        %v1050 = vpop.f32.mrf.mxu0
        %1051 = vdwg.mxu0
        %v1052 = vadd.f32 %v969, %v1049
        %s1053 = scalar_lea.vmem %s3, 256
        %v1054 = vld [vmem:[%s1053] sm:$0xff]
        %v1055 = vld [vmem:[%s1053 + $0x8] sm:$0xff]
        %v1056 = vld [vmem:[%s1053 + $0x10] sm:$0xff]
        %v1057 = vld [vmem:[%s1053 + $0x18] sm:$0xff]
        %v1058 = vld [vmem:[%s1053 + $0x20] sm:$0xff]
        %v1059 = vld [vmem:[%s1053 + $0x28] sm:$0xff]
        %v1060 = vld [vmem:[%s1053 + $0x30] sm:$0xff]
        %v1061 = vld [vmem:[%s1053 + $0x38] sm:$0xff]
        %v1062 = vrot.slane %v720, 4
        %v1063 = vsel %vm506, %v1062, 0
        %1065 = vmatprep.subr.mxu0 0.0
        %1066 = vmatpush1.msra.mxu0 0.0
        %1067 = vmatprep.subr.mxu0 0.0
        %1068 = vmatpush1.msra.mxu0 0.0
        %1069 = vmatprep.subr.mxu0 0.0
        %1070 = vmatpush1.msra.mxu0 0.0
        %1071 = vmatprep.subr.mxu0 0.0
        %1072 = vmatpush1.msra.mxu0 0.0
        %1073 = vmatprep.subr.mxu0 0.0
        %1074 = vmatpush1.msra.mxu0 0.0
        %1075 = vmatprep.subr.mxu0 0.0
        %1076 = vmatpush1.msra.mxu0 0.0
        %1077 = vmatprep.subr.mxu0 0.0
        %1078 = vmatpush1.msra.mxu0 0.0
        %1079 = vmatprep.subr.mxu0 0.0
        %1080 = vmatpush1.msra.mxu0 0.0
        %1081 = vmatprep.subr.mxu0 0.0
        %1082 = vmatpush1.msra.mxu0 %v1061
        %1083 = vmatprep.subr.mxu0 0.0
        %1084 = vmatpush1.msra.mxu0 %v1060
        %1085 = vmatprep.subr.mxu0 0.0
        %1086 = vmatpush1.msra.mxu0 %v1059
        %1087 = vmatprep.subr.mxu0 0.0
        %1088 = vmatpush1.msra.mxu0 %v1058
        %1089 = vmatprep.subr.mxu0 0.0
        %1090 = vmatpush1.msra.mxu0 %v1057
        %1091 = vmatprep.subr.mxu0 0.0
        %1092 = vmatpush1.msra.mxu0 %v1056
        %1093 = vmatprep.subr.mxu0 0.0
        %1094 = vmatpush1.msra.mxu0 %v1055
        %1095 = vmatprep.subr.mxu0 0.0
        %1096 = vmatpush1.msra.mxu0 %v1054
        %1097 = vmatprep.subr.mxu0 0.0
        %1098 = vmatpush2.msra.mxu0 0.0
        %1099 = vmatprep.subr.mxu0 0.0
        %1100 = vmatpush2.msra.mxu0 0.0
        %1101 = vmatprep.subr.mxu0 0.0
        %1102 = vmatpush2.msra.mxu0 0.0
        %1103 = vmatprep.subr.mxu0 0.0
        %1104 = vmatpush2.msra.mxu0 0.0
        %1105 = vmatprep.subr.mxu0 0.0
        %1106 = vmatpush2.msra.mxu0 0.0
        %1107 = vmatprep.subr.mxu0 0.0
        %1108 = vmatpush2.msra.mxu0 0.0
        %1109 = vmatprep.subr.mxu0 0.0
        %1110 = vmatpush2.msra.mxu0 0.0
        %1111 = vmatprep.subr.mxu0 0.0
        %1112 = vmatpush2.msra.mxu0 0.0
        %1113 = vmatprep.subr.mxu0 0.0
        %1114 = vmatpush2.msra.mxu0 0.0
        %1115 = vmatprep.subr.mxu0 0.0
        %1116 = vmatpush2.msra.mxu0 0.0
        %1117 = vmatprep.subr.mxu0 0.0
        %1118 = vmatpush2.msra.mxu0 0.0
        %1119 = vmatprep.subr.mxu0 0.0
        %1120 = vmatpush2.msra.mxu0 0.0
        %1121 = vmatprep.subr.mxu0 0.0
        %1122 = vmatpush2.msra.mxu0 0.0
        %1123 = vmatprep.subr.mxu0 0.0
        %1124 = vmatpush2.msra.mxu0 0.0
        %1125 = vmatprep.subr.mxu0 0.0
        %1126 = vmatpush2.msra.mxu0 0.0
        %1127 = vmatprep.subr.mxu0 0.0
        %1128 = vmatpush2.msra.mxu0 0.0
        %1129 = vmatprep.mubr.f32.mxu0 0.0
        %1130 = vmatmul.mubr.f32.gmra.mxu0 %v1063
        %v1131 = vpop.f32.mrf.mxu0
        %v1132 = vadd.f32 0.0, %v1131
        %v1133 = vpop.f32.mrf.mxu0
        %1134 = vdwg.mxu0
        %v1135 = vadd.f32 %v1052, %v1132
        %s1136 = scalar_lea.vmem %s3, 320
        %v1137 = vld [vmem:[%s1136] sm:$0xff]
        %v1138 = vld [vmem:[%s1136 + $0x8] sm:$0xff]
        %v1139 = vld [vmem:[%s1136 + $0x10] sm:$0xff]
        %v1140 = vld [vmem:[%s1136 + $0x18] sm:$0xff]
        %v1141 = vld [vmem:[%s1136 + $0x20] sm:$0xff]
        %v1142 = vld [vmem:[%s1136 + $0x28] sm:$0xff]
        %v1143 = vld [vmem:[%s1136 + $0x30] sm:$0xff]
        %v1144 = vld [vmem:[%s1136 + $0x38] sm:$0xff]
        %v1145 = vrot.slane %v720, 5
        %v1146 = vsel %vm506, %v1145, 0
        %1148 = vmatprep.subr.mxu0 0.0
        %1149 = vmatpush1.msra.mxu0 0.0
        %1150 = vmatprep.subr.mxu0 0.0
        %1151 = vmatpush1.msra.mxu0 0.0
        %1152 = vmatprep.subr.mxu0 0.0
        %1153 = vmatpush1.msra.mxu0 0.0
        %1154 = vmatprep.subr.mxu0 0.0
        %1155 = vmatpush1.msra.mxu0 0.0
        %1156 = vmatprep.subr.mxu0 0.0
        %1157 = vmatpush1.msra.mxu0 0.0
        %1158 = vmatprep.subr.mxu0 0.0
        %1159 = vmatpush1.msra.mxu0 0.0
        %1160 = vmatprep.subr.mxu0 0.0
        %1161 = vmatpush1.msra.mxu0 0.0
        %1162 = vmatprep.subr.mxu0 0.0
        %1163 = vmatpush1.msra.mxu0 0.0
        %1164 = vmatprep.subr.mxu0 0.0
        %1165 = vmatpush1.msra.mxu0 %v1144
        %1166 = vmatprep.subr.mxu0 0.0
        %1167 = vmatpush1.msra.mxu0 %v1143
        %1168 = vmatprep.subr.mxu0 0.0
        %1169 = vmatpush1.msra.mxu0 %v1142
        %1170 = vmatprep.subr.mxu0 0.0
        %1171 = vmatpush1.msra.mxu0 %v1141
        %1172 = vmatprep.subr.mxu0 0.0
        %1173 = vmatpush1.msra.mxu0 %v1140
        %1174 = vmatprep.subr.mxu0 0.0
        %1175 = vmatpush1.msra.mxu0 %v1139
        %1176 = vmatprep.subr.mxu0 0.0
        %1177 = vmatpush1.msra.mxu0 %v1138
        %1178 = vmatprep.subr.mxu0 0.0
        %1179 = vmatpush1.msra.mxu0 %v1137
        %1180 = vmatprep.subr.mxu0 0.0
        %1181 = vmatpush2.msra.mxu0 0.0
        %1182 = vmatprep.subr.mxu0 0.0
        %1183 = vmatpush2.msra.mxu0 0.0
        %1184 = vmatprep.subr.mxu0 0.0
        %1185 = vmatpush2.msra.mxu0 0.0
        %1186 = vmatprep.subr.mxu0 0.0
        %1187 = vmatpush2.msra.mxu0 0.0
        %1188 = vmatprep.subr.mxu0 0.0
        %1189 = vmatpush2.msra.mxu0 0.0
        %1190 = vmatprep.subr.mxu0 0.0
        %1191 = vmatpush2.msra.mxu0 0.0
        %1192 = vmatprep.subr.mxu0 0.0
        %1193 = vmatpush2.msra.mxu0 0.0
        %1194 = vmatprep.subr.mxu0 0.0
        %1195 = vmatpush2.msra.mxu0 0.0
        %1196 = vmatprep.subr.mxu0 0.0
        %1197 = vmatpush2.msra.mxu0 0.0
        %1198 = vmatprep.subr.mxu0 0.0
        %1199 = vmatpush2.msra.mxu0 0.0
        %1200 = vmatprep.subr.mxu0 0.0
        %1201 = vmatpush2.msra.mxu0 0.0
        %1202 = vmatprep.subr.mxu0 0.0
        %1203 = vmatpush2.msra.mxu0 0.0
        %1204 = vmatprep.subr.mxu0 0.0
        %1205 = vmatpush2.msra.mxu0 0.0
        %1206 = vmatprep.subr.mxu0 0.0
        %1207 = vmatpush2.msra.mxu0 0.0
        %1208 = vmatprep.subr.mxu0 0.0
        %1209 = vmatpush2.msra.mxu0 0.0
        %1210 = vmatprep.subr.mxu0 0.0
        %1211 = vmatpush2.msra.mxu0 0.0
        %1212 = vmatprep.mubr.f32.mxu0 0.0
        %1213 = vmatmul.mubr.f32.gmra.mxu0 %v1146
        %v1214 = vpop.f32.mrf.mxu0
        %v1215 = vadd.f32 0.0, %v1214
        %v1216 = vpop.f32.mrf.mxu0
        %1217 = vdwg.mxu0
        %v1218 = vadd.f32 %v1135, %v1215
        %v1219 = vmax.f32 %v1218, 0.0
        %v1220 = vld [vmem:[%s5] sm:$0xff]
        %v1221 = vld [vmem:[%s5 + $0x8] sm:$0xff]
        %v1222 = vld [vmem:[%s5 + $0x10] sm:$0xff]
        %v1223 = vld [vmem:[%s5 + $0x18] sm:$0xff]
        %v1224 = vld [vmem:[%s5 + $0x20] sm:$0xff]
        %v1225 = vld [vmem:[%s5 + $0x28] sm:$0xff]
        %v1226 = vld [vmem:[%s5 + $0x30] sm:$0xff]
        %v1227 = vld [vmem:[%s5 + $0x38] sm:$0xff]
        %v1228 = vld [vmem:[%s5 + $0x40] sm:$0xff]
        %v1229 = vld [vmem:[%s5 + $0x48] sm:$0xff]
        %v1230 = vld [vmem:[%s5 + $0x50] sm:$0xff]
        %v1231 = vld [vmem:[%s5 + $0x58] sm:$0xff]
        %v1232 = vld [vmem:[%s5 + $0x60] sm:$0xff]
        %v1233 = vld [vmem:[%s5 + $0x68] sm:$0xff]
        %v1234 = vld [vmem:[%s5 + $0x70] sm:$0xff]
        %v1235 = vld [vmem:[%s5 + $0x78] sm:$0xff]
        %v1236 = vld [vmem:[%s6] sm:$0x1]
        %1237 = vmatprep.subr.mxu0 0.0
        %1238 = vmatpush1.msra.mxu0 %v1235
        %1239 = vmatprep.subr.mxu0 0.0
        %1240 = vmatpush1.msra.mxu0 %v1234
        %1241 = vmatprep.subr.mxu0 0.0
        %1242 = vmatpush1.msra.mxu0 %v1233
        %1243 = vmatprep.subr.mxu0 0.0
        %1244 = vmatpush1.msra.mxu0 %v1232
        %1245 = vmatprep.subr.mxu0 0.0
        %1246 = vmatpush1.msra.mxu0 %v1231
        %1247 = vmatprep.subr.mxu0 0.0
        %1248 = vmatpush1.msra.mxu0 %v1230
        %1249 = vmatprep.subr.mxu0 0.0
        %1250 = vmatpush1.msra.mxu0 %v1229
        %1251 = vmatprep.subr.mxu0 0.0
        %1252 = vmatpush1.msra.mxu0 %v1228
        %1253 = vmatprep.subr.mxu0 0.0
        %1254 = vmatpush1.msra.mxu0 %v1227
        %1255 = vmatprep.subr.mxu0 0.0
        %1256 = vmatpush1.msra.mxu0 %v1226
        %1257 = vmatprep.subr.mxu0 0.0
        %1258 = vmatpush1.msra.mxu0 %v1225
        %1259 = vmatprep.subr.mxu0 0.0
        %1260 = vmatpush1.msra.mxu0 %v1224
        %1261 = vmatprep.subr.mxu0 0.0
        %1262 = vmatpush1.msra.mxu0 %v1223
        %1263 = vmatprep.subr.mxu0 0.0
        %1264 = vmatpush1.msra.mxu0 %v1222
        %1265 = vmatprep.subr.mxu0 0.0
        %1266 = vmatpush1.msra.mxu0 %v1221
        %1267 = vmatprep.subr.mxu0 0.0
        %1268 = vmatpush1.msra.mxu0 %v1220
        %1269 = vmatprep.subr.mxu0 0.0
        %1270 = vmatpush2.msra.mxu0 0.0
        %1271 = vmatprep.subr.mxu0 0.0
        %1272 = vmatpush2.msra.mxu0 0.0
        %1273 = vmatprep.subr.mxu0 0.0
        %1274 = vmatpush2.msra.mxu0 0.0
        %1275 = vmatprep.subr.mxu0 0.0
        %1276 = vmatpush2.msra.mxu0 0.0
        %1277 = vmatprep.subr.mxu0 0.0
        %1278 = vmatpush2.msra.mxu0 0.0
        %1279 = vmatprep.subr.mxu0 0.0
        %1280 = vmatpush2.msra.mxu0 0.0
        %1281 = vmatprep.subr.mxu0 0.0
        %1282 = vmatpush2.msra.mxu0 0.0
        %1283 = vmatprep.subr.mxu0 0.0
        %1284 = vmatpush2.msra.mxu0 0.0
        %1285 = vmatprep.subr.mxu0 0.0
        %1286 = vmatpush2.msra.mxu0 0.0
        %1287 = vmatprep.subr.mxu0 0.0
        %1288 = vmatpush2.msra.mxu0 0.0
        %1289 = vmatprep.subr.mxu0 0.0
        %1290 = vmatpush2.msra.mxu0 0.0
        %1291 = vmatprep.subr.mxu0 0.0
        %1292 = vmatpush2.msra.mxu0 0.0
        %1293 = vmatprep.subr.mxu0 0.0
        %1294 = vmatpush2.msra.mxu0 0.0
        %1295 = vmatprep.subr.mxu0 0.0
        %1296 = vmatpush2.msra.mxu0 0.0
        %1297 = vmatprep.subr.mxu0 0.0
        %1298 = vmatpush2.msra.mxu0 0.0
        %1299 = vmatprep.subr.mxu0 0.0
        %1300 = vmatpush2.msra.mxu0 0.0
        %1301 = vmatprep.mubr.f32.mxu0 0.0
        %1302 = vmatmul.mubr.f32.gmra.mxu0 %v1219
        %v1303 = vpop.f32.mrf.mxu0
        %v1304 = vadd.f32 %v1236, %v1303
        %v1305 = vpop.f32.mrf.mxu0
        %1306 = vdwg.mxu0
        %v1307 = vmax.f32 %v1304, 0.0
        %v1308 = vld [vmem:[%s7] sm:$0xff]
        %v1309 = vld [vmem:[%s7 + $0x8] sm:$0xff]
        %v1310 = vld [vmem:[%s7 + $0x10] sm:$0xff]
        %v1311 = vld [vmem:[%s7 + $0x18] sm:$0xff]
        %v1312 = vld [vmem:[%s7 + $0x20] sm:$0xff]
        %v1313 = vld [vmem:[%s7 + $0x28] sm:$0xff]
        %v1314 = vld [vmem:[%s7 + $0x30] sm:$0xff]
        %v1315 = vld [vmem:[%s7 + $0x38] sm:$0xff]
        %v1316 = vld [vmem:[%s7 + $0x40] sm:$0xff]
        %v1317 = vld [vmem:[%s7 + $0x48] sm:$0xff]
        %v1318 = vld [vmem:[%s7 + $0x50] sm:$0xff]
        %v1319 = vld [vmem:[%s7 + $0x58] sm:$0xff]
        %v1320 = vld [vmem:[%s7 + $0x60] sm:$0xff]
        %v1321 = vld [vmem:[%s7 + $0x68] sm:$0xff]
        %v1322 = vld [vmem:[%s7 + $0x70] sm:$0xff]
        %v1323 = vld [vmem:[%s7 + $0x78] sm:$0xff]
        %v1324 = vld [vmem:[#allocation2] sm:$0x1]
        %1325 = vmatprep.subr.mxu0 0.0
        %1326 = vmatpush1.msra.mxu0 %v1323
        %1327 = vmatprep.subr.mxu0 0.0
        %1328 = vmatpush1.msra.mxu0 %v1322
        %1329 = vmatprep.subr.mxu0 0.0
        %1330 = vmatpush1.msra.mxu0 %v1321
        %1331 = vmatprep.subr.mxu0 0.0
        %1332 = vmatpush1.msra.mxu0 %v1320
        %1333 = vmatprep.subr.mxu0 0.0
        %1334 = vmatpush1.msra.mxu0 %v1319
        %1335 = vmatprep.subr.mxu0 0.0
        %1336 = vmatpush1.msra.mxu0 %v1318
        %1337 = vmatprep.subr.mxu0 0.0
        %1338 = vmatpush1.msra.mxu0 %v1317
        %1339 = vmatprep.subr.mxu0 0.0
        %1340 = vmatpush1.msra.mxu0 %v1316
        %1341 = vmatprep.subr.mxu0 0.0
        %1342 = vmatpush1.msra.mxu0 %v1315
        %1343 = vmatprep.subr.mxu0 0.0
        %1344 = vmatpush1.msra.mxu0 %v1314
        %1345 = vmatprep.subr.mxu0 0.0
        %1346 = vmatpush1.msra.mxu0 %v1313
        %1347 = vmatprep.subr.mxu0 0.0
        %1348 = vmatpush1.msra.mxu0 %v1312
        %1349 = vmatprep.subr.mxu0 0.0
        %1350 = vmatpush1.msra.mxu0 %v1311
        %1351 = vmatprep.subr.mxu0 0.0
        %1352 = vmatpush1.msra.mxu0 %v1310
        %1353 = vmatprep.subr.mxu0 0.0
        %1354 = vmatpush1.msra.mxu0 %v1309
        %1355 = vmatprep.subr.mxu0 0.0
        %1356 = vmatpush1.msra.mxu0 %v1308
        %1357 = vmatprep.subr.mxu0 0.0
        %1358 = vmatpush2.msra.mxu0 0.0
        %1359 = vmatprep.subr.mxu0 0.0
        %1360 = vmatpush2.msra.mxu0 0.0
        %1361 = vmatprep.subr.mxu0 0.0
        %1362 = vmatpush2.msra.mxu0 0.0
        %1363 = vmatprep.subr.mxu0 0.0
        %1364 = vmatpush2.msra.mxu0 0.0
        %1365 = vmatprep.subr.mxu0 0.0
        %1366 = vmatpush2.msra.mxu0 0.0
        %1367 = vmatprep.subr.mxu0 0.0
        %1368 = vmatpush2.msra.mxu0 0.0
        %1369 = vmatprep.subr.mxu0 0.0
        %1370 = vmatpush2.msra.mxu0 0.0
        %1371 = vmatprep.subr.mxu0 0.0
        %1372 = vmatpush2.msra.mxu0 0.0
        %1373 = vmatprep.subr.mxu0 0.0
        %1374 = vmatpush2.msra.mxu0 0.0
        %1375 = vmatprep.subr.mxu0 0.0
        %1376 = vmatpush2.msra.mxu0 0.0
        %1377 = vmatprep.subr.mxu0 0.0
        %1378 = vmatpush2.msra.mxu0 0.0
        %1379 = vmatprep.subr.mxu0 0.0
        %1380 = vmatpush2.msra.mxu0 0.0
        %1381 = vmatprep.subr.mxu0 0.0
        %1382 = vmatpush2.msra.mxu0 0.0
        %1383 = vmatprep.subr.mxu0 0.0
        %1384 = vmatpush2.msra.mxu0 0.0
        %1385 = vmatprep.subr.mxu0 0.0
        %1386 = vmatpush2.msra.mxu0 0.0
        %1387 = vmatprep.subr.mxu0 0.0
        %1388 = vmatpush2.msra.mxu0 0.0
        %1389 = vmatprep.mubr.f32.mxu0 0.0
        %1390 = vmatmul.mubr.f32.gmra.mxu0 %v1307
        %v1391 = vpop.f32.mrf.mxu0
        %v1392 = vadd.f32 %v1324, %v1391
        %v1393 = vpop.f32.mrf.mxu0
        %1394 = vdwg.mxu0
        %vm1395 = vcmask 0
        %1396 = vst.msk [vmem:[%s388] sm:$0x1] %vm1395, %v1392
        %p1397 = scmp.lt.s32.totalorder %s22, 1
        %s1398 = scalar_select %p1397, %s22, 1
        %s1399 = scalar_lea.vmem %s9, %s1398
        // Predicated region
        $region80: #{cnn_critic_forward.7} parent=74 // pred_check
          %p1400 = pneg %p234
        $region81: #{cnn_critic_forward.7} parent=74 // pred_check_branch
          %1402 = sbr.rel (%p1400) target = $region83
        $region82: #{cnn_critic_forward.7} parent=74 // pred_region
          _
        $region83: #{cnn_critic_forward.7} parent=74 // pred_fallthru
          _
      $region75: #{cnn_critic_forward.7} parent=5 // pred_fallthru
        _
      %p1403 = scmp.le.s32.totalorder 2, %s17
      // Predicated region
      $region84: #{cnn_critic_forward.7} parent=5 // pred_check
        %p1404 = pneg %p1403
      $region85: #{cnn_critic_forward.7} parent=5 // pred_check_branch
        %1406 = sbr.rel (%p1404) target = $region87
      $region86: #{cnn_critic_forward.7} parent=5 // pred_region
        %s1407 = ssub.s32 %s17, 2
        // Predicated region
        $region88: #{cnn_critic_forward.7} parent=86 // pred_check
          %p1408 = pneg %p240
        $region89: #{cnn_critic_forward.7} parent=86 // pred_check_branch
          %1410 = sbr.rel (%p1408) target = $region91
        $region90: #{cnn_critic_forward.7} parent=86 // pred_region
          %p1411 = scmp.lt.s32.totalorder %s23, 1
          %s1412 = scalar_select %p1411, %s23, 1
          %s1413 = scalar_lea.vmem %s9, %s1412
        $region91: #{cnn_critic_forward.7} parent=86 // pred_fallthru
          _
      $region87: #{cnn_critic_forward.7} parent=5 // pred_fallthru
        _
    $region6: #{cnn_critic_forward.7} parent=1 // loop_footer
      %s21 = sadd.s32 1, %s17
    $region7: #{cnn_critic_forward.7} parent=1 // loop_footer_branch
      %16 = sbr.rel target = $region3
    $region8: #{cnn_critic_forward.7} parent=1 // loop_exit
      _

</llo_original>
